<compile_context>
chip_gen: v7x
topology: tpu7x:2x2x1
jax: 0.10.0
libtpu: 0.0.40
codegen_flags: <defaults>
</compile_context>

<pallas_src>
import functools

import jax
import jax.numpy as jnp
from jax.experimental import pallas as pl
from jax.experimental.pallas import tpu as pltpu

# ----- hyperparameters (small, consistent with the module's constraints) -----
NC = 4          # opt.nc  (== NEF, required by the module's second conv)
NEF = 4         # opt.nef
NGF = 4         # opt.ngf
NB = 16         # opt.nBottleneck
BATCH = 2
IMSIZE = 256    # 6 stride-2 convs + a 4x4 valid conv require input >= 256


# --------------------------- Pallas fused kernel -----------------------------
def _fused_matmul_kernel(w_ref, x_ref, b_ref, o_ref, *, act):
    # (Cout, K) @ (K, tile_m) on the MXU (bf16 in, f32 acc); epilogue in f32.
    acc = jnp.dot(w_ref[...], x_ref[...], preferred_element_type=jnp.float32)
    acc = acc + b_ref[...]                      # (Cout, 1) lane-broadcast bias
    if act == "leaky":
        acc = jnp.where(acc > 0, acc, 0.2 * acc)
    elif act == "relu":
        acc = jnp.maximum(acc, 0.0)
    elif act == "tanh":
        acc = jnp.tanh(acc)
    o_ref[...] = acc.astype(o_ref.dtype)


def _pick_tile_m(M):
    for t in (2048, 1024, 512, 256, 128):
        if M % t == 0:
            return t
    if M <= 2048:
        return M            # single full-extent block (tiny layers)
    return 2048             # padding fallback (not hit by this network)


def fused_matmul_T(wmat, patches, bias, act, out_dtype):
    """wmat: (Cout, K) bf16, patches: (K, M) bf16, bias: (Cout,) f32 -> (Cout, M)."""
    Cout, K = wmat.shape
    M = patches.shape[1]
    tile_m = _pick_tile_m(M)
    Mp = ((M + tile_m - 1) // tile_m) * tile_m
    if Mp != M:
        patches = jnp.pad(patches, ((0, 0), (0, Mp - M)))
    out = pl.pallas_call(
        functools.partial(_fused_matmul_kernel, act=act),
        out_shape=jax.ShapeDtypeStruct((Cout, Mp), out_dtype),
        grid=(Mp // tile_m,),
        in_specs=[
            pl.BlockSpec((Cout, K), lambda i: (0, 0)),       # weights resident
            pl.BlockSpec((K, tile_m), lambda i: (0, i)),     # lane-dense M tiles
            pl.BlockSpec((Cout, 1), lambda i: (0, 0)),       # folded-BN bias
        ],
        out_specs=pl.BlockSpec((Cout, tile_m), lambda i: (0, i)),
        compiler_params=pltpu.CompilerParams(dimension_semantics=("parallel",)),
    )(wmat, patches, bias.reshape(Cout, 1).astype(jnp.float32))
    return out[:, :M] if Mp != M else out


# ------------------------------- JAX glue -------------------------------------
def _im2col_T(x, k, stride, pads):
    """x: (C, N, H, W) -> patches (C*k*k, N*Ho*Wo), K-order = (c, kh, kw)."""
    C, N, H, W = x.shape
    (pt, pb), (plf, pr) = pads
    xp = jnp.pad(x, ((0, 0), (0, 0), (pt, pb), (plf, pr)))
    Ho = (H + pt + pb - k) // stride + 1
    Wo = (W + plf + pr - k) // stride + 1
    cols = []
    for kh in range(k):
        for kw in range(k):
            cols.append(
                xp[:, :, kh:kh + stride * Ho:stride, kw:kw + stride * Wo:stride])
    p = jnp.stack(cols, axis=1)                 # (C, k*k, N, Ho, Wo) -- no 5-D transpose
    return p.reshape(C * k * k, N * Ho * Wo), N, Ho, Wo


def conv2d_fused(x, w, scale, bias, act, stride, pad, out_dtype=jnp.bfloat16):
    """Conv2d(bias=False) + eval-mode BN (scale folded into W) + activation.

    x: (Cin, N, H, W) bf16; w: (Cout, Cin, k, k) f32 (PyTorch layout).
    Returns (Cout, N, Ho, Wo) in `out_dtype`."""
    Cout, Cin, k, _ = w.shape
    patches, N, Ho, Wo = _im2col_T(x, k, stride, ((pad, pad), (pad, pad)))
    wmat = (w.reshape(Cout, Cin * k * k) * scale[:, None]).astype(jnp.bfloat16)
    out = fused_matmul_T(wmat, patches, bias, act, out_dtype)
    return out.reshape(Cout, N, Ho, Wo)


def conv_transpose2d_s1_fused(x, w, scale, bias, act, pad, out_dtype=jnp.bfloat16):
    """PyTorch ConvTranspose2d(k, stride=1) == conv with flipped kernel, pad k-1-pad."""
    Cin, Cout, k, _ = w.shape
    w_conv = jnp.flip(w, axis=(2, 3)).transpose(1, 0, 2, 3)   # (Cout, Cin, k, k)
    return conv2d_fused(x, w_conv, scale, bias, act, 1, k - 1 - pad, out_dtype)


def conv_transpose2d_s2_fused(x, w, scale, bias, act, out_dtype=jnp.bfloat16):
    """PyTorch ConvTranspose2d(k=4, stride=2, pad=1) via sub-pixel decomposition.

    Output phase (r, s) (rows 2i+r, cols 2j+s) is a stride-1 2x2 conv of the
    UN-dilated input with a 2x2 sub-kernel:
      r=0: taps kh=[3,1], pad_h=(1,0);  r=1: taps kh=[2,0], pad_h=(0,1)
    (same for columns / s). No zero-dilated buffer, no MACs on zeros."""
    Cin, Cout, k, _ = w.shape          # k == 4
    C, N, H, W = x.shape
    phases = []
    for r in (0, 1):
        rsl = slice(3, None, -2) if r == 0 else slice(2, None, -2)   # [3,1] / [2,0]
        pad_h = (1, 0) if r == 0 else (0, 1)
        for s in (0, 1):
            csl = slice(3, None, -2) if s == 0 else slice(2, None, -2)
            pad_w = (1, 0) if s == 0 else (0, 1)
            w_sub = w[:, :, rsl, csl]                                # (Cin, Cout, 2, 2)
            wmat = w_sub.transpose(1, 0, 2, 3).reshape(Cout, Cin * 4)
            wmat = (wmat * scale[:, None]).astype(jnp.bfloat16)
            patches, _, Ho, Wo = _im2col_T(x, 2, 1, (pad_h, pad_w))  # Ho==H, Wo==W
            out_p = fused_matmul_T(wmat, patches, bias, act, out_dtype)
            phases.append(out_p.reshape(Cout, N, H, W))
    out = jnp.stack(phases, axis=0).reshape(2, 2, Cout, N, H, W)
    # interleave: out[c, n, 2i + r, 2j + s] = phase[r, s, c, n, i, j]
    return out.transpose(2, 3, 4, 0, 5, 1).reshape(Cout, N, 2 * H, 2 * W)


# --------------------------- parameter construction ---------------------------
def init_params(key):
    ks = list(jax.random.split(key, 32))
    it = iter(ks)

    def conv_w(co, ci):
        return jax.random.normal(next(it), (co, ci, 4, 4), jnp.float32) * 0.02

    def deconv_w(ci, co):
        return jax.random.normal(next(it), (ci, co, 4, 4), jnp.float32) * 0.02

    def bn(c):
        gamma = 1.0 + 0.02 * jax.random.normal(next(it), (c,), jnp.float32)
        # eval-mode BN with running_mean=0, running_var=1, beta=0 (fresh module)
        scale = gamma / jnp.sqrt(jnp.float32(1.0 + 1e-5))
        return scale, jnp.zeros((c,), jnp.float32)

    def nobn(c):
        return jnp.ones((c,), jnp.float32), jnp.zeros((c,), jnp.float32)

    p = {}
    p["w1"] = conv_w(NEF, NC);            p["s1"], p["b1"] = nobn(NEF)
    p["w2"] = conv_w(NEF, NC);            p["s2"], p["b2"] = nobn(NEF)   # Conv2d(nc, nef) as in source
    p["w3"] = conv_w(NEF, NEF);           p["s3"], p["b3"] = bn(NEF)
    p["w4"] = conv_w(NEF * 2, NEF);       p["s4"], p["b4"] = bn(NEF * 2)
    p["w5"] = conv_w(NEF * 4, NEF * 2);   p["s5"], p["b5"] = bn(NEF * 4)
    p["w6"] = conv_w(NEF * 8, NEF * 4);   p["s6"], p["b6"] = bn(NEF * 8)
    p["w7"] = conv_w(NB, NEF * 8);        p["s7"], p["b7"] = bn(NB)
    p["w8"] = deconv_w(NB, NGF * 8);      p["s8"], p["b8"] = bn(NGF * 8)
    p["w9"] = deconv_w(NGF * 8, NGF * 4); p["s9"], p["b9"] = bn(NGF * 4)
    p["w10"] = deconv_w(NGF * 4, NGF * 2); p["s10"], p["b10"] = bn(NGF * 2)
    p["w11"] = deconv_w(NGF * 2, NGF);    p["s11"], p["b11"] = bn(NGF)
    p["w12"] = deconv_w(NGF, NC);         p["s12"], p["b12"] = nobn(NC)
    return p


# --------------------------------- forward ------------------------------------
@jax.jit
def netG_forward(x_nchw, p):
    # NCHW -> channels-major CNHW, bf16 end-to-end (one transpose per network end).
    x = x_nchw.transpose(1, 0, 2, 3).astype(jnp.bfloat16)
    # encoder
    x = conv2d_fused(x, p["w1"], p["s1"], p["b1"], "leaky", 2, 1)   # 256 -> 128
    x = conv2d_fused(x, p["w2"], p["s2"], p["b2"], "leaky", 2, 1)   # 128 -> 64
    x = conv2d_fused(x, p["w3"], p["s3"], p["b3"], "leaky", 2, 1)   # 64  -> 32
    x = conv2d_fused(x, p["w4"], p["s4"], p["b4"], "leaky", 2, 1)   # 32  -> 16
    x = conv2d_fused(x, p["w5"], p["s5"], p["b5"], "leaky", 2, 1)   # 16  -> 8
    x = conv2d_fused(x, p["w6"], p["s6"], p["b6"], "leaky", 2, 1)   # 8   -> 4
    x = conv2d_fused(x, p["w7"], p["s7"], p["b7"], "leaky", 1, 0)   # 4   -> 1
    # decoder
    x = conv_transpose2d_s1_fused(x, p["w8"], p["s8"], p["b8"], "relu", 0)     # 1  -> 4
    x = conv_transpose2d_s2_fused(x, p["w9"], p["s9"], p["b9"], "relu")        # 4  -> 8
    x = conv_transpose2d_s2_fused(x, p["w10"], p["s10"], p["b10"], "relu")     # 8  -> 16
    x = conv_transpose2d_s2_fused(x, p["w11"], p["s11"], p["b11"], "relu")     # 16 -> 32
    x = conv_transpose2d_s2_fused(x, p["w12"], p["s12"], p["b12"], "tanh",
                                  out_dtype=jnp.float32)                       # 32 -> 64
    return x.transpose(1, 0, 2, 3)   # CNHW -> NCHW (f32)


if __name__ == "__main__":
    key = jax.random.PRNGKey(0)
    k_params, k_input = jax.random.split(key)
    params = init_params(k_params)
    x = jax.random.normal(k_input, (BATCH, NC, IMSIZE, IMSIZE), jnp.float32)

    out = netG_forward(x, params)
    out = jax.block_until_ready(out)

    assert out.shape == (BATCH, NC, 64, 64), out.shape
    assert out.dtype == jnp.float32
    assert bool(jnp.all(jnp.isfinite(out)))
    assert bool(jnp.all(jnp.abs(out) <= 1.0))   # tanh output range
    print("KERNEL_OK")
</pallas_src>

<mosaic_0001>
module attributes {stable_mosaic.version = 11 : i64} {
  func.func @_fused_matmul_kernel(%arg0: i32, %arg1: memref<4x64xbf16, #tpu.memory_space<vmem>>, %arg2: memref<64x2048xbf16, #tpu.memory_space<vmem>>, %arg3: memref<4x1xf32, #tpu.memory_space<vmem>>, %arg4: memref<4x2048xbf16, #tpu.memory_space<vmem>>) attributes {dimension_semantics = [#tpu.dimension_semantics<parallel>], iteration_bounds = array<i64: 16>, scalar_prefetch = 0 : i64, scratch_operands = 0 : i64, tpu.core_type = #tpu.core_type<tc>, window_params = [{pipeline_mode = #tpu.pipeline_mode<synchronous>, transform_indices = @transform_0, window_bounds = array<i64: 4, 64>}, {transform_indices = @transform_1, window_bounds = array<i64: 64, 2048>}, {pipeline_mode = #tpu.pipeline_mode<synchronous>, transform_indices = @transform_2, window_bounds = array<i64: 4, 1>}, {transform_indices = @transform_3, window_bounds = array<i64: 4, 2048>}]} {
    %c0 = arith.constant 0 : index
    %c0_0 = arith.constant 0 : index
    %0 = vector.load %arg1[%c0, %c0_0] : memref<4x64xbf16, #tpu.memory_space<vmem>>, vector<4x64xbf16>
    %c0_1 = arith.constant 0 : index
    %c0_2 = arith.constant 0 : index
    %1 = vector.load %arg2[%c0_1, %c0_2] : memref<64x2048xbf16, #tpu.memory_space<vmem>>, vector<64x2048xbf16>
    %cst = arith.constant dense<0.000000e+00> : vector<4x2048xf32>
    %2 = tpu.matmul %0, %1, %cst {dimension_numbers = #tpu.dot_dimension_numbers<[1], [0], [0], [1], [0, 0, 1, 1], [], []>} : vector<4x64xbf16>, vector<64x2048xbf16>, vector<4x2048xf32> -> vector<4x2048xf32>
    %c0_3 = arith.constant 0 : index
    %c0_4 = arith.constant 0 : index
    %3 = vector.load %arg3[%c0_3, %c0_4] : memref<4x1xf32, #tpu.memory_space<vmem>>, vector<4x1xf32>
    %4 = vector.broadcast %3 : vector<4x1xf32> to vector<4x2048xf32>
    %5 = arith.addf %2, %4 : vector<4x2048xf32>
    %cst_5 = arith.constant 0.000000e+00 : f32
    %6 = vector.broadcast %cst_5 : f32 to vector<4x2048xf32>
    %7 = arith.cmpf ogt, %5, %6 : vector<4x2048xf32>
    %cst_6 = arith.constant 2.000000e-01 : f32
    %8 = vector.broadcast %cst_6 : f32 to vector<4x2048xf32>
    %9 = arith.mulf %8, %5 : vector<4x2048xf32>
    %10 = arith.select %7, %5, %9 : vector<4x2048xi1>, vector<4x2048xf32>
    %11 = arith.truncf %10 : vector<4x2048xf32> to vector<4x2048xbf16>
    %c0_7 = arith.constant 0 : index
    %c0_8 = arith.constant 0 : index
    %12 = vector.load %arg4[%c0_7, %c0_8] : memref<4x2048xbf16, #tpu.memory_space<vmem>>, vector<4x2048xbf16>
    tpu.vector_store %arg4[%c0_7, %c0_8], %11 {strides = array<i32>} : memref<4x2048xbf16, #tpu.memory_space<vmem>>, vector<4x2048xbf16>,
    return
  }
  func.func @transform_0(%arg0: i32) -> (i32, i32) {
    %c0_i32 = arith.constant 0 : i32
    %c0_i32_0 = arith.constant 0 : i32
    %c0_i32_1 = arith.constant 0 : i32
    return %c0_i32, %c0_i32_0 : i32, i32
  }
  func.func @transform_1(%arg0: i32) -> (i32, i32) {
    %c0_i32 = arith.constant 0 : i32
    %c0_i32_0 = arith.constant 0 : i32
    return %c0_i32, %arg0 : i32, i32
  }
  func.func @transform_2(%arg0: i32) -> (i32, i32) {
    %c0_i32 = arith.constant 0 : i32
    %c0_i32_0 = arith.constant 0 : i32
    %c0_i32_1 = arith.constant 0 : i32
    return %c0_i32, %c0_i32_0 : i32, i32
  }
  func.func @transform_3(%arg0: i32) -> (i32, i32) {
    %c0_i32 = arith.constant 0 : i32
    %c0_i32_0 = arith.constant 0 : i32
    return %c0_i32, %arg0 : i32, i32
  }
}

module attributes {stable_mosaic.version = 11 : i64} {
  func.func @_fused_matmul_kernel(%arg0: i32, %arg1: memref<4x64xbf16, #tpu.memory_space<vmem>>, %arg2: memref<64x2048xbf16, #tpu.memory_space<vmem>>, %arg3: memref<4x1xf32, #tpu.memory_space<vmem>>, %arg4: memref<4x2048xbf16, #tpu.memory_space<vmem>>) attributes {dimension_semantics = [#tpu.dimension_semantics<parallel>], iteration_bounds = array<i64: 4>, scalar_prefetch = 0 : i64, scratch_operands = 0 : i64, tpu.core_type = #tpu.core_type<tc>, window_params = [{pipeline_mode = #tpu.pipeline_mode<synchronous>, transform_indices = @transform_0, window_bounds = array<i64: 4, 64>}, {transform_indices = @transform_1, window_bounds = array<i64: 64, 2048>}, {pipeline_mode = #tpu.pipeline_mode<synchronous>, transform_indices = @transform_2, window_bounds = array<i64: 4, 1>}, {transform_indices = @transform_3, window_bounds = array<i64: 4, 2048>}]} {
    %c0 = arith.constant 0 : index
    %c0_0 = arith.constant 0 : index
    %0 = vector.load %arg1[%c0, %c0_0] : memref<4x64xbf16, #tpu.memory_space<vmem>>, vector<4x64xbf16>
    %c0_1 = arith.constant 0 : index
    %c0_2 = arith.constant 0 : index
    %1 = vector.load %arg2[%c0_1, %c0_2] : memref<64x2048xbf16, #tpu.memory_space<vmem>>, vector<64x2048xbf16>
    %cst = arith.constant dense<0.000000e+00> : vector<4x2048xf32>
    %2 = tpu.matmul %0, %1, %cst {dimension_numbers = #tpu.dot_dimension_numbers<[1], [0], [0], [1], [0, 0, 1, 1], [], []>} : vector<4x64xbf16>, vector<64x2048xbf16>, vector<4x2048xf32> -> vector<4x2048xf32>
    %c0_3 = arith.constant 0 : index
    %c0_4 = arith.constant 0 : index
    %3 = vector.load %arg3[%c0_3, %c0_4] : memref<4x1xf32, #tpu.memory_space<vmem>>, vector<4x1xf32>
    %4 = vector.broadcast %3 : vector<4x1xf32> to vector<4x2048xf32>
    %5 = arith.addf %2, %4 : vector<4x2048xf32>
    %cst_5 = arith.constant 0.000000e+00 : f32
    %6 = vector.broadcast %cst_5 : f32 to vector<4x2048xf32>
    %7 = arith.cmpf ogt, %5, %6 : vector<4x2048xf32>
    %cst_6 = arith.constant 2.000000e-01 : f32
    %8 = vector.broadcast %cst_6 : f32 to vector<4x2048xf32>
    %9 = arith.mulf %8, %5 : vector<4x2048xf32>
    %10 = arith.select %7, %5, %9 : vector<4x2048xi1>, vector<4x2048xf32>
    %11 = arith.truncf %10 : vector<4x2048xf32> to vector<4x2048xbf16>
    %c0_7 = arith.constant 0 : index
    %c0_8 = arith.constant 0 : index
    %12 = vector.load %arg4[%c0_7, %c0_8] : memref<4x2048xbf16, #tpu.memory_space<vmem>>, vector<4x2048xbf16>
    tpu.vector_store %arg4[%c0_7, %c0_8], %11 {strides = array<i32>} : memref<4x2048xbf16, #tpu.memory_space<vmem>>, vector<4x2048xbf16>,
    return
  }
  func.func @transform_0(%arg0: i32) -> (i32, i32) {
    %c0_i32 = arith.constant 0 : i32
    %c0_i32_0 = arith.constant 0 : i32
    %c0_i32_1 = arith.constant 0 : i32
    return %c0_i32, %c0_i32_0 : i32, i32
  }
  func.func @transform_1(%arg0: i32) -> (i32, i32) {
    %c0_i32 = arith.constant 0 : i32
    %c0_i32_0 = arith.constant 0 : i32
    return %c0_i32, %arg0 : i32, i32
  }
  func.func @transform_2(%arg0: i32) -> (i32, i32) {
    %c0_i32 = arith.constant 0 : i32
    %c0_i32_0 = arith.constant 0 : i32
    %c0_i32_1 = arith.constant 0 : i32
    return %c0_i32, %c0_i32_0 : i32, i32
  }
  func.func @transform_3(%arg0: i32) -> (i32, i32) {
    %c0_i32 = arith.constant 0 : i32
    %c0_i32_0 = arith.constant 0 : i32
    return %c0_i32, %arg0 : i32, i32
  }
}

module attributes {stable_mosaic.version = 11 : i64} {
  func.func @_fused_matmul_kernel(%arg0: i32, %arg1: memref<4x64xbf16, #tpu.memory_space<vmem>>, %arg2: memref<64x2048xbf16, #tpu.memory_space<vmem>>, %arg3: memref<4x1xf32, #tpu.memory_space<vmem>>, %arg4: memref<4x2048xbf16, #tpu.memory_space<vmem>>) attributes {dimension_semantics = [#tpu.dimension_semantics<parallel>], iteration_bounds = array<i64: 1>, scalar_prefetch = 0 : i64, scratch_operands = 0 : i64, tpu.core_type = #tpu.core_type<tc>, window_params = [{pipeline_mode = #tpu.pipeline_mode<synchronous>, transform_indices = @transform_0, window_bounds = array<i64: 4, 64>}, {transform_indices = @transform_1, window_bounds = array<i64: 64, 2048>}, {pipeline_mode = #tpu.pipeline_mode<synchronous>, transform_indices = @transform_2, window_bounds = array<i64: 4, 1>}, {transform_indices = @transform_3, window_bounds = array<i64: 4, 2048>}]} {
    %c0 = arith.constant 0 : index
    %c0_0 = arith.constant 0 : index
    %0 = vector.load %arg1[%c0, %c0_0] : memref<4x64xbf16, #tpu.memory_space<vmem>>, vector<4x64xbf16>
    %c0_1 = arith.constant 0 : index
    %c0_2 = arith.constant 0 : index
    %1 = vector.load %arg2[%c0_1, %c0_2] : memref<64x2048xbf16, #tpu.memory_space<vmem>>, vector<64x2048xbf16>
    %cst = arith.constant dense<0.000000e+00> : vector<4x2048xf32>
    %2 = tpu.matmul %0, %1, %cst {dimension_numbers = #tpu.dot_dimension_numbers<[1], [0], [0], [1], [0, 0, 1, 1], [], []>} : vector<4x64xbf16>, vector<64x2048xbf16>, vector<4x2048xf32> -> vector<4x2048xf32>
    %c0_3 = arith.constant 0 : index
    %c0_4 = arith.constant 0 : index
    %3 = vector.load %arg3[%c0_3, %c0_4] : memref<4x1xf32, #tpu.memory_space<vmem>>, vector<4x1xf32>
    %4 = vector.broadcast %3 : vector<4x1xf32> to vector<4x2048xf32>
    %5 = arith.addf %2, %4 : vector<4x2048xf32>
    %cst_5 = arith.constant 0.000000e+00 : f32
    %6 = vector.broadcast %cst_5 : f32 to vector<4x2048xf32>
    %7 = arith.cmpf ogt, %5, %6 : vector<4x2048xf32>
    %cst_6 = arith.constant 2.000000e-01 : f32
    %8 = vector.broadcast %cst_6 : f32 to vector<4x2048xf32>
    %9 = arith.mulf %8, %5 : vector<4x2048xf32>
    %10 = arith.select %7, %5, %9 : vector<4x2048xi1>, vector<4x2048xf32>
    %11 = arith.truncf %10 : vector<4x2048xf32> to vector<4x2048xbf16>
    %c0_7 = arith.constant 0 : index
    %c0_8 = arith.constant 0 : index
    %12 = vector.load %arg4[%c0_7, %c0_8] : memref<4x2048xbf16, #tpu.memory_space<vmem>>, vector<4x2048xbf16>
    tpu.vector_store %arg4[%c0_7, %c0_8], %11 {strides = array<i32>} : memref<4x2048xbf16, #tpu.memory_space<vmem>>, vector<4x2048xbf16>,
    return
  }
  func.func @transform_0(%arg0: i32) -> (i32, i32) {
    %c0_i32 = arith.constant 0 : i32
    %c0_i32_0 = arith.constant 0 : i32
    %c0_i32_1 = arith.constant 0 : i32
    return %c0_i32, %c0_i32_0 : i32, i32
  }
  func.func @transform_1(%arg0: i32) -> (i32, i32) {
    %c0_i32 = arith.constant 0 : i32
    %c0_i32_0 = arith.constant 0 : i32
    return %c0_i32, %arg0 : i32, i32
  }
  func.func @transform_2(%arg0: i32) -> (i32, i32) {
    %c0_i32 = arith.constant 0 : i32
    %c0_i32_0 = arith.constant 0 : i32
    %c0_i32_1 = arith.constant 0 : i32
    return %c0_i32, %c0_i32_0 : i32, i32
  }
  func.func @transform_3(%arg0: i32) -> (i32, i32) {
    %c0_i32 = arith.constant 0 : i32
    %c0_i32_0 = arith.constant 0 : i32
    return %c0_i32, %arg0 : i32, i32
  }
}

module attributes {stable_mosaic.version = 11 : i64} {
  func.func @_fused_matmul_kernel(%arg0: i32, %arg1: memref<8x64xbf16, #tpu.memory_space<vmem>>, %arg2: memref<64x512xbf16, #tpu.memory_space<vmem>>, %arg3: memref<8x1xf32, #tpu.memory_space<vmem>>, %arg4: memref<8x512xbf16, #tpu.memory_space<vmem>>) attributes {dimension_semantics = [#tpu.dimension_semantics<parallel>], iteration_bounds = array<i64: 1>, scalar_prefetch = 0 : i64, scratch_operands = 0 : i64, tpu.core_type = #tpu.core_type<tc>, window_params = [{pipeline_mode = #tpu.pipeline_mode<synchronous>, transform_indices = @transform_0, window_bounds = array<i64: 8, 64>}, {transform_indices = @transform_1, window_bounds = array<i64: 64, 512>}, {pipeline_mode = #tpu.pipeline_mode<synchronous>, transform_indices = @transform_2, window_bounds = array<i64: 8, 1>}, {transform_indices = @transform_3, window_bounds = array<i64: 8, 512>}]} {
    %c0 = arith.constant 0 : index
    %c0_0 = arith.constant 0 : index
    %0 = vector.load %arg1[%c0, %c0_0] : memref<8x64xbf16, #tpu.memory_space<vmem>>, vector<8x64xbf16>
    %c0_1 = arith.constant 0 : index
    %c0_2 = arith.constant 0 : index
    %1 = vector.load %arg2[%c0_1, %c0_2] : memref<64x512xbf16, #tpu.memory_space<vmem>>, vector<64x512xbf16>
    %cst = arith.constant dense<0.000000e+00> : vector<8x512xf32>
    %2 = tpu.matmul %0, %1, %cst {dimension_numbers = #tpu.dot_dimension_numbers<[1], [0], [0], [1], [0, 0, 1, 1], [], []>} : vector<8x64xbf16>, vector<64x512xbf16>, vector<8x512xf32> -> vector<8x512xf32>
    %c0_3 = arith.constant 0 : index
    %c0_4 = arith.constant 0 : index
    %3 = vector.load %arg3[%c0_3, %c0_4] : memref<8x1xf32, #tpu.memory_space<vmem>>, vector<8x1xf32>
    %4 = vector.broadcast %3 : vector<8x1xf32> to vector<8x512xf32>
    %5 = arith.addf %2, %4 : vector<8x512xf32>
    %cst_5 = arith.constant 0.000000e+00 : f32
    %6 = vector.broadcast %cst_5 : f32 to vector<8x512xf32>
    %7 = arith.cmpf ogt, %5, %6 : vector<8x512xf32>
    %cst_6 = arith.constant 2.000000e-01 : f32
    %8 = vector.broadcast %cst_6 : f32 to vector<8x512xf32>
    %9 = arith.mulf %8, %5 : vector<8x512xf32>
    %10 = arith.select %7, %5, %9 : vector<8x512xi1>, vector<8x512xf32>
    %11 = arith.truncf %10 : vector<8x512xf32> to vector<8x512xbf16>
    %c0_7 = arith.constant 0 : index
    %c0_8 = arith.constant 0 : index
    %12 = vector.load %arg4[%c0_7, %c0_8] : memref<8x512xbf16, #tpu.memory_space<vmem>>, vector<8x512xbf16>
    tpu.vector_store %arg4[%c0_7, %c0_8], %11 {strides = array<i32>} : memref<8x512xbf16, #tpu.memory_space<vmem>>, vector<8x512xbf16>,
    return
  }
  func.func @transform_0(%arg0: i32) -> (i32, i32) {
    %c0_i32 = arith.constant 0 : i32
    %c0_i32_0 = arith.constant 0 : i32
    %c0_i32_1 = arith.constant 0 : i32
    return %c0_i32, %c0_i32_0 : i32, i32
  }
  func.func @transform_1(%arg0: i32) -> (i32, i32) {
    %c0_i32 = arith.constant 0 : i32
    %c0_i32_0 = arith.constant 0 : i32
    return %c0_i32, %arg0 : i32, i32
  }
  func.func @transform_2(%arg0: i32) -> (i32, i32) {
    %c0_i32 = arith.constant 0 : i32
    %c0_i32_0 = arith.constant 0 : i32
    %c0_i32_1 = arith.constant 0 : i32
    return %c0_i32, %c0_i32_0 : i32, i32
  }
  func.func @transform_3(%arg0: i32) -> (i32, i32) {
    %c0_i32 = arith.constant 0 : i32
    %c0_i32_0 = arith.constant 0 : i32
    return %c0_i32, %arg0 : i32, i32
  }
}

module attributes {stable_mosaic.version = 11 : i64} {
  func.func @_fused_matmul_kernel(%arg0: i32, %arg1: memref<16x128xbf16, #tpu.memory_space<vmem>>, %arg2: memref<128x128xbf16, #tpu.memory_space<vmem>>, %arg3: memref<16x1xf32, #tpu.memory_space<vmem>>, %arg4: memref<16x128xbf16, #tpu.memory_space<vmem>>) attributes {dimension_semantics = [#tpu.dimension_semantics<parallel>], iteration_bounds = array<i64: 1>, scalar_prefetch = 0 : i64, scratch_operands = 0 : i64, tpu.core_type = #tpu.core_type<tc>, window_params = [{pipeline_mode = #tpu.pipeline_mode<synchronous>, transform_indices = @transform_0, window_bounds = array<i64: 16, 128>}, {transform_indices = @transform_1, window_bounds = array<i64: 128, 128>}, {pipeline_mode = #tpu.pipeline_mode<synchronous>, transform_indices = @transform_2, window_bounds = array<i64: 16, 1>}, {transform_indices = @transform_3, window_bounds = array<i64: 16, 128>}]} {
    %c0 = arith.constant 0 : index
    %c0_0 = arith.constant 0 : index
    %0 = vector.load %arg1[%c0, %c0_0] : memref<16x128xbf16, #tpu.memory_space<vmem>>, vector<16x128xbf16>
    %c0_1 = arith.constant 0 : index
    %c0_2 = arith.constant 0 : index
    %1 = vector.load %arg2[%c0_1, %c0_2] : memref<128x128xbf16, #tpu.memory_space<vmem>>, vector<128x128xbf16>
    %cst = arith.constant dense<0.000000e+00> : vector<16x128xf32>
    %2 = tpu.matmul %0, %1, %cst {dimension_numbers = #tpu.dot_dimension_numbers<[1], [0], [0], [1], [0, 0, 1, 1], [], []>} : vector<16x128xbf16>, vector<128x128xbf16>, vector<16x128xf32> -> vector<16x128xf32>
    %c0_3 = arith.constant 0 : index
    %c0_4 = arith.constant 0 : index
    %3 = vector.load %arg3[%c0_3, %c0_4] : memref<16x1xf32, #tpu.memory_space<vmem>>, vector<16x1xf32>
    %4 = vector.broadcast %3 : vector<16x1xf32> to vector<16x128xf32>
    %5 = arith.addf %2, %4 : vector<16x128xf32>
    %cst_5 = arith.constant 0.000000e+00 : f32
    %6 = vector.broadcast %cst_5 : f32 to vector<16x128xf32>
    %7 = arith.cmpf ogt, %5, %6 : vector<16x128xf32>
    %cst_6 = arith.constant 2.000000e-01 : f32
    %8 = vector.broadcast %cst_6 : f32 to vector<16x128xf32>
    %9 = arith.mulf %8, %5 : vector<16x128xf32>
    %10 = arith.select %7, %5, %9 : vector<16x128xi1>, vector<16x128xf32>
    %11 = arith.truncf %10 : vector<16x128xf32> to vector<16x128xbf16>
    %c0_7 = arith.constant 0 : index
    %c0_8 = arith.constant 0 : index
    %12 = vector.load %arg4[%c0_7, %c0_8] : memref<16x128xbf16, #tpu.memory_space<vmem>>, vector<16x128xbf16>
    tpu.vector_store %arg4[%c0_7, %c0_8], %11 {strides = array<i32>} : memref<16x128xbf16, #tpu.memory_space<vmem>>, vector<16x128xbf16>,
    return
  }
  func.func @transform_0(%arg0: i32) -> (i32, i32) {
    %c0_i32 = arith.constant 0 : i32
    %c0_i32_0 = arith.constant 0 : i32
    %c0_i32_1 = arith.constant 0 : i32
    return %c0_i32, %c0_i32_0 : i32, i32
  }
  func.func @transform_1(%arg0: i32) -> (i32, i32) {
    %c0_i32 = arith.constant 0 : i32
    %c0_i32_0 = arith.constant 0 : i32
    return %c0_i32, %arg0 : i32, i32
  }
  func.func @transform_2(%arg0: i32) -> (i32, i32) {
    %c0_i32 = arith.constant 0 : i32
    %c0_i32_0 = arith.constant 0 : i32
    %c0_i32_1 = arith.constant 0 : i32
    return %c0_i32, %c0_i32_0 : i32, i32
  }
  func.func @transform_3(%arg0: i32) -> (i32, i32) {
    %c0_i32 = arith.constant 0 : i32
    %c0_i32_0 = arith.constant 0 : i32
    return %c0_i32, %arg0 : i32, i32
  }
}

module attributes {stable_mosaic.version = 11 : i64} {
  func.func @_fused_matmul_kernel(%arg0: i32, %arg1: memref<32x256xbf16, #tpu.memory_space<vmem>>, %arg2: memref<256x32xbf16, #tpu.memory_space<vmem>>, %arg3: memref<32x1xf32, #tpu.memory_space<vmem>>, %arg4: memref<32x32xbf16, #tpu.memory_space<vmem>>) attributes {dimension_semantics = [#tpu.dimension_semantics<parallel>], iteration_bounds = array<i64: 1>, scalar_prefetch = 0 : i64, scratch_operands = 0 : i64, tpu.core_type = #tpu.core_type<tc>, window_params = [{pipeline_mode = #tpu.pipeline_mode<synchronous>, transform_indices = @transform_0, window_bounds = array<i64: 32, 256>}, {transform_indices = @transform_1, window_bounds = array<i64: 256, 32>}, {pipeline_mode = #tpu.pipeline_mode<synchronous>, transform_indices = @transform_2, window_bounds = array<i64: 32, 1>}, {transform_indices = @transform_3, window_bounds = array<i64: 32, 32>}]} {
    %c0 = arith.constant 0 : index
    %c0_0 = arith.constant 0 : index
    %0 = vector.load %arg1[%c0, %c0_0] : memref<32x256xbf16, #tpu.memory_space<vmem>>, vector<32x256xbf16>
    %c0_1 = arith.constant 0 : index
    %c0_2 = arith.constant 0 : index
    %1 = vector.load %arg2[%c0_1, %c0_2] : memref<256x32xbf16, #tpu.memory_space<vmem>>, vector<256x32xbf16>
    %cst = arith.constant dense<0.000000e+00> : vector<32x32xf32>
    %2 = tpu.matmul %0, %1, %cst {dimension_numbers = #tpu.dot_dimension_numbers<[1], [0], [0], [1], [0, 0, 1, 1], [], []>} : vector<32x256xbf16>, vector<256x32xbf16>, vector<32x32xf32> -> vector<32x32xf32>
    %c0_3 = arith.constant 0 : index
    %c0_4 = arith.constant 0 : index
    %3 = vector.load %arg3[%c0_3, %c0_4] : memref<32x1xf32, #tpu.memory_space<vmem>>, vector<32x1xf32>
    %4 = vector.broadcast %3 : vector<32x1xf32> to vector<32x32xf32>
    %5 = arith.addf %2, %4 : vector<32x32xf32>
    %cst_5 = arith.constant 0.000000e+00 : f32
    %6 = vector.broadcast %cst_5 : f32 to vector<32x32xf32>
    %7 = arith.cmpf ogt, %5, %6 : vector<32x32xf32>
    %cst_6 = arith.constant 2.000000e-01 : f32
    %8 = vector.broadcast %cst_6 : f32 to vector<32x32xf32>
    %9 = arith.mulf %8, %5 : vector<32x32xf32>
    %10 = arith.select %7, %5, %9 : vector<32x32xi1>, vector<32x32xf32>
    %11 = arith.truncf %10 : vector<32x32xf32> to vector<32x32xbf16>
    %c0_7 = arith.constant 0 : index
    %c0_8 = arith.constant 0 : index
    %12 = vector.load %arg4[%c0_7, %c0_8] : memref<32x32xbf16, #tpu.memory_space<vmem>>, vector<32x32xbf16>
    tpu.vector_store %arg4[%c0_7, %c0_8], %11 {strides = array<i32>} : memref<32x32xbf16, #tpu.memory_space<vmem>>, vector<32x32xbf16>,
    return
  }
  func.func @transform_0(%arg0: i32) -> (i32, i32) {
    %c0_i32 = arith.constant 0 : i32
    %c0_i32_0 = arith.constant 0 : i32
    %c0_i32_1 = arith.constant 0 : i32
    return %c0_i32, %c0_i32_0 : i32, i32
  }
  func.func @transform_1(%arg0: i32) -> (i32, i32) {
    %c0_i32 = arith.constant 0 : i32
    %c0_i32_0 = arith.constant 0 : i32
    return %c0_i32, %arg0 : i32, i32
  }
  func.func @transform_2(%arg0: i32) -> (i32, i32) {
    %c0_i32 = arith.constant 0 : i32
    %c0_i32_0 = arith.constant 0 : i32
    %c0_i32_1 = arith.constant 0 : i32
    return %c0_i32, %c0_i32_0 : i32, i32
  }
  func.func @transform_3(%arg0: i32) -> (i32, i32) {
    %c0_i32 = arith.constant 0 : i32
    %c0_i32_0 = arith.constant 0 : i32
    return %c0_i32, %arg0 : i32, i32
  }
}

module attributes {stable_mosaic.version = 11 : i64} {
  func.func @_fused_matmul_kernel(%arg0: i32, %arg1: memref<16x512xbf16, #tpu.memory_space<vmem>>, %arg2: memref<512x2xbf16, #tpu.memory_space<vmem>>, %arg3: memref<16x1xf32, #tpu.memory_space<vmem>>, %arg4: memref<16x2xbf16, #tpu.memory_space<vmem>>) attributes {dimension_semantics = [#tpu.dimension_semantics<parallel>], iteration_bounds = array<i64: 1>, scalar_prefetch = 0 : i64, scratch_operands = 0 : i64, tpu.core_type = #tpu.core_type<tc>, window_params = [{pipeline_mode = #tpu.pipeline_mode<synchronous>, transform_indices = @transform_0, window_bounds = array<i64: 16, 512>}, {transform_indices = @transform_1, window_bounds = array<i64: 512, 2>}, {pipeline_mode = #tpu.pipeline_mode<synchronous>, transform_indices = @transform_2, window_bounds = array<i64: 16, 1>}, {transform_indices = @transform_3, window_bounds = array<i64: 16, 2>}]} {
    %c0 = arith.constant 0 : index
    %c0_0 = arith.constant 0 : index
    %0 = vector.load %arg1[%c0, %c0_0] : memref<16x512xbf16, #tpu.memory_space<vmem>>, vector<16x512xbf16>
    %c0_1 = arith.constant 0 : index
    %c0_2 = arith.constant 0 : index
    %1 = vector.load %arg2[%c0_1, %c0_2] : memref<512x2xbf16, #tpu.memory_space<vmem>>, vector<512x2xbf16>
    %cst = arith.constant dense<0.000000e+00> : vector<16x2xf32>
    %2 = tpu.matmul %0, %1, %cst {dimension_numbers = #tpu.dot_dimension_numbers<[1], [0], [0], [1], [0, 0, 1, 1], [], []>} : vector<16x512xbf16>, vector<512x2xbf16>, vector<16x2xf32> -> vector<16x2xf32>
    %c0_3 = arith.constant 0 : index
    %c0_4 = arith.constant 0 : index
    %3 = vector.load %arg3[%c0_3, %c0_4] : memref<16x1xf32, #tpu.memory_space<vmem>>, vector<16x1xf32>
    %4 = vector.broadcast %3 : vector<16x1xf32> to vector<16x2xf32>
    %5 = arith.addf %2, %4 : vector<16x2xf32>
    %cst_5 = arith.constant 0.000000e+00 : f32
    %6 = vector.broadcast %cst_5 : f32 to vector<16x2xf32>
    %7 = arith.cmpf ogt, %5, %6 : vector<16x2xf32>
    %cst_6 = arith.constant 2.000000e-01 : f32
    %8 = vector.broadcast %cst_6 : f32 to vector<16x2xf32>
    %9 = arith.mulf %8, %5 : vector<16x2xf32>
    %10 = arith.select %7, %5, %9 : vector<16x2xi1>, vector<16x2xf32>
    %11 = arith.truncf %10 : vector<16x2xf32> to vector<16x2xbf16>
    %c0_7 = arith.constant 0 : index
    %c0_8 = arith.constant 0 : index
    %12 = vector.load %arg4[%c0_7, %c0_8] : memref<16x2xbf16, #tpu.memory_space<vmem>>, vector<16x2xbf16>
    tpu.vector_store %arg4[%c0_7, %c0_8], %11 {strides = array<i32>} : memref<16x2xbf16, #tpu.memory_space<vmem>>, vector<16x2xbf16>,
    return
  }
  func.func @transform_0(%arg0: i32) -> (i32, i32) {
    %c0_i32 = arith.constant 0 : i32
    %c0_i32_0 = arith.constant 0 : i32
    %c0_i32_1 = arith.constant 0 : i32
    return %c0_i32, %c0_i32_0 : i32, i32
  }
  func.func @transform_1(%arg0: i32) -> (i32, i32) {
    %c0_i32 = arith.constant 0 : i32
    %c0_i32_0 = arith.constant 0 : i32
    return %c0_i32, %arg0 : i32, i32
  }
  func.func @transform_2(%arg0: i32) -> (i32, i32) {
    %c0_i32 = arith.constant 0 : i32
    %c0_i32_0 = arith.constant 0 : i32
    %c0_i32_1 = arith.constant 0 : i32
    return %c0_i32, %c0_i32_0 : i32, i32
  }
  func.func @transform_3(%arg0: i32) -> (i32, i32) {
    %c0_i32 = arith.constant 0 : i32
    %c0_i32_0 = arith.constant 0 : i32
    return %c0_i32, %arg0 : i32, i32
  }
}

module attributes {stable_mosaic.version = 11 : i64} {
  func.func @_fused_matmul_kernel(%arg0: i32, %arg1: memref<32x256xbf16, #tpu.memory_space<vmem>>, %arg2: memref<256x32xbf16, #tpu.memory_space<vmem>>, %arg3: memref<32x1xf32, #tpu.memory_space<vmem>>, %arg4: memref<32x32xbf16, #tpu.memory_space<vmem>>) attributes {dimension_semantics = [#tpu.dimension_semantics<parallel>], iteration_bounds = array<i64: 1>, scalar_prefetch = 0 : i64, scratch_operands = 0 : i64, tpu.core_type = #tpu.core_type<tc>, window_params = [{pipeline_mode = #tpu.pipeline_mode<synchronous>, transform_indices = @transform_0, window_bounds = array<i64: 32, 256>}, {transform_indices = @transform_1, window_bounds = array<i64: 256, 32>}, {pipeline_mode = #tpu.pipeline_mode<synchronous>, transform_indices = @transform_2, window_bounds = array<i64: 32, 1>}, {transform_indices = @transform_3, window_bounds = array<i64: 32, 32>}]} {
    %c0 = arith.constant 0 : index
    %c0_0 = arith.constant 0 : index
    %0 = vector.load %arg1[%c0, %c0_0] : memref<32x256xbf16, #tpu.memory_space<vmem>>, vector<32x256xbf16>
    %c0_1 = arith.constant 0 : index
    %c0_2 = arith.constant 0 : index
    %1 = vector.load %arg2[%c0_1, %c0_2] : memref<256x32xbf16, #tpu.memory_space<vmem>>, vector<256x32xbf16>
    %cst = arith.constant dense<0.000000e+00> : vector<32x32xf32>
    %2 = tpu.matmul %0, %1, %cst {dimension_numbers = #tpu.dot_dimension_numbers<[1], [0], [0], [1], [0, 0, 1, 1], [], []>} : vector<32x256xbf16>, vector<256x32xbf16>, vector<32x32xf32> -> vector<32x32xf32>
    %c0_3 = arith.constant 0 : index
    %c0_4 = arith.constant 0 : index
    %3 = vector.load %arg3[%c0_3, %c0_4] : memref<32x1xf32, #tpu.memory_space<vmem>>, vector<32x1xf32>
    %4 = vector.broadcast %3 : vector<32x1xf32> to vector<32x32xf32>
    %5 = arith.addf %2, %4 : vector<32x32xf32>
    %cst_5 = arith.constant 0.000000e+00 : f32
    %6 = vector.broadcast %cst_5 : f32 to vector<32x32xf32>
    %7 = arith.maximumf %5, %6 : vector<32x32xf32>
    %8 = arith.truncf %7 : vector<32x32xf32> to vector<32x32xbf16>
    %c0_6 = arith.constant 0 : index
    %c0_7 = arith.constant 0 : index
    %9 = vector.load %arg4[%c0_6, %c0_7] : memref<32x32xbf16, #tpu.memory_space<vmem>>, vector<32x32xbf16>
    tpu.vector_store %arg4[%c0_6, %c0_7], %8 {strides = array<i32>} : memref<32x32xbf16, #tpu.memory_space<vmem>>, vector<32x32xbf16>,
    return
  }
  func.func @transform_0(%arg0: i32) -> (i32, i32) {
    %c0_i32 = arith.constant 0 : i32
    %c0_i32_0 = arith.constant 0 : i32
    %c0_i32_1 = arith.constant 0 : i32
    return %c0_i32, %c0_i32_0 : i32, i32
  }
  func.func @transform_1(%arg0: i32) -> (i32, i32) {
    %c0_i32 = arith.constant 0 : i32
    %c0_i32_0 = arith.constant 0 : i32
    return %c0_i32, %arg0 : i32, i32
  }
  func.func @transform_2(%arg0: i32) -> (i32, i32) {
    %c0_i32 = arith.constant 0 : i32
    %c0_i32_0 = arith.constant 0 : i32
    %c0_i32_1 = arith.constant 0 : i32
    return %c0_i32, %c0_i32_0 : i32, i32
  }
  func.func @transform_3(%arg0: i32) -> (i32, i32) {
    %c0_i32 = arith.constant 0 : i32
    %c0_i32_0 = arith.constant 0 : i32
    return %c0_i32, %arg0 : i32, i32
  }
}

module attributes {stable_mosaic.version = 11 : i64} {
  func.func @_fused_matmul_kernel(%arg0: i32, %arg1: memref<16x128xbf16, #tpu.memory_space<vmem>>, %arg2: memref<128x32xbf16, #tpu.memory_space<vmem>>, %arg3: memref<16x1xf32, #tpu.memory_space<vmem>>, %arg4: memref<16x32xbf16, #tpu.memory_space<vmem>>) attributes {dimension_semantics = [#tpu.dimension_semantics<parallel>], iteration_bounds = array<i64: 1>, scalar_prefetch = 0 : i64, scratch_operands = 0 : i64, tpu.core_type = #tpu.core_type<tc>, window_params = [{pipeline_mode = #tpu.pipeline_mode<synchronous>, transform_indices = @transform_0, window_bounds = array<i64: 16, 128>}, {transform_indices = @transform_1, window_bounds = array<i64: 128, 32>}, {pipeline_mode = #tpu.pipeline_mode<synchronous>, transform_indices = @transform_2, window_bounds = array<i64: 16, 1>}, {transform_indices = @transform_3, window_bounds = array<i64: 16, 32>}]} {
    %c0 = arith.constant 0 : index
    %c0_0 = arith.constant 0 : index
    %0 = vector.load %arg1[%c0, %c0_0] : memref<16x128xbf16, #tpu.memory_space<vmem>>, vector<16x128xbf16>
    %c0_1 = arith.constant 0 : index
    %c0_2 = arith.constant 0 : index
    %1 = vector.load %arg2[%c0_1, %c0_2] : memref<128x32xbf16, #tpu.memory_space<vmem>>, vector<128x32xbf16>
    %cst = arith.constant dense<0.000000e+00> : vector<16x32xf32>
    %2 = tpu.matmul %0, %1, %cst {dimension_numbers = #tpu.dot_dimension_numbers<[1], [0], [0], [1], [0, 0, 1, 1], [], []>} : vector<16x128xbf16>, vector<128x32xbf16>, vector<16x32xf32> -> vector<16x32xf32>
    %c0_3 = arith.constant 0 : index
    %c0_4 = arith.constant 0 : index
    %3 = vector.load %arg3[%c0_3, %c0_4] : memref<16x1xf32, #tpu.memory_space<vmem>>, vector<16x1xf32>
    %4 = vector.broadcast %3 : vector<16x1xf32> to vector<16x32xf32>
    %5 = arith.addf %2, %4 : vector<16x32xf32>
    %cst_5 = arith.constant 0.000000e+00 : f32
    %6 = vector.broadcast %cst_5 : f32 to vector<16x32xf32>
    %7 = arith.maximumf %5, %6 : vector<16x32xf32>
    %8 = arith.truncf %7 : vector<16x32xf32> to vector<16x32xbf16>
    %c0_6 = arith.constant 0 : index
    %c0_7 = arith.constant 0 : index
    %9 = vector.load %arg4[%c0_6, %c0_7] : memref<16x32xbf16, #tpu.memory_space<vmem>>, vector<16x32xbf16>
    tpu.vector_store %arg4[%c0_6, %c0_7], %8 {strides = array<i32>} : memref<16x32xbf16, #tpu.memory_space<vmem>>, vector<16x32xbf16>,
    return
  }
  func.func @transform_0(%arg0: i32) -> (i32, i32) {
    %c0_i32 = arith.constant 0 : i32
    %c0_i32_0 = arith.constant 0 : i32
    %c0_i32_1 = arith.constant 0 : i32
    return %c0_i32, %c0_i32_0 : i32, i32
  }
  func.func @transform_1(%arg0: i32) -> (i32, i32) {
    %c0_i32 = arith.constant 0 : i32
    %c0_i32_0 = arith.constant 0 : i32
    return %c0_i32, %arg0 : i32, i32
  }
  func.func @transform_2(%arg0: i32) -> (i32, i32) {
    %c0_i32 = arith.constant 0 : i32
    %c0_i32_0 = arith.constant 0 : i32
    %c0_i32_1 = arith.constant 0 : i32
    return %c0_i32, %c0_i32_0 : i32, i32
  }
  func.func @transform_3(%arg0: i32) -> (i32, i32) {
    %c0_i32 = arith.constant 0 : i32
    %c0_i32_0 = arith.constant 0 : i32
    return %c0_i32, %arg0 : i32, i32
  }
}

module attributes {stable_mosaic.version = 11 : i64} {
  func.func @_fused_matmul_kernel(%arg0: i32, %arg1: memref<8x64xbf16, #tpu.memory_space<vmem>>, %arg2: memref<64x128xbf16, #tpu.memory_space<vmem>>, %arg3: memref<8x1xf32, #tpu.memory_space<vmem>>, %arg4: memref<8x128xbf16, #tpu.memory_space<vmem>>) attributes {dimension_semantics = [#tpu.dimension_semantics<parallel>], iteration_bounds = array<i64: 1>, scalar_prefetch = 0 : i64, scratch_operands = 0 : i64, tpu.core_type = #tpu.core_type<tc>, window_params = [{pipeline_mode = #tpu.pipeline_mode<synchronous>, transform_indices = @transform_0, window_bounds = array<i64: 8, 64>}, {transform_indices = @transform_1, window_bounds = array<i64: 64, 128>}, {pipeline_mode = #tpu.pipeline_mode<synchronous>, transform_indices = @transform_2, window_bounds = array<i64: 8, 1>}, {transform_indices = @transform_3, window_bounds = array<i64: 8, 128>}]} {
    %c0 = arith.constant 0 : index
    %c0_0 = arith.constant 0 : index
    %0 = vector.load %arg1[%c0, %c0_0] : memref<8x64xbf16, #tpu.memory_space<vmem>>, vector<8x64xbf16>
    %c0_1 = arith.constant 0 : index
    %c0_2 = arith.constant 0 : index
    %1 = vector.load %arg2[%c0_1, %c0_2] : memref<64x128xbf16, #tpu.memory_space<vmem>>, vector<64x128xbf16>
    %cst = arith.constant dense<0.000000e+00> : vector<8x128xf32>
    %2 = tpu.matmul %0, %1, %cst {dimension_numbers = #tpu.dot_dimension_numbers<[1], [0], [0], [1], [0, 0, 1, 1], [], []>} : vector<8x64xbf16>, vector<64x128xbf16>, vector<8x128xf32> -> vector<8x128xf32>
    %c0_3 = arith.constant 0 : index
    %c0_4 = arith.constant 0 : index
    %3 = vector.load %arg3[%c0_3, %c0_4] : memref<8x1xf32, #tpu.memory_space<vmem>>, vector<8x1xf32>
    %4 = vector.broadcast %3 : vector<8x1xf32> to vector<8x128xf32>
    %5 = arith.addf %2, %4 : vector<8x128xf32>
    %cst_5 = arith.constant 0.000000e+00 : f32
    %6 = vector.broadcast %cst_5 : f32 to vector<8x128xf32>
    %7 = arith.maximumf %5, %6 : vector<8x128xf32>
    %8 = arith.truncf %7 : vector<8x128xf32> to vector<8x128xbf16>
    %c0_6 = arith.constant 0 : index
    %c0_7 = arith.constant 0 : index
    %9 = vector.load %arg4[%c0_6, %c0_7] : memref<8x128xbf16, #tpu.memory_space<vmem>>, vector<8x128xbf16>
    tpu.vector_store %arg4[%c0_6, %c0_7], %8 {strides = array<i32>} : memref<8x128xbf16, #tpu.memory_space<vmem>>, vector<8x128xbf16>,
    return
  }
  func.func @transform_0(%arg0: i32) -> (i32, i32) {
    %c0_i32 = arith.constant 0 : i32
    %c0_i32_0 = arith.constant 0 : i32
    %c0_i32_1 = arith.constant 0 : i32
    return %c0_i32, %c0_i32_0 : i32, i32
  }
  func.func @transform_1(%arg0: i32) -> (i32, i32) {
    %c0_i32 = arith.constant 0 : i32
    %c0_i32_0 = arith.constant 0 : i32
    return %c0_i32, %arg0 : i32, i32
  }
  func.func @transform_2(%arg0: i32) -> (i32, i32) {
    %c0_i32 = arith.constant 0 : i32
    %c0_i32_0 = arith.constant 0 : i32
    %c0_i32_1 = arith.constant 0 : i32
    return %c0_i32, %c0_i32_0 : i32, i32
  }
  func.func @transform_3(%arg0: i32) -> (i32, i32) {
    %c0_i32 = arith.constant 0 : i32
    %c0_i32_0 = arith.constant 0 : i32
    return %c0_i32, %arg0 : i32, i32
  }
}

module attributes {stable_mosaic.version = 11 : i64} {
  func.func @_fused_matmul_kernel(%arg0: i32, %arg1: memref<4x32xbf16, #tpu.memory_space<vmem>>, %arg2: memref<32x512xbf16, #tpu.memory_space<vmem>>, %arg3: memref<4x1xf32, #tpu.memory_space<vmem>>, %arg4: memref<4x512xbf16, #tpu.memory_space<vmem>>) attributes {dimension_semantics = [#tpu.dimension_semantics<parallel>], iteration_bounds = array<i64: 1>, scalar_prefetch = 0 : i64, scratch_operands = 0 : i64, tpu.core_type = #tpu.core_type<tc>, window_params = [{pipeline_mode = #tpu.pipeline_mode<synchronous>, transform_indices = @transform_0, window_bounds = array<i64: 4, 32>}, {transform_indices = @transform_1, window_bounds = array<i64: 32, 512>}, {pipeline_mode = #tpu.pipeline_mode<synchronous>, transform_indices = @transform_2, window_bounds = array<i64: 4, 1>}, {transform_indices = @transform_3, window_bounds = array<i64: 4, 512>}]} {
    %c0 = arith.constant 0 : index
    %c0_0 = arith.constant 0 : index
    %0 = vector.load %arg1[%c0, %c0_0] : memref<4x32xbf16, #tpu.memory_space<vmem>>, vector<4x32xbf16>
    %c0_1 = arith.constant 0 : index
    %c0_2 = arith.constant 0 : index
    %1 = vector.load %arg2[%c0_1, %c0_2] : memref<32x512xbf16, #tpu.memory_space<vmem>>, vector<32x512xbf16>
    %cst = arith.constant dense<0.000000e+00> : vector<4x512xf32>
    %2 = tpu.matmul %0, %1, %cst {dimension_numbers = #tpu.dot_dimension_numbers<[1], [0], [0], [1], [0, 0, 1, 1], [], []>} : vector<4x32xbf16>, vector<32x512xbf16>, vector<4x512xf32> -> vector<4x512xf32>
    %c0_3 = arith.constant 0 : index
    %c0_4 = arith.constant 0 : index
    %3 = vector.load %arg3[%c0_3, %c0_4] : memref<4x1xf32, #tpu.memory_space<vmem>>, vector<4x1xf32>
    %4 = vector.broadcast %3 : vector<4x1xf32> to vector<4x512xf32>
    %5 = arith.addf %2, %4 : vector<4x512xf32>
    %cst_5 = arith.constant 0.000000e+00 : f32
    %6 = vector.broadcast %cst_5 : f32 to vector<4x512xf32>
    %7 = arith.maximumf %5, %6 : vector<4x512xf32>
    %8 = arith.truncf %7 : vector<4x512xf32> to vector<4x512xbf16>
    %c0_6 = arith.constant 0 : index
    %c0_7 = arith.constant 0 : index
    %9 = vector.load %arg4[%c0_6, %c0_7] : memref<4x512xbf16, #tpu.memory_space<vmem>>, vector<4x512xbf16>
    tpu.vector_store %arg4[%c0_6, %c0_7], %8 {strides = array<i32>} : memref<4x512xbf16, #tpu.memory_space<vmem>>, vector<4x512xbf16>,
    return
  }
  func.func @transform_0(%arg0: i32) -> (i32, i32) {
    %c0_i32 = arith.constant 0 : i32
    %c0_i32_0 = arith.constant 0 : i32
    %c0_i32_1 = arith.constant 0 : i32
    return %c0_i32, %c0_i32_0 : i32, i32
  }
  func.func @transform_1(%arg0: i32) -> (i32, i32) {
    %c0_i32 = arith.constant 0 : i32
    %c0_i32_0 = arith.constant 0 : i32
    return %c0_i32, %arg0 : i32, i32
  }
  func.func @transform_2(%arg0: i32) -> (i32, i32) {
    %c0_i32 = arith.constant 0 : i32
    %c0_i32_0 = arith.constant 0 : i32
    %c0_i32_1 = arith.constant 0 : i32
    return %c0_i32, %c0_i32_0 : i32, i32
  }
  func.func @transform_3(%arg0: i32) -> (i32, i32) {
    %c0_i32 = arith.constant 0 : i32
    %c0_i32_0 = arith.constant 0 : i32
    return %c0_i32, %arg0 : i32, i32
  }
}

module attributes {stable_mosaic.version = 11 : i64} {
  func.func @_fused_matmul_kernel(%arg0: i32, %arg1: memref<4x16xbf16, #tpu.memory_space<vmem>>, %arg2: memref<16x2048xbf16, #tpu.memory_space<vmem>>, %arg3: memref<4x1xf32, #tpu.memory_space<vmem>>, %arg4: memref<4x2048xf32, #tpu.memory_space<vmem>>) attributes {dimension_semantics = [#tpu.dimension_semantics<parallel>], iteration_bounds = array<i64: 1>, scalar_prefetch = 0 : i64, scratch_operands = 0 : i64, tpu.core_type = #tpu.core_type<tc>, window_params = [{pipeline_mode = #tpu.pipeline_mode<synchronous>, transform_indices = @transform_0, window_bounds = array<i64: 4, 16>}, {transform_indices = @transform_1, window_bounds = array<i64: 16, 2048>}, {pipeline_mode = #tpu.pipeline_mode<synchronous>, transform_indices = @transform_2, window_bounds = array<i64: 4, 1>}, {transform_indices = @transform_3, window_bounds = array<i64: 4, 2048>}]} {
    %c0 = arith.constant 0 : index
    %c0_0 = arith.constant 0 : index
    %0 = vector.load %arg1[%c0, %c0_0] : memref<4x16xbf16, #tpu.memory_space<vmem>>, vector<4x16xbf16>
    %c0_1 = arith.constant 0 : index
    %c0_2 = arith.constant 0 : index
    %1 = vector.load %arg2[%c0_1, %c0_2] : memref<16x2048xbf16, #tpu.memory_space<vmem>>, vector<16x2048xbf16>
    %cst = arith.constant dense<0.000000e+00> : vector<4x2048xf32>
    %2 = tpu.matmul %0, %1, %cst {dimension_numbers = #tpu.dot_dimension_numbers<[1], [0], [0], [1], [0, 0, 1, 1], [], []>} : vector<4x16xbf16>, vector<16x2048xbf16>, vector<4x2048xf32> -> vector<4x2048xf32>
    %c0_3 = arith.constant 0 : index
    %c0_4 = arith.constant 0 : index
    %3 = vector.load %arg3[%c0_3, %c0_4] : memref<4x1xf32, #tpu.memory_space<vmem>>, vector<4x1xf32>
    %4 = vector.broadcast %3 : vector<4x1xf32> to vector<4x2048xf32>
    %5 = arith.addf %2, %4 : vector<4x2048xf32>
    %6 = math.tanh %5 : vector<4x2048xf32>
    %c0_5 = arith.constant 0 : index
    %c0_6 = arith.constant 0 : index
    %7 = vector.load %arg4[%c0_5, %c0_6] : memref<4x2048xf32, #tpu.memory_space<vmem>>, vector<4x2048xf32>
    tpu.vector_store %arg4[%c0_5, %c0_6], %6 {strides = array<i32>} : memref<4x2048xf32, #tpu.memory_space<vmem>>, vector<4x2048xf32>,
    return
  }
  func.func @transform_0(%arg0: i32) -> (i32, i32) {
    %c0_i32 = arith.constant 0 : i32
    %c0_i32_0 = arith.constant 0 : i32
    %c0_i32_1 = arith.constant 0 : i32
    return %c0_i32, %c0_i32_0 : i32, i32
  }
  func.func @transform_1(%arg0: i32) -> (i32, i32) {
    %c0_i32 = arith.constant 0 : i32
    %c0_i32_0 = arith.constant 0 : i32
    return %c0_i32, %arg0 : i32, i32
  }
  func.func @transform_2(%arg0: i32) -> (i32, i32) {
    %c0_i32 = arith.constant 0 : i32
    %c0_i32_0 = arith.constant 0 : i32
    %c0_i32_1 = arith.constant 0 : i32
    return %c0_i32, %c0_i32_0 : i32, i32
  }
  func.func @transform_3(%arg0: i32) -> (i32, i32) {
    %c0_i32 = arith.constant 0 : i32
    %c0_i32_0 = arith.constant 0 : i32
    return %c0_i32, %arg0 : i32, i32
  }
}

</mosaic_0001>

<llo_original>
// kernel: netG_forward.24
$region0: #{netG_forward.24}
  #allocation0 [shape = 'u32[]', space=smem, size = 0x4, offset = 0x4, fixed_abs, tag = 'smem constant byte address 0x4 - core index']
  #allocation1 [shape = 'u32[144,128]{1,0:T(1,128)}', space=vmem, size = 0x12000, scoped, tag = 'internal scratch']
  %s0 = inlined_call_operand.vmem [shape: bf16[4,64], index: 0, kind: input, shape index: {}]
  %s1 = inlined_call_operand.vmem [shape: bf16[64,32768], index: 1, kind: input, shape index: {}]
  %s2 = inlined_call_operand.vmem [shape: f32[4,1], index: 2, kind: input, shape index: {}]
  %s3 = inlined_call_operand.vmem [shape: bf16[4,32768], index: 3, kind: output, shape index: {}]
  %s4 = sld [smem:[#allocation0]]
  $region68: #{netG_forward.24} parent=0
    _
  %s6 = ssub.s32 1, %s4
  %s7 = scalar_select 0, %s6, %s4
  $region1: #{netG_forward.24} parent=0
    #allocation2 [shape = 'u8[524288]{0}', space=vmem, size = 0x80000, scoped, tag = 'input window, operand 1']
    loop: start=0, step=1, limit=18
    $region2: #{netG_forward.24} parent=1 // loop_pre_header
      _
    $region3: #{netG_forward.24} parent=1 // loop_header
      %s9 = sphi 0, %s13
      %p10 = scmp.ge.s32.totalorder %s9, 18
      %s17 = sphi 0, %s17
      %s19 = sphi 0, %s17
      %s20 = sphi 0, %s19
      %s34 = sphi 0, %s20
      %s40 = sphi 0, %s42
      %s43 = sphi 0, %s40
      %s44 = sphi 0, %s43
      %s60 = sphi 0, %s44
      %s64 = sphi 0, %s64
      %s66 = sphi 0, %s64
      %s67 = sphi 0, %s66
      %s81 = sphi 0, %s67
      %s87 = sphi 0, %s89
      %s90 = sphi 0, %s87
      %s91 = sphi 0, %s90
      %s107 = sphi 0, %s91
    $region4: #{netG_forward.24} parent=1 // loop_header_branch
      %12 = sbr.rel (%p10) target = $region8
    $region5: #{netG_forward.24} parent=1 // loop_body
      %s14 = ssub.s32 %s9, 1
      %s15 = ssub.s32 %s9, 2
      %s16 = sadd.s32 %s9, 1
      %s18 = sadd.s32 %s17, 1
      %p21 = scmp.eq.s32.totalorder %s9, 15
      %p22 = scmp.ne.s32.totalorder %s17, %s19
      %p23 = scmp.eq.s32.totalorder %s9, 0
      %p24 = por %p22, %p23
      %p25 = scmp.ne.s32.totalorder %s17, %s19
      %p26 = scmp.eq.s32.totalorder %s14, 15
      %p27 = por %p25, %p26
      %p28 = scmp.ne.s32.totalorder %s19, %s20
      %p29 = scmp.eq.s32.totalorder %s14, 0
      %p30 = por %p28, %p29
      %p31 = scmp.ne.s32.totalorder %s19, %s20
      %p32 = scmp.eq.s32.totalorder %s15, 15
      %p33 = por %p31, %p32
      %p35 = scmp.ne.s32.totalorder %s20, %s34
      %p36 = scmp.eq.s32.totalorder %s15, 0
      %p37 = por %p35, %p36
      %s38 = ssub.s32 %s9, %s16
      %p39 = scmp.eq.s32.totalorder %s38, 0
      %s41 = sadd.s32 %s40, 1
      %s42 = scalar_select %p39, %s40, %s41
      %p45 = pneg %p39
      %p46 = scmp.eq.s32.totalorder %s9, 15
      %p47 = por %p45, %p46
      %p48 = scmp.ne.s32.totalorder %s40, %s43
      %p49 = scmp.eq.s32.totalorder %s9, 0
      %p50 = por %p48, %p49
      %p51 = scmp.ne.s32.totalorder %s40, %s43
      %p52 = scmp.eq.s32.totalorder %s14, 15
      %p53 = por %p51, %p52
      %p54 = scmp.ne.s32.totalorder %s43, %s44
      %p55 = scmp.eq.s32.totalorder %s14, 0
      %p56 = por %p54, %p55
      %p57 = scmp.ne.s32.totalorder %s43, %s44
      %p58 = scmp.eq.s32.totalorder %s15, 15
      %p59 = por %p57, %p58
      %p61 = scmp.ne.s32.totalorder %s44, %s60
      %p62 = scmp.eq.s32.totalorder %s15, 0
      %p63 = por %p61, %p62
      %s65 = sadd.s32 %s64, 1
      %p68 = scmp.eq.s32.totalorder %s9, 15
      %p69 = scmp.ne.s32.totalorder %s64, %s66
      %p70 = scmp.eq.s32.totalorder %s9, 0
      %p71 = por %p69, %p70
      %p72 = scmp.ne.s32.totalorder %s64, %s66
      %p73 = scmp.eq.s32.totalorder %s14, 15
      %p74 = por %p72, %p73
      %p75 = scmp.ne.s32.totalorder %s66, %s67
      %p76 = scmp.eq.s32.totalorder %s14, 0
      %p77 = por %p75, %p76
      %p78 = scmp.ne.s32.totalorder %s66, %s67
      %p79 = scmp.eq.s32.totalorder %s15, 15
      %p80 = por %p78, %p79
      %p82 = scmp.ne.s32.totalorder %s67, %s81
      %p83 = scmp.eq.s32.totalorder %s15, 0
      %p84 = por %p82, %p83
      %s85 = ssub.s32 %s9, %s16
      %p86 = scmp.eq.s32.totalorder %s85, 0
      %s88 = sadd.s32 %s87, 1
      %s89 = scalar_select %p86, %s87, %s88
      %p92 = pneg %p86
      %p93 = scmp.eq.s32.totalorder %s9, 15
      %p94 = por %p92, %p93
      %p95 = scmp.ne.s32.totalorder %s87, %s90
      %p96 = scmp.eq.s32.totalorder %s9, 0
      %p97 = por %p95, %p96
      %p98 = scmp.ne.s32.totalorder %s87, %s90
      %p99 = scmp.eq.s32.totalorder %s14, 15
      %p100 = por %p98, %p99
      %p101 = scmp.ne.s32.totalorder %s90, %s91
      %p102 = scmp.eq.s32.totalorder %s14, 0
      %p103 = por %p101, %p102
      %p104 = scmp.ne.s32.totalorder %s90, %s91
      %p105 = scmp.eq.s32.totalorder %s15, 15
      %p106 = por %p104, %p105
      %p108 = scmp.ne.s32.totalorder %s91, %s107
      %p109 = scmp.eq.s32.totalorder %s15, 0
      %p110 = por %p108, %p109
      %p111 = scmp.le.s32.totalorder 1, %s9
      %p112 = scmp.lt.s32.totalorder %s9, 17
      %p113 = pnand %p111, %p112
      %p114 = pneg %p113
      // Predicated region
      $region9: #{netG_forward.24} parent=5 // pred_check
        _
      $region10: #{netG_forward.24} parent=5 // pred_check_branch
        %116 = sbr.rel (%p113) target = $region12
      $region11: #{netG_forward.24} parent=5 // pred_region
        %s117 = ssub.s32 %s9, 1
        // Predicated region
        $region13: #{netG_forward.24} parent=11 // pred_check
          %p118 = pneg %p30
        $region14: #{netG_forward.24} parent=11 // pred_check_branch
          %120 = sbr.rel (%p118) target = $region16
        $region15: #{netG_forward.24} parent=11 // pred_region
          _
        $region16: #{netG_forward.24} parent=11 // pred_fallthru
          _
        // Predicated region
        $region17: #{netG_forward.24} parent=11 // pred_check
          %p121 = pneg %p77
        $region18: #{netG_forward.24} parent=11 // pred_check_branch
          %123 = sbr.rel (%p121) target = $region20
        $region19: #{netG_forward.24} parent=11 // pred_region
          _
        $region20: #{netG_forward.24} parent=11 // pred_fallthru
          _
      $region12: #{netG_forward.24} parent=5 // pred_fallthru
        _
      %p124 = scmp.lt.s32.totalorder %s9, 16
      // Predicated region
      $region21: #{netG_forward.24} parent=5 // pred_check
        %p125 = pneg %p124
      $region22: #{netG_forward.24} parent=5 // pred_check_branch
        %127 = sbr.rel (%p125) target = $region24
      $region23: #{netG_forward.24} parent=5 // pred_region
        // Predicated region
        $region25: #{netG_forward.24} parent=23 // pred_check
          %p128 = pneg %p50
        $region26: #{netG_forward.24} parent=23 // pred_check_branch
          %130 = sbr.rel (%p128) target = $region28
        $region27: #{netG_forward.24} parent=23 // pred_region
          %s131 = sand.u32 %s40, 1
          %s132 = sand.u32 %s40, 1
          %s133 = smul.addr %s132, 512
          %s134 = scalar_lea.vmem [#allocation2], %s133
          %s135 = smul.u32 16, %s9
          %s136 = smul.addr %s135, 4
          %s137 = scalar_lea.vmem %s1, %s136
          // Predicated region
          $region29: #{netG_forward.24} parent=27 // pred_check
            _
          $region30: #{netG_forward.24} parent=27 // pred_check_branch
            %139 = sbr.rel (0) target = $region32
          $region31: #{netG_forward.24} parent=27 // pred_region
            // Predicated region
            $region33: #{netG_forward.24} parent=31 // pred_check
              _
            $region34: #{netG_forward.24} parent=31 // pred_check_branch
              %141 = sbr.rel (0) target = $region36
            $region35: #{netG_forward.24} parent=31 // pred_region
              loop: start=0, step=1, limit=1
              $region37: #{netG_forward.24} parent=35 // loop_pre_header
                _
              $region38: #{netG_forward.24} parent=35 // loop_header
                %s143 = sphi 0, %s147
                %p144 = scmp.ge.s32.totalorder %s143, 1
                %s148 = sphi %s137, %s137
                %s149 = sphi %s134, %s134
              $region39: #{netG_forward.24} parent=35 // loop_header_branch
                %146 = sbr.rel (%p144) target = $region43
              $region40: #{netG_forward.24} parent=35 // loop_body
                %v150 = vld [vmem:[%s148] sm:$0xff]
                %151 = vst [vmem:[%s149] sm:$0xff] %v150
                %v152 = vld [vmem:[%s148 + $0x8] sm:$0xff]
                %153 = vst [vmem:[%s149 + $0x8] sm:$0xff] %v152
                %v154 = vld [vmem:[%s148 + $0x10] sm:$0xff]
                %155 = vst [vmem:[%s149 + $0x10] sm:$0xff] %v154
                %v156 = vld [vmem:[%s148 + $0x18] sm:$0xff]
                %157 = vst [vmem:[%s149 + $0x18] sm:$0xff] %v156
                %v158 = vld [vmem:[%s148 + $0x20] sm:$0xff]
                %159 = vst [vmem:[%s149 + $0x20] sm:$0xff] %v158
                %v160 = vld [vmem:[%s148 + $0x28] sm:$0xff]
                %161 = vst [vmem:[%s149 + $0x28] sm:$0xff] %v160
                %v162 = vld [vmem:[%s148 + $0x30] sm:$0xff]
                %163 = vst [vmem:[%s149 + $0x30] sm:$0xff] %v162
                %v164 = vld [vmem:[%s148 + $0x38] sm:$0xff]
                %165 = vst [vmem:[%s149 + $0x38] sm:$0xff] %v164
                %v166 = vld [vmem:[%s148 + $0x400] sm:$0xff]
                %167 = vst [vmem:[%s149 + $0x40] sm:$0xff] %v166
                %v168 = vld [vmem:[%s148 + $0x408] sm:$0xff]
                %169 = vst [vmem:[%s149 + $0x48] sm:$0xff] %v168
                %v170 = vld [vmem:[%s148 + $0x410] sm:$0xff]
                %171 = vst [vmem:[%s149 + $0x50] sm:$0xff] %v170
                %v172 = vld [vmem:[%s148 + $0x418] sm:$0xff]
                %173 = vst [vmem:[%s149 + $0x58] sm:$0xff] %v172
                %v174 = vld [vmem:[%s148 + $0x420] sm:$0xff]
                %175 = vst [vmem:[%s149 + $0x60] sm:$0xff] %v174
                %v176 = vld [vmem:[%s148 + $0x428] sm:$0xff]
                %177 = vst [vmem:[%s149 + $0x68] sm:$0xff] %v176
                %v178 = vld [vmem:[%s148 + $0x430] sm:$0xff]
                %179 = vst [vmem:[%s149 + $0x70] sm:$0xff] %v178
                %v180 = vld [vmem:[%s148 + $0x438] sm:$0xff]
                %181 = vst [vmem:[%s149 + $0x78] sm:$0xff] %v180
                %v182 = vld [vmem:[%s148 + $0x800] sm:$0xff]
                %183 = vst [vmem:[%s149 + $0x80] sm:$0xff] %v182
                %v184 = vld [vmem:[%s148 + $0x808] sm:$0xff]
                %185 = vst [vmem:[%s149 + $0x88] sm:$0xff] %v184
                %v186 = vld [vmem:[%s148 + $0x810] sm:$0xff]
                %187 = vst [vmem:[%s149 + $0x90] sm:$0xff] %v186
                %v188 = vld [vmem:[%s148 + $0x818] sm:$0xff]
                %189 = vst [vmem:[%s149 + $0x98] sm:$0xff] %v188
                %v190 = vld [vmem:[%s148 + $0x820] sm:$0xff]
                %191 = vst [vmem:[%s149 + $0xa0] sm:$0xff] %v190
                %v192 = vld [vmem:[%s148 + $0x828] sm:$0xff]
                %193 = vst [vmem:[%s149 + $0xa8] sm:$0xff] %v192
                %v194 = vld [vmem:[%s148 + $0x830] sm:$0xff]
                %195 = vst [vmem:[%s149 + $0xb0] sm:$0xff] %v194
                %v196 = vld [vmem:[%s148 + $0x838] sm:$0xff]
                %197 = vst [vmem:[%s149 + $0xb8] sm:$0xff] %v196
                %v198 = vld [vmem:[%s148 + $0xc00] sm:$0xff]
                %199 = vst [vmem:[%s149 + $0xc0] sm:$0xff] %v198
                %v200 = vld [vmem:[%s148 + $0xc08] sm:$0xff]
                %201 = vst [vmem:[%s149 + $0xc8] sm:$0xff] %v200
                %v202 = vld [vmem:[%s148 + $0xc10] sm:$0xff]
                %203 = vst [vmem:[%s149 + $0xd0] sm:$0xff] %v202
                %v204 = vld [vmem:[%s148 + $0xc18] sm:$0xff]
                %205 = vst [vmem:[%s149 + $0xd8] sm:$0xff] %v204
                %v206 = vld [vmem:[%s148 + $0xc20] sm:$0xff]
                %207 = vst [vmem:[%s149 + $0xe0] sm:$0xff] %v206
                %v208 = vld [vmem:[%s148 + $0xc28] sm:$0xff]
                %209 = vst [vmem:[%s149 + $0xe8] sm:$0xff] %v208
                %v210 = vld [vmem:[%s148 + $0xc30] sm:$0xff]
                %211 = vst [vmem:[%s149 + $0xf0] sm:$0xff] %v210
                %v212 = vld [vmem:[%s148 + $0xc38] sm:$0xff]
                %213 = vst [vmem:[%s149 + $0xf8] sm:$0xff] %v212
                %v214 = vld [vmem:[%s148 + $0x1000] sm:$0xff]
                %215 = vst [vmem:[%s149 + $0x100] sm:$0xff] %v214
                %v216 = vld [vmem:[%s148 + $0x1008] sm:$0xff]
                %217 = vst [vmem:[%s149 + $0x108] sm:$0xff] %v216
                %v218 = vld [vmem:[%s148 + $0x1010] sm:$0xff]
                %219 = vst [vmem:[%s149 + $0x110] sm:$0xff] %v218
                %v220 = vld [vmem:[%s148 + $0x1018] sm:$0xff]
                %221 = vst [vmem:[%s149 + $0x118] sm:$0xff] %v220
                %v222 = vld [vmem:[%s148 + $0x1020] sm:$0xff]
                %223 = vst [vmem:[%s149 + $0x120] sm:$0xff] %v222
                %v224 = vld [vmem:[%s148 + $0x1028] sm:$0xff]
                %225 = vst [vmem:[%s149 + $0x128] sm:$0xff] %v224
                %v226 = vld [vmem:[%s148 + $0x1030] sm:$0xff]
                %227 = vst [vmem:[%s149 + $0x130] sm:$0xff] %v226
                %v228 = vld [vmem:[%s148 + $0x1038] sm:$0xff]
                %229 = vst [vmem:[%s149 + $0x138] sm:$0xff] %v228
                %v230 = vld [vmem:[%s148 + $0x1400] sm:$0xff]
                %231 = vst [vmem:[%s149 + $0x140] sm:$0xff] %v230
                %v232 = vld [vmem:[%s148 + $0x1408] sm:$0xff]
                %233 = vst [vmem:[%s149 + $0x148] sm:$0xff] %v232
                %v234 = vld [vmem:[%s148 + $0x1410] sm:$0xff]
                %235 = vst [vmem:[%s149 + $0x150] sm:$0xff] %v234
                %v236 = vld [vmem:[%s148 + $0x1418] sm:$0xff]
                %237 = vst [vmem:[%s149 + $0x158] sm:$0xff] %v236
                %v238 = vld [vmem:[%s148 + $0x1420] sm:$0xff]
                %239 = vst [vmem:[%s149 + $0x160] sm:$0xff] %v238
                %v240 = vld [vmem:[%s148 + $0x1428] sm:$0xff]
                %241 = vst [vmem:[%s149 + $0x168] sm:$0xff] %v240
                %v242 = vld [vmem:[%s148 + $0x1430] sm:$0xff]
                %243 = vst [vmem:[%s149 + $0x170] sm:$0xff] %v242
                %v244 = vld [vmem:[%s148 + $0x1438] sm:$0xff]
                %245 = vst [vmem:[%s149 + $0x178] sm:$0xff] %v244
                %v246 = vld [vmem:[%s148 + $0x1800] sm:$0xff]
                %247 = vst [vmem:[%s149 + $0x180] sm:$0xff] %v246
                %v248 = vld [vmem:[%s148 + $0x1808] sm:$0xff]
                %249 = vst [vmem:[%s149 + $0x188] sm:$0xff] %v248
                %v250 = vld [vmem:[%s148 + $0x1810] sm:$0xff]
                %251 = vst [vmem:[%s149 + $0x190] sm:$0xff] %v250
                %v252 = vld [vmem:[%s148 + $0x1818] sm:$0xff]
                %253 = vst [vmem:[%s149 + $0x198] sm:$0xff] %v252
                %v254 = vld [vmem:[%s148 + $0x1820] sm:$0xff]
                %255 = vst [vmem:[%s149 + $0x1a0] sm:$0xff] %v254
                %v256 = vld [vmem:[%s148 + $0x1828] sm:$0xff]
                %257 = vst [vmem:[%s149 + $0x1a8] sm:$0xff] %v256
                %v258 = vld [vmem:[%s148 + $0x1830] sm:$0xff]
                %259 = vst [vmem:[%s149 + $0x1b0] sm:$0xff] %v258
                %v260 = vld [vmem:[%s148 + $0x1838] sm:$0xff]
                %261 = vst [vmem:[%s149 + $0x1b8] sm:$0xff] %v260
                %v262 = vld [vmem:[%s148 + $0x1c00] sm:$0xff]
                %263 = vst [vmem:[%s149 + $0x1c0] sm:$0xff] %v262
                %v264 = vld [vmem:[%s148 + $0x1c08] sm:$0xff]
                %265 = vst [vmem:[%s149 + $0x1c8] sm:$0xff] %v264
                %v266 = vld [vmem:[%s148 + $0x1c10] sm:$0xff]
                %267 = vst [vmem:[%s149 + $0x1d0] sm:$0xff] %v266
                %v268 = vld [vmem:[%s148 + $0x1c18] sm:$0xff]
                %269 = vst [vmem:[%s149 + $0x1d8] sm:$0xff] %v268
                %v270 = vld [vmem:[%s148 + $0x1c20] sm:$0xff]
                %271 = vst [vmem:[%s149 + $0x1e0] sm:$0xff] %v270
                %v272 = vld [vmem:[%s148 + $0x1c28] sm:$0xff]
                %273 = vst [vmem:[%s149 + $0x1e8] sm:$0xff] %v272
                %v274 = vld [vmem:[%s148 + $0x1c30] sm:$0xff]
                %275 = vst [vmem:[%s149 + $0x1f0] sm:$0xff] %v274
                %v276 = vld [vmem:[%s148 + $0x1c38] sm:$0xff]
                %277 = vst [vmem:[%s149 + $0x1f8] sm:$0xff] %v276
              $region41: #{netG_forward.24} parent=35 // loop_footer
                %s147 = sadd.s32 1, %s143
              $region42: #{netG_forward.24} parent=35 // loop_footer_branch
                %142 = sbr.rel target = $region38
              $region43: #{netG_forward.24} parent=35 // loop_exit
                _
            $region36: #{netG_forward.24} parent=31 // pred_fallthru
              _
            // Predicated region
            $region44: #{netG_forward.24} parent=31 // pred_check
              _
            $region45: #{netG_forward.24} parent=31 // pred_check_branch
              %279 = sbr.rel target = $region47
            $region46: #{netG_forward.24} parent=31 // pred_region
              _
            $region47: #{netG_forward.24} parent=31 // pred_fallthru
              _
          $region32: #{netG_forward.24} parent=27 // pred_fallthru
            _
          %280 = vnop
        $region28: #{netG_forward.24} parent=23 // pred_fallthru
          _
      $region24: #{netG_forward.24} parent=5 // pred_fallthru
        _
      %p281 = scmp.le.s32.totalorder 1, %s9
      %p282 = scmp.lt.s32.totalorder %s9, 17
      %p283 = pnand %p281, %p282
      %p284 = pneg %p283
      // Predicated region
      $region48: #{netG_forward.24} parent=5 // pred_check
        _
      $region49: #{netG_forward.24} parent=5 // pred_check_branch
        %286 = sbr.rel (%p283) target = $region51
      $region50: #{netG_forward.24} parent=5 // pred_region
        %s287 = ssub.s32 %s9, 1
        %s288 = sand.u32 %s43, 1
        %s289 = sand.u32 %s43, 1
        %s290 = smul.addr %s289, 512
        %s291 = scalar_lea.vmem [#allocation2], %s290
        // Predicated region
        $region52: #{netG_forward.24} parent=50 // pred_check
          %p292 = pneg %p56
        $region53: #{netG_forward.24} parent=50 // pred_check_branch
          %294 = sbr.rel (%p292) target = $region55
        $region54: #{netG_forward.24} parent=50 // pred_region
          _
        $region55: #{netG_forward.24} parent=50 // pred_fallthru
          _
        %p295 = pneg %p30
        %p296 = pneg %p27
        %s297 = sand.u32 %s43, 1
        %s298 = sand.u32 %s43, 1
        %s299 = smul.addr %s298, 512
        %s300 = scalar_lea.vmem [#allocation2], %s299
        %p301 = pneg %p56
        %p302 = pneg %p53
        %p303 = pneg %p77
        %p304 = pneg %p74
        %p305 = pneg %p103
        %p306 = pneg %p100
        %s307 = smul.u32 16, %s14
        %p308 = scmp.lt.s32.totalorder %s307, 255
        %s309 = scalar_select %p308, %s307, 255
        %s310 = smul.addr %s309, 2
        %s311 = scalar_lea.vmem %s3, %s310
        %s312 = smul.u32 16, %s14
        %s313 = smul.u32 16, %s14
        %p314 = scmp.lt.s32.totalorder %s313, 255
        %s315 = scalar_select %p314, %s313, 255
        %s316 = smul.addr %s315, 2
        %s317 = scalar_lea.vmem %s3, %s316
        %s318 = smul.u32 16, %s14
        %v320 = vld [vmem:[%s0] sm:$0x3]
        %v321 = vld [vmem:[%s291] sm:$0xff]
        %v322 = vld [vmem:[%s291 + $0x8] sm:$0xff]
        %v323 = vld [vmem:[%s291 + $0x10] sm:$0xff]
        %v324 = vld [vmem:[%s291 + $0x18] sm:$0xff]
        %v325 = vld [vmem:[%s291 + $0x20] sm:$0xff]
        %v326 = vld [vmem:[%s291 + $0x28] sm:$0xff]
        %v327 = vld [vmem:[%s291 + $0x30] sm:$0xff]
        %v328 = vld [vmem:[%s291 + $0x38] sm:$0xff]
        %v329 = vld [vmem:[%s291 + $0x40] sm:$0xff]
        %v330 = vld [vmem:[%s291 + $0x48] sm:$0xff]
        %v331 = vld [vmem:[%s291 + $0x50] sm:$0xff]
        %v332 = vld [vmem:[%s291 + $0x58] sm:$0xff]
        %v333 = vld [vmem:[%s291 + $0x60] sm:$0xff]
        %v334 = vld [vmem:[%s291 + $0x68] sm:$0xff]
        %v335 = vld [vmem:[%s291 + $0x70] sm:$0xff]
        %v336 = vld [vmem:[%s291 + $0x78] sm:$0xff]
        %v337 = vld [vmem:[%s291 + $0x80] sm:$0xff]
        %v338 = vld [vmem:[%s291 + $0x88] sm:$0xff]
        %v339 = vld [vmem:[%s291 + $0x90] sm:$0xff]
        %v340 = vld [vmem:[%s291 + $0x98] sm:$0xff]
        %v341 = vld [vmem:[%s291 + $0xa0] sm:$0xff]
        %v342 = vld [vmem:[%s291 + $0xa8] sm:$0xff]
        %v343 = vld [vmem:[%s291 + $0xb0] sm:$0xff]
        %v344 = vld [vmem:[%s291 + $0xb8] sm:$0xff]
        %v345 = vld [vmem:[%s291 + $0xc0] sm:$0xff]
        %v346 = vld [vmem:[%s291 + $0xc8] sm:$0xff]
        %v347 = vld [vmem:[%s291 + $0xd0] sm:$0xff]
        %v348 = vld [vmem:[%s291 + $0xd8] sm:$0xff]
        %v349 = vld [vmem:[%s291 + $0xe0] sm:$0xff]
        %v350 = vld [vmem:[%s291 + $0xe8] sm:$0xff]
        %v351 = vld [vmem:[%s291 + $0xf0] sm:$0xff]
        %v352 = vld [vmem:[%s291 + $0xf8] sm:$0xff]
        %v353 = vld [vmem:[%s291 + $0x100] sm:$0xff]
        %v354 = vld [vmem:[%s291 + $0x108] sm:$0xff]
        %v355 = vld [vmem:[%s291 + $0x110] sm:$0xff]
        %v356 = vld [vmem:[%s291 + $0x118] sm:$0xff]
        %v357 = vld [vmem:[%s291 + $0x120] sm:$0xff]
        %v358 = vld [vmem:[%s291 + $0x128] sm:$0xff]
        %v359 = vld [vmem:[%s291 + $0x130] sm:$0xff]
        %v360 = vld [vmem:[%s291 + $0x138] sm:$0xff]
        %v361 = vld [vmem:[%s291 + $0x140] sm:$0xff]
        %v362 = vld [vmem:[%s291 + $0x148] sm:$0xff]
        %v363 = vld [vmem:[%s291 + $0x150] sm:$0xff]
        %v364 = vld [vmem:[%s291 + $0x158] sm:$0xff]
        %v365 = vld [vmem:[%s291 + $0x160] sm:$0xff]
        %v366 = vld [vmem:[%s291 + $0x168] sm:$0xff]
        %v367 = vld [vmem:[%s291 + $0x170] sm:$0xff]
        %v368 = vld [vmem:[%s291 + $0x178] sm:$0xff]
        %v369 = vld [vmem:[%s291 + $0x180] sm:$0xff]
        %v370 = vld [vmem:[%s291 + $0x188] sm:$0xff]
        %v371 = vld [vmem:[%s291 + $0x190] sm:$0xff]
        %v372 = vld [vmem:[%s291 + $0x198] sm:$0xff]
        %v373 = vld [vmem:[%s291 + $0x1a0] sm:$0xff]
        %v374 = vld [vmem:[%s291 + $0x1a8] sm:$0xff]
        %v375 = vld [vmem:[%s291 + $0x1b0] sm:$0xff]
        %v376 = vld [vmem:[%s291 + $0x1b8] sm:$0xff]
        %v377 = vld [vmem:[%s291 + $0x1c0] sm:$0xff]
        %v378 = vld [vmem:[%s291 + $0x1c8] sm:$0xff]
        %v379 = vld [vmem:[%s291 + $0x1d0] sm:$0xff]
        %v380 = vld [vmem:[%s291 + $0x1d8] sm:$0xff]
        %v381 = vld [vmem:[%s291 + $0x1e0] sm:$0xff]
        %v382 = vld [vmem:[%s291 + $0x1e8] sm:$0xff]
        %v383 = vld [vmem:[%s291 + $0x1f0] sm:$0xff]
        %v384 = vld [vmem:[%s291 + $0x1f8] sm:$0xff]
        %v385 = vld [vmem:[%s2] sm:$0xf]
        %387 = vset.pattern.permute.xlu0 0
        %388 = vperm.xlu0 %387, %v385
        %v389 = vpop.permute.xlu0 %388
        %v455 = vunpack.c.l.b16 %v321
        %v456 = vunpack.c.h.b16 %v321
        %v457 = vunpack.c.l.b16 %v322
        %v458 = vunpack.c.h.b16 %v322
        %v459 = vunpack.c.l.b16 %v323
        %v460 = vunpack.c.h.b16 %v323
        %v461 = vunpack.c.l.b16 %v324
        %v462 = vunpack.c.h.b16 %v324
        %v463 = vunpack.c.l.b16 %v325
        %v464 = vunpack.c.h.b16 %v325
        %v465 = vunpack.c.l.b16 %v326
        %v466 = vunpack.c.h.b16 %v326
        %v467 = vunpack.c.l.b16 %v327
        %v468 = vunpack.c.h.b16 %v327
        %v469 = vunpack.c.l.b16 %v328
        %v470 = vunpack.c.h.b16 %v328
        %v471 = vunpack.c.l.b16 %v329
        %v472 = vunpack.c.h.b16 %v329
        %v473 = vunpack.c.l.b16 %v330
        %v474 = vunpack.c.h.b16 %v330
        %v475 = vunpack.c.l.b16 %v331
        %v476 = vunpack.c.h.b16 %v331
        %v477 = vunpack.c.l.b16 %v332
        %v478 = vunpack.c.h.b16 %v332
        %v479 = vunpack.c.l.b16 %v333
        %v480 = vunpack.c.h.b16 %v333
        %v481 = vunpack.c.l.b16 %v334
        %v482 = vunpack.c.h.b16 %v334
        %v483 = vunpack.c.l.b16 %v335
        %v484 = vunpack.c.h.b16 %v335
        %v485 = vunpack.c.l.b16 %v336
        %v486 = vunpack.c.h.b16 %v336
        %v487 = vunpack.c.l.b16 %v337
        %v488 = vunpack.c.h.b16 %v337
        %v489 = vunpack.c.l.b16 %v338
        %v490 = vunpack.c.h.b16 %v338
        %v491 = vunpack.c.l.b16 %v339
        %v492 = vunpack.c.h.b16 %v339
        %v493 = vunpack.c.l.b16 %v340
        %v494 = vunpack.c.h.b16 %v340
        %v495 = vunpack.c.l.b16 %v341
        %v496 = vunpack.c.h.b16 %v341
        %v497 = vunpack.c.l.b16 %v342
        %v498 = vunpack.c.h.b16 %v342
        %v499 = vunpack.c.l.b16 %v343
        %v500 = vunpack.c.h.b16 %v343
        %v501 = vunpack.c.l.b16 %v344
        %v502 = vunpack.c.h.b16 %v344
        %v503 = vunpack.c.l.b16 %v345
        %v504 = vunpack.c.h.b16 %v345
        %v505 = vunpack.c.l.b16 %v346
        %v506 = vunpack.c.h.b16 %v346
        %v507 = vunpack.c.l.b16 %v347
        %v508 = vunpack.c.h.b16 %v347
        %v509 = vunpack.c.l.b16 %v348
        %v510 = vunpack.c.h.b16 %v348
        %v511 = vunpack.c.l.b16 %v349
        %v512 = vunpack.c.h.b16 %v349
        %v513 = vunpack.c.l.b16 %v350
        %v514 = vunpack.c.h.b16 %v350
        %v515 = vunpack.c.l.b16 %v351
        %v516 = vunpack.c.h.b16 %v351
        %v517 = vunpack.c.l.b16 %v352
        %v518 = vunpack.c.h.b16 %v352
        %v519 = vunpack.c.l.b16 %v353
        %v520 = vunpack.c.h.b16 %v353
        %v521 = vunpack.c.l.b16 %v354
        %v522 = vunpack.c.h.b16 %v354
        %v523 = vunpack.c.l.b16 %v355
        %v524 = vunpack.c.h.b16 %v355
        %v525 = vunpack.c.l.b16 %v356
        %v526 = vunpack.c.h.b16 %v356
        %v527 = vunpack.c.l.b16 %v357
        %v528 = vunpack.c.h.b16 %v357
        %v529 = vunpack.c.l.b16 %v358
        %v530 = vunpack.c.h.b16 %v358
        %v531 = vunpack.c.l.b16 %v359
        %v532 = vunpack.c.h.b16 %v359
        %v533 = vunpack.c.l.b16 %v360
        %v534 = vunpack.c.h.b16 %v360
        %v535 = vunpack.c.l.b16 %v361
        %v536 = vunpack.c.h.b16 %v361
        %v537 = vunpack.c.l.b16 %v362
        %v538 = vunpack.c.h.b16 %v362
        %v539 = vunpack.c.l.b16 %v363
        %v540 = vunpack.c.h.b16 %v363
        %v541 = vunpack.c.l.b16 %v364
        %v542 = vunpack.c.h.b16 %v364
        %v543 = vunpack.c.l.b16 %v365
        %v544 = vunpack.c.h.b16 %v365
        %v545 = vunpack.c.l.b16 %v366
        %v546 = vunpack.c.h.b16 %v366
        %v547 = vunpack.c.l.b16 %v367
        %v548 = vunpack.c.h.b16 %v367
        %v549 = vunpack.c.l.b16 %v368
        %v550 = vunpack.c.h.b16 %v368
        %v551 = vunpack.c.l.b16 %v369
        %v552 = vunpack.c.h.b16 %v369
        %v553 = vunpack.c.l.b16 %v370
        %v554 = vunpack.c.h.b16 %v370
        %v555 = vunpack.c.l.b16 %v371
        %v556 = vunpack.c.h.b16 %v371
        %v557 = vunpack.c.l.b16 %v372
        %v558 = vunpack.c.h.b16 %v372
        %v559 = vunpack.c.l.b16 %v373
        %v560 = vunpack.c.h.b16 %v373
        %v561 = vunpack.c.l.b16 %v374
        %v562 = vunpack.c.h.b16 %v374
        %v563 = vunpack.c.l.b16 %v375
        %v564 = vunpack.c.h.b16 %v375
        %v565 = vunpack.c.l.b16 %v376
        %v566 = vunpack.c.h.b16 %v376
        %v567 = vunpack.c.l.b16 %v377
        %v568 = vunpack.c.h.b16 %v377
        %v569 = vunpack.c.l.b16 %v378
        %v570 = vunpack.c.h.b16 %v378
        %v571 = vunpack.c.l.b16 %v379
        %v572 = vunpack.c.h.b16 %v379
        %v573 = vunpack.c.l.b16 %v380
        %v574 = vunpack.c.h.b16 %v380
        %v575 = vunpack.c.l.b16 %v381
        %v576 = vunpack.c.h.b16 %v381
        %v577 = vunpack.c.l.b16 %v382
        %v578 = vunpack.c.h.b16 %v382
        %v579 = vunpack.c.l.b16 %v383
        %v580 = vunpack.c.h.b16 %v383
        %v581 = vunpack.c.l.b16 %v384
        %v582 = vunpack.c.h.b16 %v384
        %v583 = vpack.c.b16 %v471, %v455
        %v584 = vpack.c.b16 %v472, %v456
        %v585 = vpack.c.b16 %v473, %v457
        %v586 = vpack.c.b16 %v474, %v458
        %v587 = vpack.c.b16 %v475, %v459
        %v588 = vpack.c.b16 %v476, %v460
        %v589 = vpack.c.b16 %v477, %v461
        %v590 = vpack.c.b16 %v478, %v462
        %v591 = vpack.c.b16 %v479, %v463
        %v592 = vpack.c.b16 %v480, %v464
        %v593 = vpack.c.b16 %v481, %v465
        %v594 = vpack.c.b16 %v482, %v466
        %v595 = vpack.c.b16 %v483, %v467
        %v596 = vpack.c.b16 %v484, %v468
        %v597 = vpack.c.b16 %v485, %v469
        %v598 = vpack.c.b16 %v486, %v470
        %v599 = vpack.c.b16 %v503, %v487
        %v600 = vpack.c.b16 %v504, %v488
        %v601 = vpack.c.b16 %v505, %v489
        %v602 = vpack.c.b16 %v506, %v490
        %v603 = vpack.c.b16 %v507, %v491
        %v604 = vpack.c.b16 %v508, %v492
        %v605 = vpack.c.b16 %v509, %v493
        %v606 = vpack.c.b16 %v510, %v494
        %v607 = vpack.c.b16 %v511, %v495
        %v608 = vpack.c.b16 %v512, %v496
        %v609 = vpack.c.b16 %v513, %v497
        %v610 = vpack.c.b16 %v514, %v498
        %v611 = vpack.c.b16 %v515, %v499
        %v612 = vpack.c.b16 %v516, %v500
        %v613 = vpack.c.b16 %v517, %v501
        %v614 = vpack.c.b16 %v518, %v502
        %v615 = vpack.c.b16 %v535, %v519
        %v616 = vpack.c.b16 %v536, %v520
        %v617 = vpack.c.b16 %v537, %v521
        %v618 = vpack.c.b16 %v538, %v522
        %v619 = vpack.c.b16 %v539, %v523
        %v620 = vpack.c.b16 %v540, %v524
        %v621 = vpack.c.b16 %v541, %v525
        %v622 = vpack.c.b16 %v542, %v526
        %v623 = vpack.c.b16 %v543, %v527
        %v624 = vpack.c.b16 %v544, %v528
        %v625 = vpack.c.b16 %v545, %v529
        %v626 = vpack.c.b16 %v546, %v530
        %v627 = vpack.c.b16 %v547, %v531
        %v628 = vpack.c.b16 %v548, %v532
        %v629 = vpack.c.b16 %v549, %v533
        %v630 = vpack.c.b16 %v550, %v534
        %v631 = vpack.c.b16 %v567, %v551
        %v632 = vpack.c.b16 %v568, %v552
        %v633 = vpack.c.b16 %v569, %v553
        %v634 = vpack.c.b16 %v570, %v554
        %v635 = vpack.c.b16 %v571, %v555
        %v636 = vpack.c.b16 %v572, %v556
        %v637 = vpack.c.b16 %v573, %v557
        %v638 = vpack.c.b16 %v574, %v558
        %v639 = vpack.c.b16 %v575, %v559
        %v640 = vpack.c.b16 %v576, %v560
        %v641 = vpack.c.b16 %v577, %v561
        %v642 = vpack.c.b16 %v578, %v562
        %v643 = vpack.c.b16 %v579, %v563
        %v644 = vpack.c.b16 %v580, %v564
        %v645 = vpack.c.b16 %v581, %v565
        %v646 = vpack.c.b16 %v582, %v566
        %vm711 = vcmask 523264
        %v713 = vsel %vm711, %v320, 0
        %715 = vmatprep.subr.bf16.mxu0 %v584
        %716 = vmatpush1.bf16.msra.mxu0 %v583
        %717 = vmatprep.subr.bf16.mxu0 %v600
        %718 = vmatpush1.bf16.msra.mxu0 %v599
        %719 = vmatprep.subr.bf16.mxu0 %v616
        %720 = vmatpush1.bf16.msra.mxu0 %v615
        %721 = vmatprep.subr.bf16.mxu0 %v632
        %722 = vmatpush1.bf16.msra.mxu0 %v631
        %723 = vmatprep.subr.bf16.mxu0 0
        %724 = vmatpush1.bf16.msra.mxu0 0
        %725 = vmatprep.subr.bf16.mxu0 0
        %726 = vmatpush1.bf16.msra.mxu0 0
        %727 = vmatprep.subr.bf16.mxu0 0
        %728 = vmatpush1.bf16.msra.mxu0 0
        %729 = vmatprep.subr.bf16.mxu0 0
        %730 = vmatpush1.bf16.msra.mxu0 0
        %731 = vmatprep.subr.bf16.mxu0 0
        %732 = vmatpush1.bf16.msra.mxu0 0
        %733 = vmatprep.subr.bf16.mxu0 0
        %734 = vmatpush1.bf16.msra.mxu0 0
        %735 = vmatprep.subr.bf16.mxu0 0
        %736 = vmatpush1.bf16.msra.mxu0 0
        %737 = vmatprep.subr.bf16.mxu0 0
        %738 = vmatpush1.bf16.msra.mxu0 0
        %739 = vmatprep.subr.bf16.mxu0 0
        %740 = vmatpush1.bf16.msra.mxu0 0
        %741 = vmatprep.subr.bf16.mxu0 0
        %742 = vmatpush1.bf16.msra.mxu0 0
        %743 = vmatprep.subr.bf16.mxu0 0
        %744 = vmatpush1.bf16.msra.mxu0 0
        %745 = vmatprep.subr.bf16.mxu0 0
        %746 = vmatpush1.bf16.msra.mxu0 0
        %747 = vmatprep.mubr.bf16.mxu0 0
        %748 = vmatmul.mubr.bf16.gmra.mrb[0].mxu0 %v713
        %v749 = vpop.f32.mrb[0].mxu0
        %v750 = vadd.f32 %v389, %v749
        %v751 = vpop.f32.mrb[0].mxu0
        %v752 = vadd.f32 %v389, %v751
        %v753 = vpop.f32.mrb[0].mxu0
        %v754 = vpop.f32.mrb[0].mxu0
        %755 = vdwg.mxu0
        %756 = vmatprep.subr.bf16.mxu0 %v586
        %757 = vmatpush1.bf16.msra.mxu0 %v585
        %758 = vmatprep.subr.bf16.mxu0 %v602
        %759 = vmatpush1.bf16.msra.mxu0 %v601
        %760 = vmatprep.subr.bf16.mxu0 %v618
        %761 = vmatpush1.bf16.msra.mxu0 %v617
        %762 = vmatprep.subr.bf16.mxu0 %v634
        %763 = vmatpush1.bf16.msra.mxu0 %v633
        %764 = vmatprep.subr.bf16.mxu0 0
        %765 = vmatpush1.bf16.msra.mxu0 0
        %766 = vmatprep.subr.bf16.mxu0 0
        %767 = vmatpush1.bf16.msra.mxu0 0
        %768 = vmatprep.subr.bf16.mxu0 0
        %769 = vmatpush1.bf16.msra.mxu0 0
        %770 = vmatprep.subr.bf16.mxu0 0
        %771 = vmatpush1.bf16.msra.mxu0 0
        %772 = vmatprep.subr.bf16.mxu0 0
        %773 = vmatpush1.bf16.msra.mxu0 0
        %774 = vmatprep.subr.bf16.mxu0 0
        %775 = vmatpush1.bf16.msra.mxu0 0
        %776 = vmatprep.subr.bf16.mxu0 0
        %777 = vmatpush1.bf16.msra.mxu0 0
        %778 = vmatprep.subr.bf16.mxu0 0
        %779 = vmatpush1.bf16.msra.mxu0 0
        %780 = vmatprep.subr.bf16.mxu0 0
        %781 = vmatpush1.bf16.msra.mxu0 0
        %782 = vmatprep.subr.bf16.mxu0 0
        %783 = vmatpush1.bf16.msra.mxu0 0
        %784 = vmatprep.subr.bf16.mxu0 0
        %785 = vmatpush1.bf16.msra.mxu0 0
        %786 = vmatprep.subr.bf16.mxu0 0
        %787 = vmatpush1.bf16.msra.mxu0 0
        %788 = vmatprep.mubr.bf16.mxu0 0
        %789 = vmatmul.mubr.bf16.gmra.mrb[0].mxu0 %v713
        %v790 = vpop.f32.mrb[0].mxu0
        %v791 = vadd.f32 %v389, %v790
        %v792 = vpop.f32.mrb[0].mxu0
        %v793 = vadd.f32 %v389, %v792
        %v794 = vpop.f32.mrb[0].mxu0
        %v795 = vpop.f32.mrb[0].mxu0
        %796 = vdwg.mxu0
        %797 = vmatprep.subr.bf16.mxu0 %v588
        %798 = vmatpush1.bf16.msra.mxu0 %v587
        %799 = vmatprep.subr.bf16.mxu0 %v604
        %800 = vmatpush1.bf16.msra.mxu0 %v603
        %801 = vmatprep.subr.bf16.mxu0 %v620
        %802 = vmatpush1.bf16.msra.mxu0 %v619
        %803 = vmatprep.subr.bf16.mxu0 %v636
        %804 = vmatpush1.bf16.msra.mxu0 %v635
        %805 = vmatprep.subr.bf16.mxu0 0
        %806 = vmatpush1.bf16.msra.mxu0 0
        %807 = vmatprep.subr.bf16.mxu0 0
        %808 = vmatpush1.bf16.msra.mxu0 0
        %809 = vmatprep.subr.bf16.mxu0 0
        %810 = vmatpush1.bf16.msra.mxu0 0
        %811 = vmatprep.subr.bf16.mxu0 0
        %812 = vmatpush1.bf16.msra.mxu0 0
        %813 = vmatprep.subr.bf16.mxu0 0
        %814 = vmatpush1.bf16.msra.mxu0 0
        %815 = vmatprep.subr.bf16.mxu0 0
        %816 = vmatpush1.bf16.msra.mxu0 0
        %817 = vmatprep.subr.bf16.mxu0 0
        %818 = vmatpush1.bf16.msra.mxu0 0
        %819 = vmatprep.subr.bf16.mxu0 0
        %820 = vmatpush1.bf16.msra.mxu0 0
        %821 = vmatprep.subr.bf16.mxu0 0
        %822 = vmatpush1.bf16.msra.mxu0 0
        %823 = vmatprep.subr.bf16.mxu0 0
        %824 = vmatpush1.bf16.msra.mxu0 0
        %825 = vmatprep.subr.bf16.mxu0 0
        %826 = vmatpush1.bf16.msra.mxu0 0
        %827 = vmatprep.subr.bf16.mxu0 0
        %828 = vmatpush1.bf16.msra.mxu0 0
        %829 = vmatprep.mubr.bf16.mxu0 0
        %830 = vmatmul.mubr.bf16.gmra.mrb[0].mxu0 %v713
        %v831 = vpop.f32.mrb[0].mxu0
        %v832 = vadd.f32 %v389, %v831
        %v833 = vpop.f32.mrb[0].mxu0
        %v834 = vadd.f32 %v389, %v833
        %v835 = vpop.f32.mrb[0].mxu0
        %v836 = vpop.f32.mrb[0].mxu0
        %837 = vdwg.mxu0
        %838 = vmatprep.subr.bf16.mxu0 %v590
        %839 = vmatpush1.bf16.msra.mxu0 %v589
        %840 = vmatprep.subr.bf16.mxu0 %v606
        %841 = vmatpush1.bf16.msra.mxu0 %v605
        %842 = vmatprep.subr.bf16.mxu0 %v622
        %843 = vmatpush1.bf16.msra.mxu0 %v621
        %844 = vmatprep.subr.bf16.mxu0 %v638
        %845 = vmatpush1.bf16.msra.mxu0 %v637
        %846 = vmatprep.subr.bf16.mxu0 0
        %847 = vmatpush1.bf16.msra.mxu0 0
        %848 = vmatprep.subr.bf16.mxu0 0
        %849 = vmatpush1.bf16.msra.mxu0 0
        %850 = vmatprep.subr.bf16.mxu0 0
        %851 = vmatpush1.bf16.msra.mxu0 0
        %852 = vmatprep.subr.bf16.mxu0 0
        %853 = vmatpush1.bf16.msra.mxu0 0
        %854 = vmatprep.subr.bf16.mxu0 0
        %855 = vmatpush1.bf16.msra.mxu0 0
        %856 = vmatprep.subr.bf16.mxu0 0
        %857 = vmatpush1.bf16.msra.mxu0 0
        %858 = vmatprep.subr.bf16.mxu0 0
        %859 = vmatpush1.bf16.msra.mxu0 0
        %860 = vmatprep.subr.bf16.mxu0 0
        %861 = vmatpush1.bf16.msra.mxu0 0
        %862 = vmatprep.subr.bf16.mxu0 0
        %863 = vmatpush1.bf16.msra.mxu0 0
        %864 = vmatprep.subr.bf16.mxu0 0
        %865 = vmatpush1.bf16.msra.mxu0 0
        %866 = vmatprep.subr.bf16.mxu0 0
        %867 = vmatpush1.bf16.msra.mxu0 0
        %868 = vmatprep.subr.bf16.mxu0 0
        %869 = vmatpush1.bf16.msra.mxu0 0
        %870 = vmatprep.mubr.bf16.mxu0 0
        %871 = vmatmul.mubr.bf16.gmra.mrb[0].mxu0 %v713
        %v872 = vpop.f32.mrb[0].mxu0
        %v873 = vadd.f32 %v389, %v872
        %v874 = vpop.f32.mrb[0].mxu0
        %v875 = vadd.f32 %v389, %v874
        %v876 = vpop.f32.mrb[0].mxu0
        %v877 = vpop.f32.mrb[0].mxu0
        %878 = vdwg.mxu0
        %879 = vmatprep.subr.bf16.mxu0 %v592
        %880 = vmatpush1.bf16.msra.mxu0 %v591
        %881 = vmatprep.subr.bf16.mxu0 %v608
        %882 = vmatpush1.bf16.msra.mxu0 %v607
        %883 = vmatprep.subr.bf16.mxu0 %v624
        %884 = vmatpush1.bf16.msra.mxu0 %v623
        %885 = vmatprep.subr.bf16.mxu0 %v640
        %886 = vmatpush1.bf16.msra.mxu0 %v639
        %887 = vmatprep.subr.bf16.mxu0 0
        %888 = vmatpush1.bf16.msra.mxu0 0
        %889 = vmatprep.subr.bf16.mxu0 0
        %890 = vmatpush1.bf16.msra.mxu0 0
        %891 = vmatprep.subr.bf16.mxu0 0
        %892 = vmatpush1.bf16.msra.mxu0 0
        %893 = vmatprep.subr.bf16.mxu0 0
        %894 = vmatpush1.bf16.msra.mxu0 0
        %895 = vmatprep.subr.bf16.mxu0 0
        %896 = vmatpush1.bf16.msra.mxu0 0
        %897 = vmatprep.subr.bf16.mxu0 0
        %898 = vmatpush1.bf16.msra.mxu0 0
        %899 = vmatprep.subr.bf16.mxu0 0
        %900 = vmatpush1.bf16.msra.mxu0 0
        %901 = vmatprep.subr.bf16.mxu0 0
        %902 = vmatpush1.bf16.msra.mxu0 0
        %903 = vmatprep.subr.bf16.mxu0 0
        %904 = vmatpush1.bf16.msra.mxu0 0
        %905 = vmatprep.subr.bf16.mxu0 0
        %906 = vmatpush1.bf16.msra.mxu0 0
        %907 = vmatprep.subr.bf16.mxu0 0
        %908 = vmatpush1.bf16.msra.mxu0 0
        %909 = vmatprep.subr.bf16.mxu0 0
        %910 = vmatpush1.bf16.msra.mxu0 0
        %911 = vmatprep.mubr.bf16.mxu0 0
        %912 = vmatmul.mubr.bf16.gmra.mrb[0].mxu0 %v713
        %v913 = vpop.f32.mrb[0].mxu0
        %v914 = vadd.f32 %v389, %v913
        %v915 = vpop.f32.mrb[0].mxu0
        %v916 = vadd.f32 %v389, %v915
        %v917 = vpop.f32.mrb[0].mxu0
        %v918 = vpop.f32.mrb[0].mxu0
        %919 = vdwg.mxu0
        %920 = vmatprep.subr.bf16.mxu0 %v594
        %921 = vmatpush1.bf16.msra.mxu0 %v593
        %922 = vmatprep.subr.bf16.mxu0 %v610
        %923 = vmatpush1.bf16.msra.mxu0 %v609
        %924 = vmatprep.subr.bf16.mxu0 %v626
        %925 = vmatpush1.bf16.msra.mxu0 %v625
        %926 = vmatprep.subr.bf16.mxu0 %v642
        %927 = vmatpush1.bf16.msra.mxu0 %v641
        %928 = vmatprep.subr.bf16.mxu0 0
        %929 = vmatpush1.bf16.msra.mxu0 0
        %930 = vmatprep.subr.bf16.mxu0 0
        %931 = vmatpush1.bf16.msra.mxu0 0
        %932 = vmatprep.subr.bf16.mxu0 0
        %933 = vmatpush1.bf16.msra.mxu0 0
        %934 = vmatprep.subr.bf16.mxu0 0
        %935 = vmatpush1.bf16.msra.mxu0 0
        %936 = vmatprep.subr.bf16.mxu0 0
        %937 = vmatpush1.bf16.msra.mxu0 0
        %938 = vmatprep.subr.bf16.mxu0 0
        %939 = vmatpush1.bf16.msra.mxu0 0
        %940 = vmatprep.subr.bf16.mxu0 0
        %941 = vmatpush1.bf16.msra.mxu0 0
        %942 = vmatprep.subr.bf16.mxu0 0
        %943 = vmatpush1.bf16.msra.mxu0 0
        %944 = vmatprep.subr.bf16.mxu0 0
        %945 = vmatpush1.bf16.msra.mxu0 0
        %946 = vmatprep.subr.bf16.mxu0 0
        %947 = vmatpush1.bf16.msra.mxu0 0
        %948 = vmatprep.subr.bf16.mxu0 0
        %949 = vmatpush1.bf16.msra.mxu0 0
        %950 = vmatprep.subr.bf16.mxu0 0
        %951 = vmatpush1.bf16.msra.mxu0 0
        %952 = vmatprep.mubr.bf16.mxu0 0
        %953 = vmatmul.mubr.bf16.gmra.mrb[0].mxu0 %v713
        %v954 = vpop.f32.mrb[0].mxu0
        %v955 = vadd.f32 %v389, %v954
        %v956 = vpop.f32.mrb[0].mxu0
        %v957 = vadd.f32 %v389, %v956
        %v958 = vpop.f32.mrb[0].mxu0
        %v959 = vpop.f32.mrb[0].mxu0
        %960 = vdwg.mxu0
        %961 = vmatprep.subr.bf16.mxu0 %v596
        %962 = vmatpush1.bf16.msra.mxu0 %v595
        %963 = vmatprep.subr.bf16.mxu0 %v612
        %964 = vmatpush1.bf16.msra.mxu0 %v611
        %965 = vmatprep.subr.bf16.mxu0 %v628
        %966 = vmatpush1.bf16.msra.mxu0 %v627
        %967 = vmatprep.subr.bf16.mxu0 %v644
        %968 = vmatpush1.bf16.msra.mxu0 %v643
        %969 = vmatprep.subr.bf16.mxu0 0
        %970 = vmatpush1.bf16.msra.mxu0 0
        %971 = vmatprep.subr.bf16.mxu0 0
        %972 = vmatpush1.bf16.msra.mxu0 0
        %973 = vmatprep.subr.bf16.mxu0 0
        %974 = vmatpush1.bf16.msra.mxu0 0
        %975 = vmatprep.subr.bf16.mxu0 0
        %976 = vmatpush1.bf16.msra.mxu0 0
        %977 = vmatprep.subr.bf16.mxu0 0
        %978 = vmatpush1.bf16.msra.mxu0 0
        %979 = vmatprep.subr.bf16.mxu0 0
        %980 = vmatpush1.bf16.msra.mxu0 0
        %981 = vmatprep.subr.bf16.mxu0 0
        %982 = vmatpush1.bf16.msra.mxu0 0
        %983 = vmatprep.subr.bf16.mxu0 0
        %984 = vmatpush1.bf16.msra.mxu0 0
        %985 = vmatprep.subr.bf16.mxu0 0
        %986 = vmatpush1.bf16.msra.mxu0 0
        %987 = vmatprep.subr.bf16.mxu0 0
        %988 = vmatpush1.bf16.msra.mxu0 0
        %989 = vmatprep.subr.bf16.mxu0 0
        %990 = vmatpush1.bf16.msra.mxu0 0
        %991 = vmatprep.subr.bf16.mxu0 0
        %992 = vmatpush1.bf16.msra.mxu0 0
        %993 = vmatprep.mubr.bf16.mxu0 0
        %994 = vmatmul.mubr.bf16.gmra.mrb[0].mxu0 %v713
        %v995 = vpop.f32.mrb[0].mxu0
        %v996 = vadd.f32 %v389, %v995
        %v997 = vpop.f32.mrb[0].mxu0
        %v998 = vadd.f32 %v389, %v997
        %v999 = vpop.f32.mrb[0].mxu0
        %v1000 = vpop.f32.mrb[0].mxu0
        %1001 = vdwg.mxu0
        %1002 = vmatprep.subr.bf16.mxu0 %v598
        %1003 = vmatpush1.bf16.msra.mxu0 %v597
        %1004 = vmatprep.subr.bf16.mxu0 %v614
        %1005 = vmatpush1.bf16.msra.mxu0 %v613
        %1006 = vmatprep.subr.bf16.mxu0 %v630
        %1007 = vmatpush1.bf16.msra.mxu0 %v629
        %1008 = vmatprep.subr.bf16.mxu0 %v646
        %1009 = vmatpush1.bf16.msra.mxu0 %v645
        %1010 = vmatprep.subr.bf16.mxu0 0
        %1011 = vmatpush1.bf16.msra.mxu0 0
        %1012 = vmatprep.subr.bf16.mxu0 0
        %1013 = vmatpush1.bf16.msra.mxu0 0
        %1014 = vmatprep.subr.bf16.mxu0 0
        %1015 = vmatpush1.bf16.msra.mxu0 0
        %1016 = vmatprep.subr.bf16.mxu0 0
        %1017 = vmatpush1.bf16.msra.mxu0 0
        %1018 = vmatprep.subr.bf16.mxu0 0
        %1019 = vmatpush1.bf16.msra.mxu0 0
        %1020 = vmatprep.subr.bf16.mxu0 0
        %1021 = vmatpush1.bf16.msra.mxu0 0
        %1022 = vmatprep.subr.bf16.mxu0 0
        %1023 = vmatpush1.bf16.msra.mxu0 0
        %1024 = vmatprep.subr.bf16.mxu0 0
        %1025 = vmatpush1.bf16.msra.mxu0 0
        %1026 = vmatprep.subr.bf16.mxu0 0
        %1027 = vmatpush1.bf16.msra.mxu0 0
        %1028 = vmatprep.subr.bf16.mxu0 0
        %1029 = vmatpush1.bf16.msra.mxu0 0
        %1030 = vmatprep.subr.bf16.mxu0 0
        %1031 = vmatpush1.bf16.msra.mxu0 0
        %1032 = vmatprep.subr.bf16.mxu0 0
        %1033 = vmatpush1.bf16.msra.mxu0 0
        %1034 = vmatprep.mubr.bf16.mxu0 0
        %1035 = vmatmul.mubr.bf16.gmra.mrb[0].mxu0 %v713
        %v1036 = vpop.f32.mrb[0].mxu0
        %v1037 = vadd.f32 %v389, %v1036
        %v1038 = vpop.f32.mrb[0].mxu0
        %v1039 = vadd.f32 %v389, %v1038
        %v1040 = vpop.f32.mrb[0].mxu0
        %v1041 = vpop.f32.mrb[0].mxu0
        %1042 = vdwg.mxu0
        %vm1043 = vcmp.gt.f32.partialorder %v750, 0.0
        %vm1044 = vcmp.gt.f32.partialorder %v752, 0.0
        %vm1045 = vcmp.gt.f32.partialorder %v791, 0.0
        %vm1046 = vcmp.gt.f32.partialorder %v793, 0.0
        %vm1047 = vcmp.gt.f32.partialorder %v832, 0.0
        %vm1048 = vcmp.gt.f32.partialorder %v834, 0.0
        %vm1049 = vcmp.gt.f32.partialorder %v873, 0.0
        %vm1050 = vcmp.gt.f32.partialorder %v875, 0.0
        %vm1051 = vcmp.gt.f32.partialorder %v914, 0.0
        %vm1052 = vcmp.gt.f32.partialorder %v916, 0.0
        %vm1053 = vcmp.gt.f32.partialorder %v955, 0.0
        %vm1054 = vcmp.gt.f32.partialorder %v957, 0.0
        %vm1055 = vcmp.gt.f32.partialorder %v996, 0.0
        %vm1056 = vcmp.gt.f32.partialorder %v998, 0.0
        %vm1057 = vcmp.gt.f32.partialorder %v1037, 0.0
        %vm1058 = vcmp.gt.f32.partialorder %v1039, 0.0
        %v1059 = vmul.f32 %v750, 0.2
        %v1060 = vmul.f32 %v752, 0.2
        %v1061 = vmul.f32 %v791, 0.2
        %v1062 = vmul.f32 %v793, 0.2
        %v1063 = vmul.f32 %v832, 0.2
        %v1064 = vmul.f32 %v834, 0.2
        %v1065 = vmul.f32 %v873, 0.2
        %v1066 = vmul.f32 %v875, 0.2
        %v1067 = vmul.f32 %v914, 0.2
        %v1068 = vmul.f32 %v916, 0.2
        %v1069 = vmul.f32 %v955, 0.2
        %v1070 = vmul.f32 %v957, 0.2
        %v1071 = vmul.f32 %v996, 0.2
        %v1072 = vmul.f32 %v998, 0.2
        %v1073 = vmul.f32 %v1037, 0.2
        %v1074 = vmul.f32 %v1039, 0.2
        %v1075 = vsel %vm1043, %v750, %v1059
        %v1076 = vsel %vm1044, %v752, %v1060
        %v1077 = vsel %vm1045, %v791, %v1061
        %v1078 = vsel %vm1046, %v793, %v1062
        %v1079 = vsel %vm1047, %v832, %v1063
        %v1080 = vsel %vm1048, %v834, %v1064
        %v1081 = vsel %vm1049, %v873, %v1065
        %v1082 = vsel %vm1050, %v875, %v1066
        %v1083 = vsel %vm1051, %v914, %v1067
        %v1084 = vsel %vm1052, %v916, %v1068
        %v1085 = vsel %vm1053, %v955, %v1069
        %v1086 = vsel %vm1054, %v957, %v1070
        %v1087 = vsel %vm1055, %v996, %v1071
        %v1088 = vsel %vm1056, %v998, %v1072
        %v1089 = vsel %vm1057, %v1037, %v1073
        %v1090 = vsel %vm1058, %v1039, %v1074
        %v1091 = vpack.c.bf16 %v1075, %v1075
        %v1092 = vpack.c.bf16 %v1076, %v1076
        %v1093 = vpack.c.bf16 %v1077, %v1077
        %v1094 = vpack.c.bf16 %v1078, %v1078
        %v1095 = vpack.c.bf16 %v1079, %v1079
        %v1096 = vpack.c.bf16 %v1080, %v1080
        %v1097 = vpack.c.bf16 %v1081, %v1081
        %v1098 = vpack.c.bf16 %v1082, %v1082
        %v1099 = vpack.c.bf16 %v1083, %v1083
        %v1100 = vpack.c.bf16 %v1084, %v1084
        %v1101 = vpack.c.bf16 %v1085, %v1085
        %v1102 = vpack.c.bf16 %v1086, %v1086
        %v1103 = vpack.c.bf16 %v1087, %v1087
        %v1104 = vpack.c.bf16 %v1088, %v1088
        %v1105 = vpack.c.bf16 %v1089, %v1089
        %v1106 = vpack.c.bf16 %v1090, %v1090
        %v1123 = vcombine.low %v1091, %v1092
        %v1124 = vcombine.low %v1093, %v1094
        %v1126 = vunpack.c.l.s4 1983009808
        %v1127 = vunpack.c.0.s8 %v1126
        %v1128 = vlaneseq
        %v1129 = vshrl.u32 %v1128, 7
        %v1130 = vsub.s32 %v1127, %v1129
        %v1131 = vrot.slane %v1123, %v1130
        %v1133 = vunpack.c.l.s4 1983009808
        %v1134 = vunpack.c.0.s8 %v1133
        %v1135 = vlaneseq
        %v1136 = vshrl.u32 %v1135, 7
        %v1137 = vsub.s32 %v1134, %v1136
        %v1138 = vrot.slane %v1124, %v1137
        %v1139 = vcombine.low %v1131, %v1138
        %v1140 = vcombine.low %v1095, %v1096
        %v1141 = vcombine.low %v1097, %v1098
        %v1143 = vunpack.c.l.s4 1983009808
        %v1144 = vunpack.c.0.s8 %v1143
        %v1145 = vlaneseq
        %v1146 = vshrl.u32 %v1145, 7
        %v1147 = vsub.s32 %v1144, %v1146
        %v1148 = vrot.slane %v1140, %v1147
        %v1150 = vunpack.c.l.s4 1983009808
        %v1151 = vunpack.c.0.s8 %v1150
        %v1152 = vlaneseq
        %v1153 = vshrl.u32 %v1152, 7
        %v1154 = vsub.s32 %v1151, %v1153
        %v1155 = vrot.slane %v1141, %v1154
        %v1156 = vcombine.low %v1148, %v1155
        %v1157 = vcombine.low %v1099, %v1100
        %v1158 = vcombine.low %v1101, %v1102
        %v1160 = vunpack.c.l.s4 1983009808
        %v1161 = vunpack.c.0.s8 %v1160
        %v1162 = vlaneseq
        %v1163 = vshrl.u32 %v1162, 7
        %v1164 = vsub.s32 %v1161, %v1163
        %v1165 = vrot.slane %v1157, %v1164
        %v1167 = vunpack.c.l.s4 1983009808
        %v1168 = vunpack.c.0.s8 %v1167
        %v1169 = vlaneseq
        %v1170 = vshrl.u32 %v1169, 7
        %v1171 = vsub.s32 %v1168, %v1170
        %v1172 = vrot.slane %v1158, %v1171
        %v1173 = vcombine.low %v1165, %v1172
        %v1174 = vcombine.low %v1103, %v1104
        %v1175 = vcombine.low %v1105, %v1106
        %v1177 = vunpack.c.l.s4 1983009808
        %v1178 = vunpack.c.0.s8 %v1177
        %v1179 = vlaneseq
        %v1180 = vshrl.u32 %v1179, 7
        %v1181 = vsub.s32 %v1178, %v1180
        %v1182 = vrot.slane %v1174, %v1181
        %v1184 = vunpack.c.l.s4 1983009808
        %v1185 = vunpack.c.0.s8 %v1184
        %v1186 = vlaneseq
        %v1187 = vshrl.u32 %v1186, 7
        %v1188 = vsub.s32 %v1185, %v1187
        %v1189 = vrot.slane %v1175, %v1188
        %v1190 = vcombine.low %v1182, %v1189
        %1195 = vst [vmem:[%s317] sm:$0xff] %v1139
        %1196 = vst [vmem:[%s317 + $0x8] sm:$0xff] %v1156
        %1197 = vst [vmem:[%s317 + $0x10] sm:$0xff] %v1173
        %1198 = vst [vmem:[%s317 + $0x18] sm:$0xff] %v1190
        %s1199 = smul.u32 16, %s14
        %p1200 = scmp.lt.s32.totalorder %s1199, 255
        %s1201 = scalar_select %p1200, %s1199, 255
        %s1202 = smul.addr %s1201, 2
        %s1203 = scalar_lea.vmem %s3, %s1202
        // Predicated region
        $region56: #{netG_forward.24} parent=50 // pred_check
          %p1204 = pneg %p100
        $region57: #{netG_forward.24} parent=50 // pred_check_branch
          %1206 = sbr.rel (%p1204) target = $region59
        $region58: #{netG_forward.24} parent=50 // pred_region
          %s1207 = smul.u32 16, %s14
        $region59: #{netG_forward.24} parent=50 // pred_fallthru
          _
      $region51: #{netG_forward.24} parent=5 // pred_fallthru
        _
      %p1208 = scmp.le.s32.totalorder 2, %s9
      // Predicated region
      $region60: #{netG_forward.24} parent=5 // pred_check
        %p1209 = pneg %p1208
      $region61: #{netG_forward.24} parent=5 // pred_check_branch
        %1211 = sbr.rel (%p1209) target = $region63
      $region62: #{netG_forward.24} parent=5 // pred_region
        %s1212 = ssub.s32 %s9, 2
        // Predicated region
        $region64: #{netG_forward.24} parent=62 // pred_check
          %p1213 = pneg %p106
        $region65: #{netG_forward.24} parent=62 // pred_check_branch
          %1215 = sbr.rel (%p1213) target = $region67
        $region66: #{netG_forward.24} parent=62 // pred_region
          %s1216 = smul.u32 16, %s15
          %p1217 = scmp.lt.s32.totalorder %s1216, 255
          %s1218 = scalar_select %p1217, %s1216, 255
          %s1219 = smul.addr %s1218, 2
          %s1220 = scalar_lea.vmem %s3, %s1219
        $region67: #{netG_forward.24} parent=62 // pred_fallthru
          _
      $region63: #{netG_forward.24} parent=5 // pred_fallthru
        _
    $region6: #{netG_forward.24} parent=1 // loop_footer
      %s13 = sadd.s32 1, %s9
    $region7: #{netG_forward.24} parent=1 // loop_footer_branch
      %8 = sbr.rel target = $region3
    $region8: #{netG_forward.24} parent=1 // loop_exit
      _

// kernel: netG_forward.25
$region0: #{netG_forward.25}
  #allocation0 [shape = 'u32[]', space=smem, size = 0x4, offset = 0x4, fixed_abs, tag = 'smem constant byte address 0x4 - core index']
  #allocation1 [shape = 'u32[144,128]{1,0:T(1,128)}', space=vmem, size = 0x12000, scoped, tag = 'internal scratch']
  %s0 = inlined_call_operand.vmem [shape: bf16[4,64], index: 0, kind: input, shape index: {}]
  %s1 = inlined_call_operand.vmem [shape: bf16[64,8192], index: 1, kind: input, shape index: {}]
  %s2 = inlined_call_operand.vmem [shape: f32[4,1], index: 2, kind: input, shape index: {}]
  %s3 = inlined_call_operand.vmem [shape: bf16[4,8192], index: 3, kind: output, shape index: {}]
  %s4 = sld [smem:[#allocation0]]
  $region68: #{netG_forward.25} parent=0
    _
  %s6 = ssub.s32 1, %s4
  %s7 = scalar_select 0, %s6, %s4
  $region1: #{netG_forward.25} parent=0
    #allocation2 [shape = 'u8[524288]{0}', space=vmem, size = 0x80000, scoped, tag = 'input window, operand 1']
    loop: start=0, step=1, limit=6
    $region2: #{netG_forward.25} parent=1 // loop_pre_header
      _
    $region3: #{netG_forward.25} parent=1 // loop_header
      %s9 = sphi 0, %s13
      %p10 = scmp.ge.s32.totalorder %s9, 6
      %s17 = sphi 0, %s17
      %s19 = sphi 0, %s17
      %s20 = sphi 0, %s19
      %s34 = sphi 0, %s20
      %s40 = sphi 0, %s42
      %s43 = sphi 0, %s40
      %s44 = sphi 0, %s43
      %s60 = sphi 0, %s44
      %s64 = sphi 0, %s64
      %s66 = sphi 0, %s64
      %s67 = sphi 0, %s66
      %s81 = sphi 0, %s67
      %s87 = sphi 0, %s89
      %s90 = sphi 0, %s87
      %s91 = sphi 0, %s90
      %s107 = sphi 0, %s91
    $region4: #{netG_forward.25} parent=1 // loop_header_branch
      %12 = sbr.rel (%p10) target = $region8
    $region5: #{netG_forward.25} parent=1 // loop_body
      %s14 = ssub.s32 %s9, 1
      %s15 = ssub.s32 %s9, 2
      %s16 = sadd.s32 %s9, 1
      %s18 = sadd.s32 %s17, 1
      %p21 = scmp.eq.s32.totalorder %s9, 3
      %p22 = scmp.ne.s32.totalorder %s17, %s19
      %p23 = scmp.eq.s32.totalorder %s9, 0
      %p24 = por %p22, %p23
      %p25 = scmp.ne.s32.totalorder %s17, %s19
      %p26 = scmp.eq.s32.totalorder %s14, 3
      %p27 = por %p25, %p26
      %p28 = scmp.ne.s32.totalorder %s19, %s20
      %p29 = scmp.eq.s32.totalorder %s14, 0
      %p30 = por %p28, %p29
      %p31 = scmp.ne.s32.totalorder %s19, %s20
      %p32 = scmp.eq.s32.totalorder %s15, 3
      %p33 = por %p31, %p32
      %p35 = scmp.ne.s32.totalorder %s20, %s34
      %p36 = scmp.eq.s32.totalorder %s15, 0
      %p37 = por %p35, %p36
      %s38 = ssub.s32 %s9, %s16
      %p39 = scmp.eq.s32.totalorder %s38, 0
      %s41 = sadd.s32 %s40, 1
      %s42 = scalar_select %p39, %s40, %s41
      %p45 = pneg %p39
      %p46 = scmp.eq.s32.totalorder %s9, 3
      %p47 = por %p45, %p46
      %p48 = scmp.ne.s32.totalorder %s40, %s43
      %p49 = scmp.eq.s32.totalorder %s9, 0
      %p50 = por %p48, %p49
      %p51 = scmp.ne.s32.totalorder %s40, %s43
      %p52 = scmp.eq.s32.totalorder %s14, 3
      %p53 = por %p51, %p52
      %p54 = scmp.ne.s32.totalorder %s43, %s44
      %p55 = scmp.eq.s32.totalorder %s14, 0
      %p56 = por %p54, %p55
      %p57 = scmp.ne.s32.totalorder %s43, %s44
      %p58 = scmp.eq.s32.totalorder %s15, 3
      %p59 = por %p57, %p58
      %p61 = scmp.ne.s32.totalorder %s44, %s60
      %p62 = scmp.eq.s32.totalorder %s15, 0
      %p63 = por %p61, %p62
      %s65 = sadd.s32 %s64, 1
      %p68 = scmp.eq.s32.totalorder %s9, 3
      %p69 = scmp.ne.s32.totalorder %s64, %s66
      %p70 = scmp.eq.s32.totalorder %s9, 0
      %p71 = por %p69, %p70
      %p72 = scmp.ne.s32.totalorder %s64, %s66
      %p73 = scmp.eq.s32.totalorder %s14, 3
      %p74 = por %p72, %p73
      %p75 = scmp.ne.s32.totalorder %s66, %s67
      %p76 = scmp.eq.s32.totalorder %s14, 0
      %p77 = por %p75, %p76
      %p78 = scmp.ne.s32.totalorder %s66, %s67
      %p79 = scmp.eq.s32.totalorder %s15, 3
      %p80 = por %p78, %p79
      %p82 = scmp.ne.s32.totalorder %s67, %s81
      %p83 = scmp.eq.s32.totalorder %s15, 0
      %p84 = por %p82, %p83
      %s85 = ssub.s32 %s9, %s16
      %p86 = scmp.eq.s32.totalorder %s85, 0
      %s88 = sadd.s32 %s87, 1
      %s89 = scalar_select %p86, %s87, %s88
      %p92 = pneg %p86
      %p93 = scmp.eq.s32.totalorder %s9, 3
      %p94 = por %p92, %p93
      %p95 = scmp.ne.s32.totalorder %s87, %s90
      %p96 = scmp.eq.s32.totalorder %s9, 0
      %p97 = por %p95, %p96
      %p98 = scmp.ne.s32.totalorder %s87, %s90
      %p99 = scmp.eq.s32.totalorder %s14, 3
      %p100 = por %p98, %p99
      %p101 = scmp.ne.s32.totalorder %s90, %s91
      %p102 = scmp.eq.s32.totalorder %s14, 0
      %p103 = por %p101, %p102
      %p104 = scmp.ne.s32.totalorder %s90, %s91
      %p105 = scmp.eq.s32.totalorder %s15, 3
      %p106 = por %p104, %p105
      %p108 = scmp.ne.s32.totalorder %s91, %s107
      %p109 = scmp.eq.s32.totalorder %s15, 0
      %p110 = por %p108, %p109
      %p111 = scmp.le.s32.totalorder 1, %s9
      %p112 = scmp.lt.s32.totalorder %s9, 5
      %p113 = pnand %p111, %p112
      %p114 = pneg %p113
      // Predicated region
      $region9: #{netG_forward.25} parent=5 // pred_check
        _
      $region10: #{netG_forward.25} parent=5 // pred_check_branch
        %116 = sbr.rel (%p113) target = $region12
      $region11: #{netG_forward.25} parent=5 // pred_region
        %s117 = ssub.s32 %s9, 1
        // Predicated region
        $region13: #{netG_forward.25} parent=11 // pred_check
          %p118 = pneg %p30
        $region14: #{netG_forward.25} parent=11 // pred_check_branch
          %120 = sbr.rel (%p118) target = $region16
        $region15: #{netG_forward.25} parent=11 // pred_region
          _
        $region16: #{netG_forward.25} parent=11 // pred_fallthru
          _
        // Predicated region
        $region17: #{netG_forward.25} parent=11 // pred_check
          %p121 = pneg %p77
        $region18: #{netG_forward.25} parent=11 // pred_check_branch
          %123 = sbr.rel (%p121) target = $region20
        $region19: #{netG_forward.25} parent=11 // pred_region
          _
        $region20: #{netG_forward.25} parent=11 // pred_fallthru
          _
      $region12: #{netG_forward.25} parent=5 // pred_fallthru
        _
      %p124 = scmp.lt.s32.totalorder %s9, 4
      // Predicated region
      $region21: #{netG_forward.25} parent=5 // pred_check
        %p125 = pneg %p124
      $region22: #{netG_forward.25} parent=5 // pred_check_branch
        %127 = sbr.rel (%p125) target = $region24
      $region23: #{netG_forward.25} parent=5 // pred_region
        // Predicated region
        $region25: #{netG_forward.25} parent=23 // pred_check
          %p128 = pneg %p50
        $region26: #{netG_forward.25} parent=23 // pred_check_branch
          %130 = sbr.rel (%p128) target = $region28
        $region27: #{netG_forward.25} parent=23 // pred_region
          %s131 = sand.u32 %s40, 1
          %s132 = sand.u32 %s40, 1
          %s133 = smul.addr %s132, 512
          %s134 = scalar_lea.vmem [#allocation2], %s133
          %s135 = smul.u32 16, %s9
          %s136 = smul.addr %s135, 4
          %s137 = scalar_lea.vmem %s1, %s136
          // Predicated region
          $region29: #{netG_forward.25} parent=27 // pred_check
            _
          $region30: #{netG_forward.25} parent=27 // pred_check_branch
            %139 = sbr.rel (0) target = $region32
          $region31: #{netG_forward.25} parent=27 // pred_region
            // Predicated region
            $region33: #{netG_forward.25} parent=31 // pred_check
              _
            $region34: #{netG_forward.25} parent=31 // pred_check_branch
              %141 = sbr.rel (0) target = $region36
            $region35: #{netG_forward.25} parent=31 // pred_region
              loop: start=0, step=1, limit=1
              $region37: #{netG_forward.25} parent=35 // loop_pre_header
                _
              $region38: #{netG_forward.25} parent=35 // loop_header
                %s143 = sphi 0, %s147
                %p144 = scmp.ge.s32.totalorder %s143, 1
                %s148 = sphi %s137, %s137
                %s149 = sphi %s134, %s134
              $region39: #{netG_forward.25} parent=35 // loop_header_branch
                %146 = sbr.rel (%p144) target = $region43
              $region40: #{netG_forward.25} parent=35 // loop_body
                %v150 = vld [vmem:[%s148] sm:$0xff]
                %151 = vst [vmem:[%s149] sm:$0xff] %v150
                %v152 = vld [vmem:[%s148 + $0x8] sm:$0xff]
                %153 = vst [vmem:[%s149 + $0x8] sm:$0xff] %v152
                %v154 = vld [vmem:[%s148 + $0x10] sm:$0xff]
                %155 = vst [vmem:[%s149 + $0x10] sm:$0xff] %v154
                %v156 = vld [vmem:[%s148 + $0x18] sm:$0xff]
                %157 = vst [vmem:[%s149 + $0x18] sm:$0xff] %v156
                %v158 = vld [vmem:[%s148 + $0x20] sm:$0xff]
                %159 = vst [vmem:[%s149 + $0x20] sm:$0xff] %v158
                %v160 = vld [vmem:[%s148 + $0x28] sm:$0xff]
                %161 = vst [vmem:[%s149 + $0x28] sm:$0xff] %v160
                %v162 = vld [vmem:[%s148 + $0x30] sm:$0xff]
                %163 = vst [vmem:[%s149 + $0x30] sm:$0xff] %v162
                %v164 = vld [vmem:[%s148 + $0x38] sm:$0xff]
                %165 = vst [vmem:[%s149 + $0x38] sm:$0xff] %v164
                %v166 = vld [vmem:[%s148 + $0x100] sm:$0xff]
                %167 = vst [vmem:[%s149 + $0x40] sm:$0xff] %v166
                %v168 = vld [vmem:[%s148 + $0x108] sm:$0xff]
                %169 = vst [vmem:[%s149 + $0x48] sm:$0xff] %v168
                %v170 = vld [vmem:[%s148 + $0x110] sm:$0xff]
                %171 = vst [vmem:[%s149 + $0x50] sm:$0xff] %v170
                %v172 = vld [vmem:[%s148 + $0x118] sm:$0xff]
                %173 = vst [vmem:[%s149 + $0x58] sm:$0xff] %v172
                %v174 = vld [vmem:[%s148 + $0x120] sm:$0xff]
                %175 = vst [vmem:[%s149 + $0x60] sm:$0xff] %v174
                %v176 = vld [vmem:[%s148 + $0x128] sm:$0xff]
                %177 = vst [vmem:[%s149 + $0x68] sm:$0xff] %v176
                %v178 = vld [vmem:[%s148 + $0x130] sm:$0xff]
                %179 = vst [vmem:[%s149 + $0x70] sm:$0xff] %v178
                %v180 = vld [vmem:[%s148 + $0x138] sm:$0xff]
                %181 = vst [vmem:[%s149 + $0x78] sm:$0xff] %v180
                %v182 = vld [vmem:[%s148 + $0x200] sm:$0xff]
                %183 = vst [vmem:[%s149 + $0x80] sm:$0xff] %v182
                %v184 = vld [vmem:[%s148 + $0x208] sm:$0xff]
                %185 = vst [vmem:[%s149 + $0x88] sm:$0xff] %v184
                %v186 = vld [vmem:[%s148 + $0x210] sm:$0xff]
                %187 = vst [vmem:[%s149 + $0x90] sm:$0xff] %v186
                %v188 = vld [vmem:[%s148 + $0x218] sm:$0xff]
                %189 = vst [vmem:[%s149 + $0x98] sm:$0xff] %v188
                %v190 = vld [vmem:[%s148 + $0x220] sm:$0xff]
                %191 = vst [vmem:[%s149 + $0xa0] sm:$0xff] %v190
                %v192 = vld [vmem:[%s148 + $0x228] sm:$0xff]
                %193 = vst [vmem:[%s149 + $0xa8] sm:$0xff] %v192
                %v194 = vld [vmem:[%s148 + $0x230] sm:$0xff]
                %195 = vst [vmem:[%s149 + $0xb0] sm:$0xff] %v194
                %v196 = vld [vmem:[%s148 + $0x238] sm:$0xff]
                %197 = vst [vmem:[%s149 + $0xb8] sm:$0xff] %v196
                %v198 = vld [vmem:[%s148 + $0x300] sm:$0xff]
                %199 = vst [vmem:[%s149 + $0xc0] sm:$0xff] %v198
                %v200 = vld [vmem:[%s148 + $0x308] sm:$0xff]
                %201 = vst [vmem:[%s149 + $0xc8] sm:$0xff] %v200
                %v202 = vld [vmem:[%s148 + $0x310] sm:$0xff]
                %203 = vst [vmem:[%s149 + $0xd0] sm:$0xff] %v202
                %v204 = vld [vmem:[%s148 + $0x318] sm:$0xff]
                %205 = vst [vmem:[%s149 + $0xd8] sm:$0xff] %v204
                %v206 = vld [vmem:[%s148 + $0x320] sm:$0xff]
                %207 = vst [vmem:[%s149 + $0xe0] sm:$0xff] %v206
                %v208 = vld [vmem:[%s148 + $0x328] sm:$0xff]
                %209 = vst [vmem:[%s149 + $0xe8] sm:$0xff] %v208
                %v210 = vld [vmem:[%s148 + $0x330] sm:$0xff]
                %211 = vst [vmem:[%s149 + $0xf0] sm:$0xff] %v210
                %v212 = vld [vmem:[%s148 + $0x338] sm:$0xff]
                %213 = vst [vmem:[%s149 + $0xf8] sm:$0xff] %v212
                %v214 = vld [vmem:[%s148 + $0x400] sm:$0xff]
                %215 = vst [vmem:[%s149 + $0x100] sm:$0xff] %v214
                %v216 = vld [vmem:[%s148 + $0x408] sm:$0xff]
                %217 = vst [vmem:[%s149 + $0x108] sm:$0xff] %v216
                %v218 = vld [vmem:[%s148 + $0x410] sm:$0xff]
                %219 = vst [vmem:[%s149 + $0x110] sm:$0xff] %v218
                %v220 = vld [vmem:[%s148 + $0x418] sm:$0xff]
                %221 = vst [vmem:[%s149 + $0x118] sm:$0xff] %v220
                %v222 = vld [vmem:[%s148 + $0x420] sm:$0xff]
                %223 = vst [vmem:[%s149 + $0x120] sm:$0xff] %v222
                %v224 = vld [vmem:[%s148 + $0x428] sm:$0xff]
                %225 = vst [vmem:[%s149 + $0x128] sm:$0xff] %v224
                %v226 = vld [vmem:[%s148 + $0x430] sm:$0xff]
                %227 = vst [vmem:[%s149 + $0x130] sm:$0xff] %v226
                %v228 = vld [vmem:[%s148 + $0x438] sm:$0xff]
                %229 = vst [vmem:[%s149 + $0x138] sm:$0xff] %v228
                %v230 = vld [vmem:[%s148 + $0x500] sm:$0xff]
                %231 = vst [vmem:[%s149 + $0x140] sm:$0xff] %v230
                %v232 = vld [vmem:[%s148 + $0x508] sm:$0xff]
                %233 = vst [vmem:[%s149 + $0x148] sm:$0xff] %v232
                %v234 = vld [vmem:[%s148 + $0x510] sm:$0xff]
                %235 = vst [vmem:[%s149 + $0x150] sm:$0xff] %v234
                %v236 = vld [vmem:[%s148 + $0x518] sm:$0xff]
                %237 = vst [vmem:[%s149 + $0x158] sm:$0xff] %v236
                %v238 = vld [vmem:[%s148 + $0x520] sm:$0xff]
                %239 = vst [vmem:[%s149 + $0x160] sm:$0xff] %v238
                %v240 = vld [vmem:[%s148 + $0x528] sm:$0xff]
                %241 = vst [vmem:[%s149 + $0x168] sm:$0xff] %v240
                %v242 = vld [vmem:[%s148 + $0x530] sm:$0xff]
                %243 = vst [vmem:[%s149 + $0x170] sm:$0xff] %v242
                %v244 = vld [vmem:[%s148 + $0x538] sm:$0xff]
                %245 = vst [vmem:[%s149 + $0x178] sm:$0xff] %v244
                %v246 = vld [vmem:[%s148 + $0x600] sm:$0xff]
                %247 = vst [vmem:[%s149 + $0x180] sm:$0xff] %v246
                %v248 = vld [vmem:[%s148 + $0x608] sm:$0xff]
                %249 = vst [vmem:[%s149 + $0x188] sm:$0xff] %v248
                %v250 = vld [vmem:[%s148 + $0x610] sm:$0xff]
                %251 = vst [vmem:[%s149 + $0x190] sm:$0xff] %v250
                %v252 = vld [vmem:[%s148 + $0x618] sm:$0xff]
                %253 = vst [vmem:[%s149 + $0x198] sm:$0xff] %v252
                %v254 = vld [vmem:[%s148 + $0x620] sm:$0xff]
                %255 = vst [vmem:[%s149 + $0x1a0] sm:$0xff] %v254
                %v256 = vld [vmem:[%s148 + $0x628] sm:$0xff]
                %257 = vst [vmem:[%s149 + $0x1a8] sm:$0xff] %v256
                %v258 = vld [vmem:[%s148 + $0x630] sm:$0xff]
                %259 = vst [vmem:[%s149 + $0x1b0] sm:$0xff] %v258
                %v260 = vld [vmem:[%s148 + $0x638] sm:$0xff]
                %261 = vst [vmem:[%s149 + $0x1b8] sm:$0xff] %v260
                %v262 = vld [vmem:[%s148 + $0x700] sm:$0xff]
                %263 = vst [vmem:[%s149 + $0x1c0] sm:$0xff] %v262
                %v264 = vld [vmem:[%s148 + $0x708] sm:$0xff]
                %265 = vst [vmem:[%s149 + $0x1c8] sm:$0xff] %v264
                %v266 = vld [vmem:[%s148 + $0x710] sm:$0xff]
                %267 = vst [vmem:[%s149 + $0x1d0] sm:$0xff] %v266
                %v268 = vld [vmem:[%s148 + $0x718] sm:$0xff]
                %269 = vst [vmem:[%s149 + $0x1d8] sm:$0xff] %v268
                %v270 = vld [vmem:[%s148 + $0x720] sm:$0xff]
                %271 = vst [vmem:[%s149 + $0x1e0] sm:$0xff] %v270
                %v272 = vld [vmem:[%s148 + $0x728] sm:$0xff]
                %273 = vst [vmem:[%s149 + $0x1e8] sm:$0xff] %v272
                %v274 = vld [vmem:[%s148 + $0x730] sm:$0xff]
                %275 = vst [vmem:[%s149 + $0x1f0] sm:$0xff] %v274
                %v276 = vld [vmem:[%s148 + $0x738] sm:$0xff]
                %277 = vst [vmem:[%s149 + $0x1f8] sm:$0xff] %v276
              $region41: #{netG_forward.25} parent=35 // loop_footer
                %s147 = sadd.s32 1, %s143
              $region42: #{netG_forward.25} parent=35 // loop_footer_branch
                %142 = sbr.rel target = $region38
              $region43: #{netG_forward.25} parent=35 // loop_exit
                _
            $region36: #{netG_forward.25} parent=31 // pred_fallthru
              _
            // Predicated region
            $region44: #{netG_forward.25} parent=31 // pred_check
              _
            $region45: #{netG_forward.25} parent=31 // pred_check_branch
              %279 = sbr.rel target = $region47
            $region46: #{netG_forward.25} parent=31 // pred_region
              _
            $region47: #{netG_forward.25} parent=31 // pred_fallthru
              _
          $region32: #{netG_forward.25} parent=27 // pred_fallthru
            _
          %280 = vnop
        $region28: #{netG_forward.25} parent=23 // pred_fallthru
          _
      $region24: #{netG_forward.25} parent=5 // pred_fallthru
        _
      %p281 = scmp.le.s32.totalorder 1, %s9
      %p282 = scmp.lt.s32.totalorder %s9, 5
      %p283 = pnand %p281, %p282
      %p284 = pneg %p283
      // Predicated region
      $region48: #{netG_forward.25} parent=5 // pred_check
        _
      $region49: #{netG_forward.25} parent=5 // pred_check_branch
        %286 = sbr.rel (%p283) target = $region51
      $region50: #{netG_forward.25} parent=5 // pred_region
        %s287 = ssub.s32 %s9, 1
        %s288 = sand.u32 %s43, 1
        %s289 = sand.u32 %s43, 1
        %s290 = smul.addr %s289, 512
        %s291 = scalar_lea.vmem [#allocation2], %s290
        // Predicated region
        $region52: #{netG_forward.25} parent=50 // pred_check
          %p292 = pneg %p56
        $region53: #{netG_forward.25} parent=50 // pred_check_branch
          %294 = sbr.rel (%p292) target = $region55
        $region54: #{netG_forward.25} parent=50 // pred_region
          _
        $region55: #{netG_forward.25} parent=50 // pred_fallthru
          _
        %p295 = pneg %p30
        %p296 = pneg %p27
        %s297 = sand.u32 %s43, 1
        %s298 = sand.u32 %s43, 1
        %s299 = smul.addr %s298, 512
        %s300 = scalar_lea.vmem [#allocation2], %s299
        %p301 = pneg %p56
        %p302 = pneg %p53
        %p303 = pneg %p77
        %p304 = pneg %p74
        %p305 = pneg %p103
        %p306 = pneg %p100
        %s307 = smul.u32 16, %s14
        %p308 = scmp.lt.s32.totalorder %s307, 63
        %s309 = scalar_select %p308, %s307, 63
        %s310 = smul.addr %s309, 2
        %s311 = scalar_lea.vmem %s3, %s310
        %s312 = smul.u32 16, %s14
        %s313 = smul.u32 16, %s14
        %p314 = scmp.lt.s32.totalorder %s313, 63
        %s315 = scalar_select %p314, %s313, 63
        %s316 = smul.addr %s315, 2
        %s317 = scalar_lea.vmem %s3, %s316
        %s318 = smul.u32 16, %s14
        %v320 = vld [vmem:[%s0] sm:$0x3]
        %v321 = vld [vmem:[%s291] sm:$0xff]
        %v322 = vld [vmem:[%s291 + $0x8] sm:$0xff]
        %v323 = vld [vmem:[%s291 + $0x10] sm:$0xff]
        %v324 = vld [vmem:[%s291 + $0x18] sm:$0xff]
        %v325 = vld [vmem:[%s291 + $0x20] sm:$0xff]
        %v326 = vld [vmem:[%s291 + $0x28] sm:$0xff]
        %v327 = vld [vmem:[%s291 + $0x30] sm:$0xff]
        %v328 = vld [vmem:[%s291 + $0x38] sm:$0xff]
        %v329 = vld [vmem:[%s291 + $0x40] sm:$0xff]
        %v330 = vld [vmem:[%s291 + $0x48] sm:$0xff]
        %v331 = vld [vmem:[%s291 + $0x50] sm:$0xff]
        %v332 = vld [vmem:[%s291 + $0x58] sm:$0xff]
        %v333 = vld [vmem:[%s291 + $0x60] sm:$0xff]
        %v334 = vld [vmem:[%s291 + $0x68] sm:$0xff]
        %v335 = vld [vmem:[%s291 + $0x70] sm:$0xff]
        %v336 = vld [vmem:[%s291 + $0x78] sm:$0xff]
        %v337 = vld [vmem:[%s291 + $0x80] sm:$0xff]
        %v338 = vld [vmem:[%s291 + $0x88] sm:$0xff]
        %v339 = vld [vmem:[%s291 + $0x90] sm:$0xff]
        %v340 = vld [vmem:[%s291 + $0x98] sm:$0xff]
        %v341 = vld [vmem:[%s291 + $0xa0] sm:$0xff]
        %v342 = vld [vmem:[%s291 + $0xa8] sm:$0xff]
        %v343 = vld [vmem:[%s291 + $0xb0] sm:$0xff]
        %v344 = vld [vmem:[%s291 + $0xb8] sm:$0xff]
        %v345 = vld [vmem:[%s291 + $0xc0] sm:$0xff]
        %v346 = vld [vmem:[%s291 + $0xc8] sm:$0xff]
        %v347 = vld [vmem:[%s291 + $0xd0] sm:$0xff]
        %v348 = vld [vmem:[%s291 + $0xd8] sm:$0xff]
        %v349 = vld [vmem:[%s291 + $0xe0] sm:$0xff]
        %v350 = vld [vmem:[%s291 + $0xe8] sm:$0xff]
        %v351 = vld [vmem:[%s291 + $0xf0] sm:$0xff]
        %v352 = vld [vmem:[%s291 + $0xf8] sm:$0xff]
        %v353 = vld [vmem:[%s291 + $0x100] sm:$0xff]
        %v354 = vld [vmem:[%s291 + $0x108] sm:$0xff]
        %v355 = vld [vmem:[%s291 + $0x110] sm:$0xff]
        %v356 = vld [vmem:[%s291 + $0x118] sm:$0xff]
        %v357 = vld [vmem:[%s291 + $0x120] sm:$0xff]
        %v358 = vld [vmem:[%s291 + $0x128] sm:$0xff]
        %v359 = vld [vmem:[%s291 + $0x130] sm:$0xff]
        %v360 = vld [vmem:[%s291 + $0x138] sm:$0xff]
        %v361 = vld [vmem:[%s291 + $0x140] sm:$0xff]
        %v362 = vld [vmem:[%s291 + $0x148] sm:$0xff]
        %v363 = vld [vmem:[%s291 + $0x150] sm:$0xff]
        %v364 = vld [vmem:[%s291 + $0x158] sm:$0xff]
        %v365 = vld [vmem:[%s291 + $0x160] sm:$0xff]
        %v366 = vld [vmem:[%s291 + $0x168] sm:$0xff]
        %v367 = vld [vmem:[%s291 + $0x170] sm:$0xff]
        %v368 = vld [vmem:[%s291 + $0x178] sm:$0xff]
        %v369 = vld [vmem:[%s291 + $0x180] sm:$0xff]
        %v370 = vld [vmem:[%s291 + $0x188] sm:$0xff]
        %v371 = vld [vmem:[%s291 + $0x190] sm:$0xff]
        %v372 = vld [vmem:[%s291 + $0x198] sm:$0xff]
        %v373 = vld [vmem:[%s291 + $0x1a0] sm:$0xff]
        %v374 = vld [vmem:[%s291 + $0x1a8] sm:$0xff]
        %v375 = vld [vmem:[%s291 + $0x1b0] sm:$0xff]
        %v376 = vld [vmem:[%s291 + $0x1b8] sm:$0xff]
        %v377 = vld [vmem:[%s291 + $0x1c0] sm:$0xff]
        %v378 = vld [vmem:[%s291 + $0x1c8] sm:$0xff]
        %v379 = vld [vmem:[%s291 + $0x1d0] sm:$0xff]
        %v380 = vld [vmem:[%s291 + $0x1d8] sm:$0xff]
        %v381 = vld [vmem:[%s291 + $0x1e0] sm:$0xff]
        %v382 = vld [vmem:[%s291 + $0x1e8] sm:$0xff]
        %v383 = vld [vmem:[%s291 + $0x1f0] sm:$0xff]
        %v384 = vld [vmem:[%s291 + $0x1f8] sm:$0xff]
        %v385 = vld [vmem:[%s2] sm:$0xf]
        %387 = vset.pattern.permute.xlu0 0
        %388 = vperm.xlu0 %387, %v385
        %v389 = vpop.permute.xlu0 %388
        %v455 = vunpack.c.l.b16 %v321
        %v456 = vunpack.c.h.b16 %v321
        %v457 = vunpack.c.l.b16 %v322
        %v458 = vunpack.c.h.b16 %v322
        %v459 = vunpack.c.l.b16 %v323
        %v460 = vunpack.c.h.b16 %v323
        %v461 = vunpack.c.l.b16 %v324
        %v462 = vunpack.c.h.b16 %v324
        %v463 = vunpack.c.l.b16 %v325
        %v464 = vunpack.c.h.b16 %v325
        %v465 = vunpack.c.l.b16 %v326
        %v466 = vunpack.c.h.b16 %v326
        %v467 = vunpack.c.l.b16 %v327
        %v468 = vunpack.c.h.b16 %v327
        %v469 = vunpack.c.l.b16 %v328
        %v470 = vunpack.c.h.b16 %v328
        %v471 = vunpack.c.l.b16 %v329
        %v472 = vunpack.c.h.b16 %v329
        %v473 = vunpack.c.l.b16 %v330
        %v474 = vunpack.c.h.b16 %v330
        %v475 = vunpack.c.l.b16 %v331
        %v476 = vunpack.c.h.b16 %v331
        %v477 = vunpack.c.l.b16 %v332
        %v478 = vunpack.c.h.b16 %v332
        %v479 = vunpack.c.l.b16 %v333
        %v480 = vunpack.c.h.b16 %v333
        %v481 = vunpack.c.l.b16 %v334
        %v482 = vunpack.c.h.b16 %v334
        %v483 = vunpack.c.l.b16 %v335
        %v484 = vunpack.c.h.b16 %v335
        %v485 = vunpack.c.l.b16 %v336
        %v486 = vunpack.c.h.b16 %v336
        %v487 = vunpack.c.l.b16 %v337
        %v488 = vunpack.c.h.b16 %v337
        %v489 = vunpack.c.l.b16 %v338
        %v490 = vunpack.c.h.b16 %v338
        %v491 = vunpack.c.l.b16 %v339
        %v492 = vunpack.c.h.b16 %v339
        %v493 = vunpack.c.l.b16 %v340
        %v494 = vunpack.c.h.b16 %v340
        %v495 = vunpack.c.l.b16 %v341
        %v496 = vunpack.c.h.b16 %v341
        %v497 = vunpack.c.l.b16 %v342
        %v498 = vunpack.c.h.b16 %v342
        %v499 = vunpack.c.l.b16 %v343
        %v500 = vunpack.c.h.b16 %v343
        %v501 = vunpack.c.l.b16 %v344
        %v502 = vunpack.c.h.b16 %v344
        %v503 = vunpack.c.l.b16 %v345
        %v504 = vunpack.c.h.b16 %v345
        %v505 = vunpack.c.l.b16 %v346
        %v506 = vunpack.c.h.b16 %v346
        %v507 = vunpack.c.l.b16 %v347
        %v508 = vunpack.c.h.b16 %v347
        %v509 = vunpack.c.l.b16 %v348
        %v510 = vunpack.c.h.b16 %v348
        %v511 = vunpack.c.l.b16 %v349
        %v512 = vunpack.c.h.b16 %v349
        %v513 = vunpack.c.l.b16 %v350
        %v514 = vunpack.c.h.b16 %v350
        %v515 = vunpack.c.l.b16 %v351
        %v516 = vunpack.c.h.b16 %v351
        %v517 = vunpack.c.l.b16 %v352
        %v518 = vunpack.c.h.b16 %v352
        %v519 = vunpack.c.l.b16 %v353
        %v520 = vunpack.c.h.b16 %v353
        %v521 = vunpack.c.l.b16 %v354
        %v522 = vunpack.c.h.b16 %v354
        %v523 = vunpack.c.l.b16 %v355
        %v524 = vunpack.c.h.b16 %v355
        %v525 = vunpack.c.l.b16 %v356
        %v526 = vunpack.c.h.b16 %v356
        %v527 = vunpack.c.l.b16 %v357
        %v528 = vunpack.c.h.b16 %v357
        %v529 = vunpack.c.l.b16 %v358
        %v530 = vunpack.c.h.b16 %v358
        %v531 = vunpack.c.l.b16 %v359
        %v532 = vunpack.c.h.b16 %v359
        %v533 = vunpack.c.l.b16 %v360
        %v534 = vunpack.c.h.b16 %v360
        %v535 = vunpack.c.l.b16 %v361
        %v536 = vunpack.c.h.b16 %v361
        %v537 = vunpack.c.l.b16 %v362
        %v538 = vunpack.c.h.b16 %v362
        %v539 = vunpack.c.l.b16 %v363
        %v540 = vunpack.c.h.b16 %v363
        %v541 = vunpack.c.l.b16 %v364
        %v542 = vunpack.c.h.b16 %v364
        %v543 = vunpack.c.l.b16 %v365
        %v544 = vunpack.c.h.b16 %v365
        %v545 = vunpack.c.l.b16 %v366
        %v546 = vunpack.c.h.b16 %v366
        %v547 = vunpack.c.l.b16 %v367
        %v548 = vunpack.c.h.b16 %v367
        %v549 = vunpack.c.l.b16 %v368
        %v550 = vunpack.c.h.b16 %v368
        %v551 = vunpack.c.l.b16 %v369
        %v552 = vunpack.c.h.b16 %v369
        %v553 = vunpack.c.l.b16 %v370
        %v554 = vunpack.c.h.b16 %v370
        %v555 = vunpack.c.l.b16 %v371
        %v556 = vunpack.c.h.b16 %v371
        %v557 = vunpack.c.l.b16 %v372
        %v558 = vunpack.c.h.b16 %v372
        %v559 = vunpack.c.l.b16 %v373
        %v560 = vunpack.c.h.b16 %v373
        %v561 = vunpack.c.l.b16 %v374
        %v562 = vunpack.c.h.b16 %v374
        %v563 = vunpack.c.l.b16 %v375
        %v564 = vunpack.c.h.b16 %v375
        %v565 = vunpack.c.l.b16 %v376
        %v566 = vunpack.c.h.b16 %v376
        %v567 = vunpack.c.l.b16 %v377
        %v568 = vunpack.c.h.b16 %v377
        %v569 = vunpack.c.l.b16 %v378
        %v570 = vunpack.c.h.b16 %v378
        %v571 = vunpack.c.l.b16 %v379
        %v572 = vunpack.c.h.b16 %v379
        %v573 = vunpack.c.l.b16 %v380
        %v574 = vunpack.c.h.b16 %v380
        %v575 = vunpack.c.l.b16 %v381
        %v576 = vunpack.c.h.b16 %v381
        %v577 = vunpack.c.l.b16 %v382
        %v578 = vunpack.c.h.b16 %v382
        %v579 = vunpack.c.l.b16 %v383
        %v580 = vunpack.c.h.b16 %v383
        %v581 = vunpack.c.l.b16 %v384
        %v582 = vunpack.c.h.b16 %v384
        %v583 = vpack.c.b16 %v471, %v455
        %v584 = vpack.c.b16 %v472, %v456
        %v585 = vpack.c.b16 %v473, %v457
        %v586 = vpack.c.b16 %v474, %v458
        %v587 = vpack.c.b16 %v475, %v459
        %v588 = vpack.c.b16 %v476, %v460
        %v589 = vpack.c.b16 %v477, %v461
        %v590 = vpack.c.b16 %v478, %v462
        %v591 = vpack.c.b16 %v479, %v463
        %v592 = vpack.c.b16 %v480, %v464
        %v593 = vpack.c.b16 %v481, %v465
        %v594 = vpack.c.b16 %v482, %v466
        %v595 = vpack.c.b16 %v483, %v467
        %v596 = vpack.c.b16 %v484, %v468
        %v597 = vpack.c.b16 %v485, %v469
        %v598 = vpack.c.b16 %v486, %v470
        %v599 = vpack.c.b16 %v503, %v487
        %v600 = vpack.c.b16 %v504, %v488
        %v601 = vpack.c.b16 %v505, %v489
        %v602 = vpack.c.b16 %v506, %v490
        %v603 = vpack.c.b16 %v507, %v491
        %v604 = vpack.c.b16 %v508, %v492
        %v605 = vpack.c.b16 %v509, %v493
        %v606 = vpack.c.b16 %v510, %v494
        %v607 = vpack.c.b16 %v511, %v495
        %v608 = vpack.c.b16 %v512, %v496
        %v609 = vpack.c.b16 %v513, %v497
        %v610 = vpack.c.b16 %v514, %v498
        %v611 = vpack.c.b16 %v515, %v499
        %v612 = vpack.c.b16 %v516, %v500
        %v613 = vpack.c.b16 %v517, %v501
        %v614 = vpack.c.b16 %v518, %v502
        %v615 = vpack.c.b16 %v535, %v519
        %v616 = vpack.c.b16 %v536, %v520
        %v617 = vpack.c.b16 %v537, %v521
        %v618 = vpack.c.b16 %v538, %v522
        %v619 = vpack.c.b16 %v539, %v523
        %v620 = vpack.c.b16 %v540, %v524
        %v621 = vpack.c.b16 %v541, %v525
        %v622 = vpack.c.b16 %v542, %v526
        %v623 = vpack.c.b16 %v543, %v527
        %v624 = vpack.c.b16 %v544, %v528
        %v625 = vpack.c.b16 %v545, %v529
        %v626 = vpack.c.b16 %v546, %v530
        %v627 = vpack.c.b16 %v547, %v531
        %v628 = vpack.c.b16 %v548, %v532
        %v629 = vpack.c.b16 %v549, %v533
        %v630 = vpack.c.b16 %v550, %v534
        %v631 = vpack.c.b16 %v567, %v551
        %v632 = vpack.c.b16 %v568, %v552
        %v633 = vpack.c.b16 %v569, %v553
        %v634 = vpack.c.b16 %v570, %v554
        %v635 = vpack.c.b16 %v571, %v555
        %v636 = vpack.c.b16 %v572, %v556
        %v637 = vpack.c.b16 %v573, %v557
        %v638 = vpack.c.b16 %v574, %v558
        %v639 = vpack.c.b16 %v575, %v559
        %v640 = vpack.c.b16 %v576, %v560
        %v641 = vpack.c.b16 %v577, %v561
        %v642 = vpack.c.b16 %v578, %v562
        %v643 = vpack.c.b16 %v579, %v563
        %v644 = vpack.c.b16 %v580, %v564
        %v645 = vpack.c.b16 %v581, %v565
        %v646 = vpack.c.b16 %v582, %v566
        %vm711 = vcmask 523264
        %v713 = vsel %vm711, %v320, 0
        %715 = vmatprep.subr.bf16.mxu0 %v584
        %716 = vmatpush1.bf16.msra.mxu0 %v583
        %717 = vmatprep.subr.bf16.mxu0 %v600
        %718 = vmatpush1.bf16.msra.mxu0 %v599
        %719 = vmatprep.subr.bf16.mxu0 %v616
        %720 = vmatpush1.bf16.msra.mxu0 %v615
        %721 = vmatprep.subr.bf16.mxu0 %v632
        %722 = vmatpush1.bf16.msra.mxu0 %v631
        %723 = vmatprep.subr.bf16.mxu0 0
        %724 = vmatpush1.bf16.msra.mxu0 0
        %725 = vmatprep.subr.bf16.mxu0 0
        %726 = vmatpush1.bf16.msra.mxu0 0
        %727 = vmatprep.subr.bf16.mxu0 0
        %728 = vmatpush1.bf16.msra.mxu0 0
        %729 = vmatprep.subr.bf16.mxu0 0
        %730 = vmatpush1.bf16.msra.mxu0 0
        %731 = vmatprep.subr.bf16.mxu0 0
        %732 = vmatpush1.bf16.msra.mxu0 0
        %733 = vmatprep.subr.bf16.mxu0 0
        %734 = vmatpush1.bf16.msra.mxu0 0
        %735 = vmatprep.subr.bf16.mxu0 0
        %736 = vmatpush1.bf16.msra.mxu0 0
        %737 = vmatprep.subr.bf16.mxu0 0
        %738 = vmatpush1.bf16.msra.mxu0 0
        %739 = vmatprep.subr.bf16.mxu0 0
        %740 = vmatpush1.bf16.msra.mxu0 0
        %741 = vmatprep.subr.bf16.mxu0 0
        %742 = vmatpush1.bf16.msra.mxu0 0
        %743 = vmatprep.subr.bf16.mxu0 0
        %744 = vmatpush1.bf16.msra.mxu0 0
        %745 = vmatprep.subr.bf16.mxu0 0
        %746 = vmatpush1.bf16.msra.mxu0 0
        %747 = vmatprep.mubr.bf16.mxu0 0
        %748 = vmatmul.mubr.bf16.gmra.mrb[0].mxu0 %v713
        %v749 = vpop.f32.mrb[0].mxu0
        %v750 = vadd.f32 %v389, %v749
        %v751 = vpop.f32.mrb[0].mxu0
        %v752 = vadd.f32 %v389, %v751
        %v753 = vpop.f32.mrb[0].mxu0
        %v754 = vpop.f32.mrb[0].mxu0
        %755 = vdwg.mxu0
        %756 = vmatprep.subr.bf16.mxu0 %v586
        %757 = vmatpush1.bf16.msra.mxu0 %v585
        %758 = vmatprep.subr.bf16.mxu0 %v602
        %759 = vmatpush1.bf16.msra.mxu0 %v601
        %760 = vmatprep.subr.bf16.mxu0 %v618
        %761 = vmatpush1.bf16.msra.mxu0 %v617
        %762 = vmatprep.subr.bf16.mxu0 %v634
        %763 = vmatpush1.bf16.msra.mxu0 %v633
        %764 = vmatprep.subr.bf16.mxu0 0
        %765 = vmatpush1.bf16.msra.mxu0 0
        %766 = vmatprep.subr.bf16.mxu0 0
        %767 = vmatpush1.bf16.msra.mxu0 0
        %768 = vmatprep.subr.bf16.mxu0 0
        %769 = vmatpush1.bf16.msra.mxu0 0
        %770 = vmatprep.subr.bf16.mxu0 0
        %771 = vmatpush1.bf16.msra.mxu0 0
        %772 = vmatprep.subr.bf16.mxu0 0
        %773 = vmatpush1.bf16.msra.mxu0 0
        %774 = vmatprep.subr.bf16.mxu0 0
        %775 = vmatpush1.bf16.msra.mxu0 0
        %776 = vmatprep.subr.bf16.mxu0 0
        %777 = vmatpush1.bf16.msra.mxu0 0
        %778 = vmatprep.subr.bf16.mxu0 0
        %779 = vmatpush1.bf16.msra.mxu0 0
        %780 = vmatprep.subr.bf16.mxu0 0
        %781 = vmatpush1.bf16.msra.mxu0 0
        %782 = vmatprep.subr.bf16.mxu0 0
        %783 = vmatpush1.bf16.msra.mxu0 0
        %784 = vmatprep.subr.bf16.mxu0 0
        %785 = vmatpush1.bf16.msra.mxu0 0
        %786 = vmatprep.subr.bf16.mxu0 0
        %787 = vmatpush1.bf16.msra.mxu0 0
        %788 = vmatprep.mubr.bf16.mxu0 0
        %789 = vmatmul.mubr.bf16.gmra.mrb[0].mxu0 %v713
        %v790 = vpop.f32.mrb[0].mxu0
        %v791 = vadd.f32 %v389, %v790
        %v792 = vpop.f32.mrb[0].mxu0
        %v793 = vadd.f32 %v389, %v792
        %v794 = vpop.f32.mrb[0].mxu0
        %v795 = vpop.f32.mrb[0].mxu0
        %796 = vdwg.mxu0
        %797 = vmatprep.subr.bf16.mxu0 %v588
        %798 = vmatpush1.bf16.msra.mxu0 %v587
        %799 = vmatprep.subr.bf16.mxu0 %v604
        %800 = vmatpush1.bf16.msra.mxu0 %v603
        %801 = vmatprep.subr.bf16.mxu0 %v620
        %802 = vmatpush1.bf16.msra.mxu0 %v619
        %803 = vmatprep.subr.bf16.mxu0 %v636
        %804 = vmatpush1.bf16.msra.mxu0 %v635
        %805 = vmatprep.subr.bf16.mxu0 0
        %806 = vmatpush1.bf16.msra.mxu0 0
        %807 = vmatprep.subr.bf16.mxu0 0
        %808 = vmatpush1.bf16.msra.mxu0 0
        %809 = vmatprep.subr.bf16.mxu0 0
        %810 = vmatpush1.bf16.msra.mxu0 0
        %811 = vmatprep.subr.bf16.mxu0 0
        %812 = vmatpush1.bf16.msra.mxu0 0
        %813 = vmatprep.subr.bf16.mxu0 0
        %814 = vmatpush1.bf16.msra.mxu0 0
        %815 = vmatprep.subr.bf16.mxu0 0
        %816 = vmatpush1.bf16.msra.mxu0 0
        %817 = vmatprep.subr.bf16.mxu0 0
        %818 = vmatpush1.bf16.msra.mxu0 0
        %819 = vmatprep.subr.bf16.mxu0 0
        %820 = vmatpush1.bf16.msra.mxu0 0
        %821 = vmatprep.subr.bf16.mxu0 0
        %822 = vmatpush1.bf16.msra.mxu0 0
        %823 = vmatprep.subr.bf16.mxu0 0
        %824 = vmatpush1.bf16.msra.mxu0 0
        %825 = vmatprep.subr.bf16.mxu0 0
        %826 = vmatpush1.bf16.msra.mxu0 0
        %827 = vmatprep.subr.bf16.mxu0 0
        %828 = vmatpush1.bf16.msra.mxu0 0
        %829 = vmatprep.mubr.bf16.mxu0 0
        %830 = vmatmul.mubr.bf16.gmra.mrb[0].mxu0 %v713
        %v831 = vpop.f32.mrb[0].mxu0
        %v832 = vadd.f32 %v389, %v831
        %v833 = vpop.f32.mrb[0].mxu0
        %v834 = vadd.f32 %v389, %v833
        %v835 = vpop.f32.mrb[0].mxu0
        %v836 = vpop.f32.mrb[0].mxu0
        %837 = vdwg.mxu0
        %838 = vmatprep.subr.bf16.mxu0 %v590
        %839 = vmatpush1.bf16.msra.mxu0 %v589
        %840 = vmatprep.subr.bf16.mxu0 %v606
        %841 = vmatpush1.bf16.msra.mxu0 %v605
        %842 = vmatprep.subr.bf16.mxu0 %v622
        %843 = vmatpush1.bf16.msra.mxu0 %v621
        %844 = vmatprep.subr.bf16.mxu0 %v638
        %845 = vmatpush1.bf16.msra.mxu0 %v637
        %846 = vmatprep.subr.bf16.mxu0 0
        %847 = vmatpush1.bf16.msra.mxu0 0
        %848 = vmatprep.subr.bf16.mxu0 0
        %849 = vmatpush1.bf16.msra.mxu0 0
        %850 = vmatprep.subr.bf16.mxu0 0
        %851 = vmatpush1.bf16.msra.mxu0 0
        %852 = vmatprep.subr.bf16.mxu0 0
        %853 = vmatpush1.bf16.msra.mxu0 0
        %854 = vmatprep.subr.bf16.mxu0 0
        %855 = vmatpush1.bf16.msra.mxu0 0
        %856 = vmatprep.subr.bf16.mxu0 0
        %857 = vmatpush1.bf16.msra.mxu0 0
        %858 = vmatprep.subr.bf16.mxu0 0
        %859 = vmatpush1.bf16.msra.mxu0 0
        %860 = vmatprep.subr.bf16.mxu0 0
        %861 = vmatpush1.bf16.msra.mxu0 0
        %862 = vmatprep.subr.bf16.mxu0 0
        %863 = vmatpush1.bf16.msra.mxu0 0
        %864 = vmatprep.subr.bf16.mxu0 0
        %865 = vmatpush1.bf16.msra.mxu0 0
        %866 = vmatprep.subr.bf16.mxu0 0
        %867 = vmatpush1.bf16.msra.mxu0 0
        %868 = vmatprep.subr.bf16.mxu0 0
        %869 = vmatpush1.bf16.msra.mxu0 0
        %870 = vmatprep.mubr.bf16.mxu0 0
        %871 = vmatmul.mubr.bf16.gmra.mrb[0].mxu0 %v713
        %v872 = vpop.f32.mrb[0].mxu0
        %v873 = vadd.f32 %v389, %v872
        %v874 = vpop.f32.mrb[0].mxu0
        %v875 = vadd.f32 %v389, %v874
        %v876 = vpop.f32.mrb[0].mxu0
        %v877 = vpop.f32.mrb[0].mxu0
        %878 = vdwg.mxu0
        %879 = vmatprep.subr.bf16.mxu0 %v592
        %880 = vmatpush1.bf16.msra.mxu0 %v591
        %881 = vmatprep.subr.bf16.mxu0 %v608
        %882 = vmatpush1.bf16.msra.mxu0 %v607
        %883 = vmatprep.subr.bf16.mxu0 %v624
        %884 = vmatpush1.bf16.msra.mxu0 %v623
        %885 = vmatprep.subr.bf16.mxu0 %v640
        %886 = vmatpush1.bf16.msra.mxu0 %v639
        %887 = vmatprep.subr.bf16.mxu0 0
        %888 = vmatpush1.bf16.msra.mxu0 0
        %889 = vmatprep.subr.bf16.mxu0 0
        %890 = vmatpush1.bf16.msra.mxu0 0
        %891 = vmatprep.subr.bf16.mxu0 0
        %892 = vmatpush1.bf16.msra.mxu0 0
        %893 = vmatprep.subr.bf16.mxu0 0
        %894 = vmatpush1.bf16.msra.mxu0 0
        %895 = vmatprep.subr.bf16.mxu0 0
        %896 = vmatpush1.bf16.msra.mxu0 0
        %897 = vmatprep.subr.bf16.mxu0 0
        %898 = vmatpush1.bf16.msra.mxu0 0
        %899 = vmatprep.subr.bf16.mxu0 0
        %900 = vmatpush1.bf16.msra.mxu0 0
        %901 = vmatprep.subr.bf16.mxu0 0
        %902 = vmatpush1.bf16.msra.mxu0 0
        %903 = vmatprep.subr.bf16.mxu0 0
        %904 = vmatpush1.bf16.msra.mxu0 0
        %905 = vmatprep.subr.bf16.mxu0 0
        %906 = vmatpush1.bf16.msra.mxu0 0
        %907 = vmatprep.subr.bf16.mxu0 0
        %908 = vmatpush1.bf16.msra.mxu0 0
        %909 = vmatprep.subr.bf16.mxu0 0
        %910 = vmatpush1.bf16.msra.mxu0 0
        %911 = vmatprep.mubr.bf16.mxu0 0
        %912 = vmatmul.mubr.bf16.gmra.mrb[0].mxu0 %v713
        %v913 = vpop.f32.mrb[0].mxu0
        %v914 = vadd.f32 %v389, %v913
        %v915 = vpop.f32.mrb[0].mxu0
        %v916 = vadd.f32 %v389, %v915
        %v917 = vpop.f32.mrb[0].mxu0
        %v918 = vpop.f32.mrb[0].mxu0
        %919 = vdwg.mxu0
        %920 = vmatprep.subr.bf16.mxu0 %v594
        %921 = vmatpush1.bf16.msra.mxu0 %v593
        %922 = vmatprep.subr.bf16.mxu0 %v610
        %923 = vmatpush1.bf16.msra.mxu0 %v609
        %924 = vmatprep.subr.bf16.mxu0 %v626
        %925 = vmatpush1.bf16.msra.mxu0 %v625
        %926 = vmatprep.subr.bf16.mxu0 %v642
        %927 = vmatpush1.bf16.msra.mxu0 %v641
        %928 = vmatprep.subr.bf16.mxu0 0
        %929 = vmatpush1.bf16.msra.mxu0 0
        %930 = vmatprep.subr.bf16.mxu0 0
        %931 = vmatpush1.bf16.msra.mxu0 0
        %932 = vmatprep.subr.bf16.mxu0 0
        %933 = vmatpush1.bf16.msra.mxu0 0
        %934 = vmatprep.subr.bf16.mxu0 0
        %935 = vmatpush1.bf16.msra.mxu0 0
        %936 = vmatprep.subr.bf16.mxu0 0
        %937 = vmatpush1.bf16.msra.mxu0 0
        %938 = vmatprep.subr.bf16.mxu0 0
        %939 = vmatpush1.bf16.msra.mxu0 0
        %940 = vmatprep.subr.bf16.mxu0 0
        %941 = vmatpush1.bf16.msra.mxu0 0
        %942 = vmatprep.subr.bf16.mxu0 0
        %943 = vmatpush1.bf16.msra.mxu0 0
        %944 = vmatprep.subr.bf16.mxu0 0
        %945 = vmatpush1.bf16.msra.mxu0 0
        %946 = vmatprep.subr.bf16.mxu0 0
        %947 = vmatpush1.bf16.msra.mxu0 0
        %948 = vmatprep.subr.bf16.mxu0 0
        %949 = vmatpush1.bf16.msra.mxu0 0
        %950 = vmatprep.subr.bf16.mxu0 0
        %951 = vmatpush1.bf16.msra.mxu0 0
        %952 = vmatprep.mubr.bf16.mxu0 0
        %953 = vmatmul.mubr.bf16.gmra.mrb[0].mxu0 %v713
        %v954 = vpop.f32.mrb[0].mxu0
        %v955 = vadd.f32 %v389, %v954
        %v956 = vpop.f32.mrb[0].mxu0
        %v957 = vadd.f32 %v389, %v956
        %v958 = vpop.f32.mrb[0].mxu0
        %v959 = vpop.f32.mrb[0].mxu0
        %960 = vdwg.mxu0
        %961 = vmatprep.subr.bf16.mxu0 %v596
        %962 = vmatpush1.bf16.msra.mxu0 %v595
        %963 = vmatprep.subr.bf16.mxu0 %v612
        %964 = vmatpush1.bf16.msra.mxu0 %v611
        %965 = vmatprep.subr.bf16.mxu0 %v628
        %966 = vmatpush1.bf16.msra.mxu0 %v627
        %967 = vmatprep.subr.bf16.mxu0 %v644
        %968 = vmatpush1.bf16.msra.mxu0 %v643
        %969 = vmatprep.subr.bf16.mxu0 0
        %970 = vmatpush1.bf16.msra.mxu0 0
        %971 = vmatprep.subr.bf16.mxu0 0
        %972 = vmatpush1.bf16.msra.mxu0 0
        %973 = vmatprep.subr.bf16.mxu0 0
        %974 = vmatpush1.bf16.msra.mxu0 0
        %975 = vmatprep.subr.bf16.mxu0 0
        %976 = vmatpush1.bf16.msra.mxu0 0
        %977 = vmatprep.subr.bf16.mxu0 0
        %978 = vmatpush1.bf16.msra.mxu0 0
        %979 = vmatprep.subr.bf16.mxu0 0
        %980 = vmatpush1.bf16.msra.mxu0 0
        %981 = vmatprep.subr.bf16.mxu0 0
        %982 = vmatpush1.bf16.msra.mxu0 0
        %983 = vmatprep.subr.bf16.mxu0 0
        %984 = vmatpush1.bf16.msra.mxu0 0
        %985 = vmatprep.subr.bf16.mxu0 0
        %986 = vmatpush1.bf16.msra.mxu0 0
        %987 = vmatprep.subr.bf16.mxu0 0
        %988 = vmatpush1.bf16.msra.mxu0 0
        %989 = vmatprep.subr.bf16.mxu0 0
        %990 = vmatpush1.bf16.msra.mxu0 0
        %991 = vmatprep.subr.bf16.mxu0 0
        %992 = vmatpush1.bf16.msra.mxu0 0
        %993 = vmatprep.mubr.bf16.mxu0 0
        %994 = vmatmul.mubr.bf16.gmra.mrb[0].mxu0 %v713
        %v995 = vpop.f32.mrb[0].mxu0
        %v996 = vadd.f32 %v389, %v995
        %v997 = vpop.f32.mrb[0].mxu0
        %v998 = vadd.f32 %v389, %v997
        %v999 = vpop.f32.mrb[0].mxu0
        %v1000 = vpop.f32.mrb[0].mxu0
        %1001 = vdwg.mxu0
        %1002 = vmatprep.subr.bf16.mxu0 %v598
        %1003 = vmatpush1.bf16.msra.mxu0 %v597
        %1004 = vmatprep.subr.bf16.mxu0 %v614
        %1005 = vmatpush1.bf16.msra.mxu0 %v613
        %1006 = vmatprep.subr.bf16.mxu0 %v630
        %1007 = vmatpush1.bf16.msra.mxu0 %v629
        %1008 = vmatprep.subr.bf16.mxu0 %v646
        %1009 = vmatpush1.bf16.msra.mxu0 %v645
        %1010 = vmatprep.subr.bf16.mxu0 0
        %1011 = vmatpush1.bf16.msra.mxu0 0
        %1012 = vmatprep.subr.bf16.mxu0 0
        %1013 = vmatpush1.bf16.msra.mxu0 0
        %1014 = vmatprep.subr.bf16.mxu0 0
        %1015 = vmatpush1.bf16.msra.mxu0 0
        %1016 = vmatprep.subr.bf16.mxu0 0
        %1017 = vmatpush1.bf16.msra.mxu0 0
        %1018 = vmatprep.subr.bf16.mxu0 0
        %1019 = vmatpush1.bf16.msra.mxu0 0
        %1020 = vmatprep.subr.bf16.mxu0 0
        %1021 = vmatpush1.bf16.msra.mxu0 0
        %1022 = vmatprep.subr.bf16.mxu0 0
        %1023 = vmatpush1.bf16.msra.mxu0 0
        %1024 = vmatprep.subr.bf16.mxu0 0
        %1025 = vmatpush1.bf16.msra.mxu0 0
        %1026 = vmatprep.subr.bf16.mxu0 0
        %1027 = vmatpush1.bf16.msra.mxu0 0
        %1028 = vmatprep.subr.bf16.mxu0 0
        %1029 = vmatpush1.bf16.msra.mxu0 0
        %1030 = vmatprep.subr.bf16.mxu0 0
        %1031 = vmatpush1.bf16.msra.mxu0 0
        %1032 = vmatprep.subr.bf16.mxu0 0
        %1033 = vmatpush1.bf16.msra.mxu0 0
        %1034 = vmatprep.mubr.bf16.mxu0 0
        %1035 = vmatmul.mubr.bf16.gmra.mrb[0].mxu0 %v713
        %v1036 = vpop.f32.mrb[0].mxu0
        %v1037 = vadd.f32 %v389, %v1036
        %v1038 = vpop.f32.mrb[0].mxu0
        %v1039 = vadd.f32 %v389, %v1038
        %v1040 = vpop.f32.mrb[0].mxu0
        %v1041 = vpop.f32.mrb[0].mxu0
        %1042 = vdwg.mxu0
        %vm1043 = vcmp.gt.f32.partialorder %v750, 0.0
        %vm1044 = vcmp.gt.f32.partialorder %v752, 0.0
        %vm1045 = vcmp.gt.f32.partialorder %v791, 0.0
        %vm1046 = vcmp.gt.f32.partialorder %v793, 0.0
        %vm1047 = vcmp.gt.f32.partialorder %v832, 0.0
        %vm1048 = vcmp.gt.f32.partialorder %v834, 0.0
        %vm1049 = vcmp.gt.f32.partialorder %v873, 0.0
        %vm1050 = vcmp.gt.f32.partialorder %v875, 0.0
        %vm1051 = vcmp.gt.f32.partialorder %v914, 0.0
        %vm1052 = vcmp.gt.f32.partialorder %v916, 0.0
        %vm1053 = vcmp.gt.f32.partialorder %v955, 0.0
        %vm1054 = vcmp.gt.f32.partialorder %v957, 0.0
        %vm1055 = vcmp.gt.f32.partialorder %v996, 0.0
        %vm1056 = vcmp.gt.f32.partialorder %v998, 0.0
        %vm1057 = vcmp.gt.f32.partialorder %v1037, 0.0
        %vm1058 = vcmp.gt.f32.partialorder %v1039, 0.0
        %v1059 = vmul.f32 %v750, 0.2
        %v1060 = vmul.f32 %v752, 0.2
        %v1061 = vmul.f32 %v791, 0.2
        %v1062 = vmul.f32 %v793, 0.2
        %v1063 = vmul.f32 %v832, 0.2
        %v1064 = vmul.f32 %v834, 0.2
        %v1065 = vmul.f32 %v873, 0.2
        %v1066 = vmul.f32 %v875, 0.2
        %v1067 = vmul.f32 %v914, 0.2
        %v1068 = vmul.f32 %v916, 0.2
        %v1069 = vmul.f32 %v955, 0.2
        %v1070 = vmul.f32 %v957, 0.2
        %v1071 = vmul.f32 %v996, 0.2
        %v1072 = vmul.f32 %v998, 0.2
        %v1073 = vmul.f32 %v1037, 0.2
        %v1074 = vmul.f32 %v1039, 0.2
        %v1075 = vsel %vm1043, %v750, %v1059
        %v1076 = vsel %vm1044, %v752, %v1060
        %v1077 = vsel %vm1045, %v791, %v1061
        %v1078 = vsel %vm1046, %v793, %v1062
        %v1079 = vsel %vm1047, %v832, %v1063
        %v1080 = vsel %vm1048, %v834, %v1064
        %v1081 = vsel %vm1049, %v873, %v1065
        %v1082 = vsel %vm1050, %v875, %v1066
        %v1083 = vsel %vm1051, %v914, %v1067
        %v1084 = vsel %vm1052, %v916, %v1068
        %v1085 = vsel %vm1053, %v955, %v1069
        %v1086 = vsel %vm1054, %v957, %v1070
        %v1087 = vsel %vm1055, %v996, %v1071
        %v1088 = vsel %vm1056, %v998, %v1072
        %v1089 = vsel %vm1057, %v1037, %v1073
        %v1090 = vsel %vm1058, %v1039, %v1074
        %v1091 = vpack.c.bf16 %v1075, %v1075
        %v1092 = vpack.c.bf16 %v1076, %v1076
        %v1093 = vpack.c.bf16 %v1077, %v1077
        %v1094 = vpack.c.bf16 %v1078, %v1078
        %v1095 = vpack.c.bf16 %v1079, %v1079
        %v1096 = vpack.c.bf16 %v1080, %v1080
        %v1097 = vpack.c.bf16 %v1081, %v1081
        %v1098 = vpack.c.bf16 %v1082, %v1082
        %v1099 = vpack.c.bf16 %v1083, %v1083
        %v1100 = vpack.c.bf16 %v1084, %v1084
        %v1101 = vpack.c.bf16 %v1085, %v1085
        %v1102 = vpack.c.bf16 %v1086, %v1086
        %v1103 = vpack.c.bf16 %v1087, %v1087
        %v1104 = vpack.c.bf16 %v1088, %v1088
        %v1105 = vpack.c.bf16 %v1089, %v1089
        %v1106 = vpack.c.bf16 %v1090, %v1090
        %v1123 = vcombine.low %v1091, %v1092
        %v1124 = vcombine.low %v1093, %v1094
        %v1126 = vunpack.c.l.s4 1983009808
        %v1127 = vunpack.c.0.s8 %v1126
        %v1128 = vlaneseq
        %v1129 = vshrl.u32 %v1128, 7
        %v1130 = vsub.s32 %v1127, %v1129
        %v1131 = vrot.slane %v1123, %v1130
        %v1133 = vunpack.c.l.s4 1983009808
        %v1134 = vunpack.c.0.s8 %v1133
        %v1135 = vlaneseq
        %v1136 = vshrl.u32 %v1135, 7
        %v1137 = vsub.s32 %v1134, %v1136
        %v1138 = vrot.slane %v1124, %v1137
        %v1139 = vcombine.low %v1131, %v1138
        %v1140 = vcombine.low %v1095, %v1096
        %v1141 = vcombine.low %v1097, %v1098
        %v1143 = vunpack.c.l.s4 1983009808
        %v1144 = vunpack.c.0.s8 %v1143
        %v1145 = vlaneseq
        %v1146 = vshrl.u32 %v1145, 7
        %v1147 = vsub.s32 %v1144, %v1146
        %v1148 = vrot.slane %v1140, %v1147
        %v1150 = vunpack.c.l.s4 1983009808
        %v1151 = vunpack.c.0.s8 %v1150
        %v1152 = vlaneseq
        %v1153 = vshrl.u32 %v1152, 7
        %v1154 = vsub.s32 %v1151, %v1153
        %v1155 = vrot.slane %v1141, %v1154
        %v1156 = vcombine.low %v1148, %v1155
        %v1157 = vcombine.low %v1099, %v1100
        %v1158 = vcombine.low %v1101, %v1102
        %v1160 = vunpack.c.l.s4 1983009808
        %v1161 = vunpack.c.0.s8 %v1160
        %v1162 = vlaneseq
        %v1163 = vshrl.u32 %v1162, 7
        %v1164 = vsub.s32 %v1161, %v1163
        %v1165 = vrot.slane %v1157, %v1164
        %v1167 = vunpack.c.l.s4 1983009808
        %v1168 = vunpack.c.0.s8 %v1167
        %v1169 = vlaneseq
        %v1170 = vshrl.u32 %v1169, 7
        %v1171 = vsub.s32 %v1168, %v1170
        %v1172 = vrot.slane %v1158, %v1171
        %v1173 = vcombine.low %v1165, %v1172
        %v1174 = vcombine.low %v1103, %v1104
        %v1175 = vcombine.low %v1105, %v1106
        %v1177 = vunpack.c.l.s4 1983009808
        %v1178 = vunpack.c.0.s8 %v1177
        %v1179 = vlaneseq
        %v1180 = vshrl.u32 %v1179, 7
        %v1181 = vsub.s32 %v1178, %v1180
        %v1182 = vrot.slane %v1174, %v1181
        %v1184 = vunpack.c.l.s4 1983009808
        %v1185 = vunpack.c.0.s8 %v1184
        %v1186 = vlaneseq
        %v1187 = vshrl.u32 %v1186, 7
        %v1188 = vsub.s32 %v1185, %v1187
        %v1189 = vrot.slane %v1175, %v1188
        %v1190 = vcombine.low %v1182, %v1189
        %1195 = vst [vmem:[%s317] sm:$0xff] %v1139
        %1196 = vst [vmem:[%s317 + $0x8] sm:$0xff] %v1156
        %1197 = vst [vmem:[%s317 + $0x10] sm:$0xff] %v1173
        %1198 = vst [vmem:[%s317 + $0x18] sm:$0xff] %v1190
        %s1199 = smul.u32 16, %s14
        %p1200 = scmp.lt.s32.totalorder %s1199, 63
        %s1201 = scalar_select %p1200, %s1199, 63
        %s1202 = smul.addr %s1201, 2
        %s1203 = scalar_lea.vmem %s3, %s1202
        // Predicated region
        $region56: #{netG_forward.25} parent=50 // pred_check
          %p1204 = pneg %p100
        $region57: #{netG_forward.25} parent=50 // pred_check_branch
          %1206 = sbr.rel (%p1204) target = $region59
        $region58: #{netG_forward.25} parent=50 // pred_region
          %s1207 = smul.u32 16, %s14
        $region59: #{netG_forward.25} parent=50 // pred_fallthru
          _
      $region51: #{netG_forward.25} parent=5 // pred_fallthru
        _
      %p1208 = scmp.le.s32.totalorder 2, %s9
      // Predicated region
      $region60: #{netG_forward.25} parent=5 // pred_check
        %p1209 = pneg %p1208
      $region61: #{netG_forward.25} parent=5 // pred_check_branch
        %1211 = sbr.rel (%p1209) target = $region63
      $region62: #{netG_forward.25} parent=5 // pred_region
        %s1212 = ssub.s32 %s9, 2
        // Predicated region
        $region64: #{netG_forward.25} parent=62 // pred_check
          %p1213 = pneg %p106
        $region65: #{netG_forward.25} parent=62 // pred_check_branch
          %1215 = sbr.rel (%p1213) target = $region67
        $region66: #{netG_forward.25} parent=62 // pred_region
          %s1216 = smul.u32 16, %s15
          %p1217 = scmp.lt.s32.totalorder %s1216, 63
          %s1218 = scalar_select %p1217, %s1216, 63
          %s1219 = smul.addr %s1218, 2
          %s1220 = scalar_lea.vmem %s3, %s1219
        $region67: #{netG_forward.25} parent=62 // pred_fallthru
          _
      $region63: #{netG_forward.25} parent=5 // pred_fallthru
        _
    $region6: #{netG_forward.25} parent=1 // loop_footer
      %s13 = sadd.s32 1, %s9
    $region7: #{netG_forward.25} parent=1 // loop_footer_branch
      %8 = sbr.rel target = $region3
    $region8: #{netG_forward.25} parent=1 // loop_exit
      _

// kernel: netG_forward.26
$region0: #{netG_forward.26}
  #allocation0 [shape = 'u32[]', space=smem, size = 0x4, offset = 0x4, fixed_abs, tag = 'smem constant byte address 0x4 - core index']
  #allocation1 [shape = 'u32[144,128]{1,0:T(1,128)}', space=vmem, size = 0x12000, scoped, tag = 'internal scratch']
  %s0 = inlined_call_operand.vmem [shape: bf16[4,64], index: 0, kind: input, shape index: {}]
  %s1 = inlined_call_operand.vmem [shape: bf16[64,2048], index: 1, kind: input, shape index: {}]
  %s2 = inlined_call_operand.vmem [shape: f32[4,1], index: 2, kind: input, shape index: {}]
  %s3 = inlined_call_operand.vmem [shape: bf16[4,2048], index: 3, kind: output, shape index: {}]
  %s4 = sld [smem:[#allocation0]]
  $region22: #{netG_forward.26} parent=0
    _
  %s6 = ssub.s32 1, %s4
  %s7 = scalar_select 0, %s6, %s4
  // Predicated region
  $region2: #{netG_forward.26} parent=0 // pred_check
    _
  $region3: #{netG_forward.26} parent=0 // pred_check_branch
    %9 = sbr.rel (0) target = $region5
  $region4: #{netG_forward.26} parent=0 // pred_region
    _
  $region5: #{netG_forward.26} parent=0 // pred_fallthru
    _
  // Predicated region
  $region6: #{netG_forward.26} parent=0 // pred_check
    _
  $region7: #{netG_forward.26} parent=0 // pred_check_branch
    %11 = sbr.rel (0) target = $region9
  $region8: #{netG_forward.26} parent=0 // pred_region
    _
  $region9: #{netG_forward.26} parent=0 // pred_fallthru
    _
  // Predicated region
  $region10: #{netG_forward.26} parent=0 // pred_check
    _
  $region11: #{netG_forward.26} parent=0 // pred_check_branch
    %13 = sbr.rel (0) target = $region13
  $region12: #{netG_forward.26} parent=0 // pred_region
    _
  $region13: #{netG_forward.26} parent=0 // pred_fallthru
    _
  %v15 = vld [vmem:[%s0] sm:$0x3]
  %v16 = vld [vmem:[%s1] sm:$0xff]
  %v17 = vld [vmem:[%s1 + $0x8] sm:$0xff]
  %v18 = vld [vmem:[%s1 + $0x10] sm:$0xff]
  %v19 = vld [vmem:[%s1 + $0x18] sm:$0xff]
  %v20 = vld [vmem:[%s1 + $0x20] sm:$0xff]
  %v21 = vld [vmem:[%s1 + $0x28] sm:$0xff]
  %v22 = vld [vmem:[%s1 + $0x30] sm:$0xff]
  %v23 = vld [vmem:[%s1 + $0x38] sm:$0xff]
  %v24 = vld [vmem:[%s1 + $0x40] sm:$0xff]
  %v25 = vld [vmem:[%s1 + $0x48] sm:$0xff]
  %v26 = vld [vmem:[%s1 + $0x50] sm:$0xff]
  %v27 = vld [vmem:[%s1 + $0x58] sm:$0xff]
  %v28 = vld [vmem:[%s1 + $0x60] sm:$0xff]
  %v29 = vld [vmem:[%s1 + $0x68] sm:$0xff]
  %v30 = vld [vmem:[%s1 + $0x70] sm:$0xff]
  %v31 = vld [vmem:[%s1 + $0x78] sm:$0xff]
  %v32 = vld [vmem:[%s1 + $0x80] sm:$0xff]
  %v33 = vld [vmem:[%s1 + $0x88] sm:$0xff]
  %v34 = vld [vmem:[%s1 + $0x90] sm:$0xff]
  %v35 = vld [vmem:[%s1 + $0x98] sm:$0xff]
  %v36 = vld [vmem:[%s1 + $0xa0] sm:$0xff]
  %v37 = vld [vmem:[%s1 + $0xa8] sm:$0xff]
  %v38 = vld [vmem:[%s1 + $0xb0] sm:$0xff]
  %v39 = vld [vmem:[%s1 + $0xb8] sm:$0xff]
  %v40 = vld [vmem:[%s1 + $0xc0] sm:$0xff]
  %v41 = vld [vmem:[%s1 + $0xc8] sm:$0xff]
  %v42 = vld [vmem:[%s1 + $0xd0] sm:$0xff]
  %v43 = vld [vmem:[%s1 + $0xd8] sm:$0xff]
  %v44 = vld [vmem:[%s1 + $0xe0] sm:$0xff]
  %v45 = vld [vmem:[%s1 + $0xe8] sm:$0xff]
  %v46 = vld [vmem:[%s1 + $0xf0] sm:$0xff]
  %v47 = vld [vmem:[%s1 + $0xf8] sm:$0xff]
  %v48 = vld [vmem:[%s1 + $0x100] sm:$0xff]
  %v49 = vld [vmem:[%s1 + $0x108] sm:$0xff]
  %v50 = vld [vmem:[%s1 + $0x110] sm:$0xff]
  %v51 = vld [vmem:[%s1 + $0x118] sm:$0xff]
  %v52 = vld [vmem:[%s1 + $0x120] sm:$0xff]
  %v53 = vld [vmem:[%s1 + $0x128] sm:$0xff]
  %v54 = vld [vmem:[%s1 + $0x130] sm:$0xff]
  %v55 = vld [vmem:[%s1 + $0x138] sm:$0xff]
  %v56 = vld [vmem:[%s1 + $0x140] sm:$0xff]
  %v57 = vld [vmem:[%s1 + $0x148] sm:$0xff]
  %v58 = vld [vmem:[%s1 + $0x150] sm:$0xff]
  %v59 = vld [vmem:[%s1 + $0x158] sm:$0xff]
  %v60 = vld [vmem:[%s1 + $0x160] sm:$0xff]
  %v61 = vld [vmem:[%s1 + $0x168] sm:$0xff]
  %v62 = vld [vmem:[%s1 + $0x170] sm:$0xff]
  %v63 = vld [vmem:[%s1 + $0x178] sm:$0xff]
  %v64 = vld [vmem:[%s1 + $0x180] sm:$0xff]
  %v65 = vld [vmem:[%s1 + $0x188] sm:$0xff]
  %v66 = vld [vmem:[%s1 + $0x190] sm:$0xff]
  %v67 = vld [vmem:[%s1 + $0x198] sm:$0xff]
  %v68 = vld [vmem:[%s1 + $0x1a0] sm:$0xff]
  %v69 = vld [vmem:[%s1 + $0x1a8] sm:$0xff]
  %v70 = vld [vmem:[%s1 + $0x1b0] sm:$0xff]
  %v71 = vld [vmem:[%s1 + $0x1b8] sm:$0xff]
  %v72 = vld [vmem:[%s1 + $0x1c0] sm:$0xff]
  %v73 = vld [vmem:[%s1 + $0x1c8] sm:$0xff]
  %v74 = vld [vmem:[%s1 + $0x1d0] sm:$0xff]
  %v75 = vld [vmem:[%s1 + $0x1d8] sm:$0xff]
  %v76 = vld [vmem:[%s1 + $0x1e0] sm:$0xff]
  %v77 = vld [vmem:[%s1 + $0x1e8] sm:$0xff]
  %v78 = vld [vmem:[%s1 + $0x1f0] sm:$0xff]
  %v79 = vld [vmem:[%s1 + $0x1f8] sm:$0xff]
  %v80 = vld [vmem:[%s2] sm:$0xf]
  %82 = vset.pattern.permute.xlu0 0
  %83 = vperm.xlu0 %82, %v80
  %v84 = vpop.permute.xlu0 %83
  %v150 = vunpack.c.l.b16 %v16
  %v151 = vunpack.c.h.b16 %v16
  %v152 = vunpack.c.l.b16 %v17
  %v153 = vunpack.c.h.b16 %v17
  %v154 = vunpack.c.l.b16 %v18
  %v155 = vunpack.c.h.b16 %v18
  %v156 = vunpack.c.l.b16 %v19
  %v157 = vunpack.c.h.b16 %v19
  %v158 = vunpack.c.l.b16 %v20
  %v159 = vunpack.c.h.b16 %v20
  %v160 = vunpack.c.l.b16 %v21
  %v161 = vunpack.c.h.b16 %v21
  %v162 = vunpack.c.l.b16 %v22
  %v163 = vunpack.c.h.b16 %v22
  %v164 = vunpack.c.l.b16 %v23
  %v165 = vunpack.c.h.b16 %v23
  %v166 = vunpack.c.l.b16 %v24
  %v167 = vunpack.c.h.b16 %v24
  %v168 = vunpack.c.l.b16 %v25
  %v169 = vunpack.c.h.b16 %v25
  %v170 = vunpack.c.l.b16 %v26
  %v171 = vunpack.c.h.b16 %v26
  %v172 = vunpack.c.l.b16 %v27
  %v173 = vunpack.c.h.b16 %v27
  %v174 = vunpack.c.l.b16 %v28
  %v175 = vunpack.c.h.b16 %v28
  %v176 = vunpack.c.l.b16 %v29
  %v177 = vunpack.c.h.b16 %v29
  %v178 = vunpack.c.l.b16 %v30
  %v179 = vunpack.c.h.b16 %v30
  %v180 = vunpack.c.l.b16 %v31
  %v181 = vunpack.c.h.b16 %v31
  %v182 = vunpack.c.l.b16 %v32
  %v183 = vunpack.c.h.b16 %v32
  %v184 = vunpack.c.l.b16 %v33
  %v185 = vunpack.c.h.b16 %v33
  %v186 = vunpack.c.l.b16 %v34
  %v187 = vunpack.c.h.b16 %v34
  %v188 = vunpack.c.l.b16 %v35
  %v189 = vunpack.c.h.b16 %v35
  %v190 = vunpack.c.l.b16 %v36
  %v191 = vunpack.c.h.b16 %v36
  %v192 = vunpack.c.l.b16 %v37
  %v193 = vunpack.c.h.b16 %v37
  %v194 = vunpack.c.l.b16 %v38
  %v195 = vunpack.c.h.b16 %v38
  %v196 = vunpack.c.l.b16 %v39
  %v197 = vunpack.c.h.b16 %v39
  %v198 = vunpack.c.l.b16 %v40
  %v199 = vunpack.c.h.b16 %v40
  %v200 = vunpack.c.l.b16 %v41
  %v201 = vunpack.c.h.b16 %v41
  %v202 = vunpack.c.l.b16 %v42
  %v203 = vunpack.c.h.b16 %v42
  %v204 = vunpack.c.l.b16 %v43
  %v205 = vunpack.c.h.b16 %v43
  %v206 = vunpack.c.l.b16 %v44
  %v207 = vunpack.c.h.b16 %v44
  %v208 = vunpack.c.l.b16 %v45
  %v209 = vunpack.c.h.b16 %v45
  %v210 = vunpack.c.l.b16 %v46
  %v211 = vunpack.c.h.b16 %v46
  %v212 = vunpack.c.l.b16 %v47
  %v213 = vunpack.c.h.b16 %v47
  %v214 = vunpack.c.l.b16 %v48
  %v215 = vunpack.c.h.b16 %v48
  %v216 = vunpack.c.l.b16 %v49
  %v217 = vunpack.c.h.b16 %v49
  %v218 = vunpack.c.l.b16 %v50
  %v219 = vunpack.c.h.b16 %v50
  %v220 = vunpack.c.l.b16 %v51
  %v221 = vunpack.c.h.b16 %v51
  %v222 = vunpack.c.l.b16 %v52
  %v223 = vunpack.c.h.b16 %v52
  %v224 = vunpack.c.l.b16 %v53
  %v225 = vunpack.c.h.b16 %v53
  %v226 = vunpack.c.l.b16 %v54
  %v227 = vunpack.c.h.b16 %v54
  %v228 = vunpack.c.l.b16 %v55
  %v229 = vunpack.c.h.b16 %v55
  %v230 = vunpack.c.l.b16 %v56
  %v231 = vunpack.c.h.b16 %v56
  %v232 = vunpack.c.l.b16 %v57
  %v233 = vunpack.c.h.b16 %v57
  %v234 = vunpack.c.l.b16 %v58
  %v235 = vunpack.c.h.b16 %v58
  %v236 = vunpack.c.l.b16 %v59
  %v237 = vunpack.c.h.b16 %v59
  %v238 = vunpack.c.l.b16 %v60
  %v239 = vunpack.c.h.b16 %v60
  %v240 = vunpack.c.l.b16 %v61
  %v241 = vunpack.c.h.b16 %v61
  %v242 = vunpack.c.l.b16 %v62
  %v243 = vunpack.c.h.b16 %v62
  %v244 = vunpack.c.l.b16 %v63
  %v245 = vunpack.c.h.b16 %v63
  %v246 = vunpack.c.l.b16 %v64
  %v247 = vunpack.c.h.b16 %v64
  %v248 = vunpack.c.l.b16 %v65
  %v249 = vunpack.c.h.b16 %v65
  %v250 = vunpack.c.l.b16 %v66
  %v251 = vunpack.c.h.b16 %v66
  %v252 = vunpack.c.l.b16 %v67
  %v253 = vunpack.c.h.b16 %v67
  %v254 = vunpack.c.l.b16 %v68
  %v255 = vunpack.c.h.b16 %v68
  %v256 = vunpack.c.l.b16 %v69
  %v257 = vunpack.c.h.b16 %v69
  %v258 = vunpack.c.l.b16 %v70
  %v259 = vunpack.c.h.b16 %v70
  %v260 = vunpack.c.l.b16 %v71
  %v261 = vunpack.c.h.b16 %v71
  %v262 = vunpack.c.l.b16 %v72
  %v263 = vunpack.c.h.b16 %v72
  %v264 = vunpack.c.l.b16 %v73
  %v265 = vunpack.c.h.b16 %v73
  %v266 = vunpack.c.l.b16 %v74
  %v267 = vunpack.c.h.b16 %v74
  %v268 = vunpack.c.l.b16 %v75
  %v269 = vunpack.c.h.b16 %v75
  %v270 = vunpack.c.l.b16 %v76
  %v271 = vunpack.c.h.b16 %v76
  %v272 = vunpack.c.l.b16 %v77
  %v273 = vunpack.c.h.b16 %v77
  %v274 = vunpack.c.l.b16 %v78
  %v275 = vunpack.c.h.b16 %v78
  %v276 = vunpack.c.l.b16 %v79
  %v277 = vunpack.c.h.b16 %v79
  %v278 = vpack.c.b16 %v166, %v150
  %v279 = vpack.c.b16 %v167, %v151
  %v280 = vpack.c.b16 %v168, %v152
  %v281 = vpack.c.b16 %v169, %v153
  %v282 = vpack.c.b16 %v170, %v154
  %v283 = vpack.c.b16 %v171, %v155
  %v284 = vpack.c.b16 %v172, %v156
  %v285 = vpack.c.b16 %v173, %v157
  %v286 = vpack.c.b16 %v174, %v158
  %v287 = vpack.c.b16 %v175, %v159
  %v288 = vpack.c.b16 %v176, %v160
  %v289 = vpack.c.b16 %v177, %v161
  %v290 = vpack.c.b16 %v178, %v162
  %v291 = vpack.c.b16 %v179, %v163
  %v292 = vpack.c.b16 %v180, %v164
  %v293 = vpack.c.b16 %v181, %v165
  %v294 = vpack.c.b16 %v198, %v182
  %v295 = vpack.c.b16 %v199, %v183
  %v296 = vpack.c.b16 %v200, %v184
  %v297 = vpack.c.b16 %v201, %v185
  %v298 = vpack.c.b16 %v202, %v186
  %v299 = vpack.c.b16 %v203, %v187
  %v300 = vpack.c.b16 %v204, %v188
  %v301 = vpack.c.b16 %v205, %v189
  %v302 = vpack.c.b16 %v206, %v190
  %v303 = vpack.c.b16 %v207, %v191
  %v304 = vpack.c.b16 %v208, %v192
  %v305 = vpack.c.b16 %v209, %v193
  %v306 = vpack.c.b16 %v210, %v194
  %v307 = vpack.c.b16 %v211, %v195
  %v308 = vpack.c.b16 %v212, %v196
  %v309 = vpack.c.b16 %v213, %v197
  %v310 = vpack.c.b16 %v230, %v214
  %v311 = vpack.c.b16 %v231, %v215
  %v312 = vpack.c.b16 %v232, %v216
  %v313 = vpack.c.b16 %v233, %v217
  %v314 = vpack.c.b16 %v234, %v218
  %v315 = vpack.c.b16 %v235, %v219
  %v316 = vpack.c.b16 %v236, %v220
  %v317 = vpack.c.b16 %v237, %v221
  %v318 = vpack.c.b16 %v238, %v222
  %v319 = vpack.c.b16 %v239, %v223
  %v320 = vpack.c.b16 %v240, %v224
  %v321 = vpack.c.b16 %v241, %v225
  %v322 = vpack.c.b16 %v242, %v226
  %v323 = vpack.c.b16 %v243, %v227
  %v324 = vpack.c.b16 %v244, %v228
  %v325 = vpack.c.b16 %v245, %v229
  %v326 = vpack.c.b16 %v262, %v246
  %v327 = vpack.c.b16 %v263, %v247
  %v328 = vpack.c.b16 %v264, %v248
  %v329 = vpack.c.b16 %v265, %v249
  %v330 = vpack.c.b16 %v266, %v250
  %v331 = vpack.c.b16 %v267, %v251
  %v332 = vpack.c.b16 %v268, %v252
  %v333 = vpack.c.b16 %v269, %v253
  %v334 = vpack.c.b16 %v270, %v254
  %v335 = vpack.c.b16 %v271, %v255
  %v336 = vpack.c.b16 %v272, %v256
  %v337 = vpack.c.b16 %v273, %v257
  %v338 = vpack.c.b16 %v274, %v258
  %v339 = vpack.c.b16 %v275, %v259
  %v340 = vpack.c.b16 %v276, %v260
  %v341 = vpack.c.b16 %v277, %v261
  %vm406 = vcmask 523264
  %v408 = vsel %vm406, %v15, 0
  %410 = vmatprep.subr.bf16.mxu0 %v279
  %411 = vmatpush1.bf16.msra.mxu0 %v278
  %412 = vmatprep.subr.bf16.mxu0 %v295
  %413 = vmatpush1.bf16.msra.mxu0 %v294
  %414 = vmatprep.subr.bf16.mxu0 %v311
  %415 = vmatpush1.bf16.msra.mxu0 %v310
  %416 = vmatprep.subr.bf16.mxu0 %v327
  %417 = vmatpush1.bf16.msra.mxu0 %v326
  %418 = vmatprep.subr.bf16.mxu0 0
  %419 = vmatpush1.bf16.msra.mxu0 0
  %420 = vmatprep.subr.bf16.mxu0 0
  %421 = vmatpush1.bf16.msra.mxu0 0
  %422 = vmatprep.subr.bf16.mxu0 0
  %423 = vmatpush1.bf16.msra.mxu0 0
  %424 = vmatprep.subr.bf16.mxu0 0
  %425 = vmatpush1.bf16.msra.mxu0 0
  %426 = vmatprep.subr.bf16.mxu0 0
  %427 = vmatpush1.bf16.msra.mxu0 0
  %428 = vmatprep.subr.bf16.mxu0 0
  %429 = vmatpush1.bf16.msra.mxu0 0
  %430 = vmatprep.subr.bf16.mxu0 0
  %431 = vmatpush1.bf16.msra.mxu0 0
  %432 = vmatprep.subr.bf16.mxu0 0
  %433 = vmatpush1.bf16.msra.mxu0 0
  %434 = vmatprep.subr.bf16.mxu0 0
  %435 = vmatpush1.bf16.msra.mxu0 0
  %436 = vmatprep.subr.bf16.mxu0 0
  %437 = vmatpush1.bf16.msra.mxu0 0
  %438 = vmatprep.subr.bf16.mxu0 0
  %439 = vmatpush1.bf16.msra.mxu0 0
  %440 = vmatprep.subr.bf16.mxu0 0
  %441 = vmatpush1.bf16.msra.mxu0 0
  %442 = vmatprep.mubr.bf16.mxu0 0
  %443 = vmatmul.mubr.bf16.gmra.mrb[0].mxu0 %v408
  %v444 = vpop.f32.mrb[0].mxu0
  %v445 = vadd.f32 %v84, %v444
  %v446 = vpop.f32.mrb[0].mxu0
  %v447 = vadd.f32 %v84, %v446
  %v448 = vpop.f32.mrb[0].mxu0
  %v449 = vpop.f32.mrb[0].mxu0
  %450 = vdwg.mxu0
  %451 = vmatprep.subr.bf16.mxu0 %v281
  %452 = vmatpush1.bf16.msra.mxu0 %v280
  %453 = vmatprep.subr.bf16.mxu0 %v297
  %454 = vmatpush1.bf16.msra.mxu0 %v296
  %455 = vmatprep.subr.bf16.mxu0 %v313
  %456 = vmatpush1.bf16.msra.mxu0 %v312
  %457 = vmatprep.subr.bf16.mxu0 %v329
  %458 = vmatpush1.bf16.msra.mxu0 %v328
  %459 = vmatprep.subr.bf16.mxu0 0
  %460 = vmatpush1.bf16.msra.mxu0 0
  %461 = vmatprep.subr.bf16.mxu0 0
  %462 = vmatpush1.bf16.msra.mxu0 0
  %463 = vmatprep.subr.bf16.mxu0 0
  %464 = vmatpush1.bf16.msra.mxu0 0
  %465 = vmatprep.subr.bf16.mxu0 0
  %466 = vmatpush1.bf16.msra.mxu0 0
  %467 = vmatprep.subr.bf16.mxu0 0
  %468 = vmatpush1.bf16.msra.mxu0 0
  %469 = vmatprep.subr.bf16.mxu0 0
  %470 = vmatpush1.bf16.msra.mxu0 0
  %471 = vmatprep.subr.bf16.mxu0 0
  %472 = vmatpush1.bf16.msra.mxu0 0
  %473 = vmatprep.subr.bf16.mxu0 0
  %474 = vmatpush1.bf16.msra.mxu0 0
  %475 = vmatprep.subr.bf16.mxu0 0
  %476 = vmatpush1.bf16.msra.mxu0 0
  %477 = vmatprep.subr.bf16.mxu0 0
  %478 = vmatpush1.bf16.msra.mxu0 0
  %479 = vmatprep.subr.bf16.mxu0 0
  %480 = vmatpush1.bf16.msra.mxu0 0
  %481 = vmatprep.subr.bf16.mxu0 0
  %482 = vmatpush1.bf16.msra.mxu0 0
  %483 = vmatprep.mubr.bf16.mxu0 0
  %484 = vmatmul.mubr.bf16.gmra.mrb[0].mxu0 %v408
  %v485 = vpop.f32.mrb[0].mxu0
  %v486 = vadd.f32 %v84, %v485
  %v487 = vpop.f32.mrb[0].mxu0
  %v488 = vadd.f32 %v84, %v487
  %v489 = vpop.f32.mrb[0].mxu0
  %v490 = vpop.f32.mrb[0].mxu0
  %491 = vdwg.mxu0
  %492 = vmatprep.subr.bf16.mxu0 %v283
  %493 = vmatpush1.bf16.msra.mxu0 %v282
  %494 = vmatprep.subr.bf16.mxu0 %v299
  %495 = vmatpush1.bf16.msra.mxu0 %v298
  %496 = vmatprep.subr.bf16.mxu0 %v315
  %497 = vmatpush1.bf16.msra.mxu0 %v314
  %498 = vmatprep.subr.bf16.mxu0 %v331
  %499 = vmatpush1.bf16.msra.mxu0 %v330
  %500 = vmatprep.subr.bf16.mxu0 0
  %501 = vmatpush1.bf16.msra.mxu0 0
  %502 = vmatprep.subr.bf16.mxu0 0
  %503 = vmatpush1.bf16.msra.mxu0 0
  %504 = vmatprep.subr.bf16.mxu0 0
  %505 = vmatpush1.bf16.msra.mxu0 0
  %506 = vmatprep.subr.bf16.mxu0 0
  %507 = vmatpush1.bf16.msra.mxu0 0
  %508 = vmatprep.subr.bf16.mxu0 0
  %509 = vmatpush1.bf16.msra.mxu0 0
  %510 = vmatprep.subr.bf16.mxu0 0
  %511 = vmatpush1.bf16.msra.mxu0 0
  %512 = vmatprep.subr.bf16.mxu0 0
  %513 = vmatpush1.bf16.msra.mxu0 0
  %514 = vmatprep.subr.bf16.mxu0 0
  %515 = vmatpush1.bf16.msra.mxu0 0
  %516 = vmatprep.subr.bf16.mxu0 0
  %517 = vmatpush1.bf16.msra.mxu0 0
  %518 = vmatprep.subr.bf16.mxu0 0
  %519 = vmatpush1.bf16.msra.mxu0 0
  %520 = vmatprep.subr.bf16.mxu0 0
  %521 = vmatpush1.bf16.msra.mxu0 0
  %522 = vmatprep.subr.bf16.mxu0 0
  %523 = vmatpush1.bf16.msra.mxu0 0
  %524 = vmatprep.mubr.bf16.mxu0 0
  %525 = vmatmul.mubr.bf16.gmra.mrb[0].mxu0 %v408
  %v526 = vpop.f32.mrb[0].mxu0
  %v527 = vadd.f32 %v84, %v526
  %v528 = vpop.f32.mrb[0].mxu0
  %v529 = vadd.f32 %v84, %v528
  %v530 = vpop.f32.mrb[0].mxu0
  %v531 = vpop.f32.mrb[0].mxu0
  %532 = vdwg.mxu0
  %533 = vmatprep.subr.bf16.mxu0 %v285
  %534 = vmatpush1.bf16.msra.mxu0 %v284
  %535 = vmatprep.subr.bf16.mxu0 %v301
  %536 = vmatpush1.bf16.msra.mxu0 %v300
  %537 = vmatprep.subr.bf16.mxu0 %v317
  %538 = vmatpush1.bf16.msra.mxu0 %v316
  %539 = vmatprep.subr.bf16.mxu0 %v333
  %540 = vmatpush1.bf16.msra.mxu0 %v332
  %541 = vmatprep.subr.bf16.mxu0 0
  %542 = vmatpush1.bf16.msra.mxu0 0
  %543 = vmatprep.subr.bf16.mxu0 0
  %544 = vmatpush1.bf16.msra.mxu0 0
  %545 = vmatprep.subr.bf16.mxu0 0
  %546 = vmatpush1.bf16.msra.mxu0 0
  %547 = vmatprep.subr.bf16.mxu0 0
  %548 = vmatpush1.bf16.msra.mxu0 0
  %549 = vmatprep.subr.bf16.mxu0 0
  %550 = vmatpush1.bf16.msra.mxu0 0
  %551 = vmatprep.subr.bf16.mxu0 0
  %552 = vmatpush1.bf16.msra.mxu0 0
  %553 = vmatprep.subr.bf16.mxu0 0
  %554 = vmatpush1.bf16.msra.mxu0 0
  %555 = vmatprep.subr.bf16.mxu0 0
  %556 = vmatpush1.bf16.msra.mxu0 0
  %557 = vmatprep.subr.bf16.mxu0 0
  %558 = vmatpush1.bf16.msra.mxu0 0
  %559 = vmatprep.subr.bf16.mxu0 0
  %560 = vmatpush1.bf16.msra.mxu0 0
  %561 = vmatprep.subr.bf16.mxu0 0
  %562 = vmatpush1.bf16.msra.mxu0 0
  %563 = vmatprep.subr.bf16.mxu0 0
  %564 = vmatpush1.bf16.msra.mxu0 0
  %565 = vmatprep.mubr.bf16.mxu0 0
  %566 = vmatmul.mubr.bf16.gmra.mrb[0].mxu0 %v408
  %v567 = vpop.f32.mrb[0].mxu0
  %v568 = vadd.f32 %v84, %v567
  %v569 = vpop.f32.mrb[0].mxu0
  %v570 = vadd.f32 %v84, %v569
  %v571 = vpop.f32.mrb[0].mxu0
  %v572 = vpop.f32.mrb[0].mxu0
  %573 = vdwg.mxu0
  %574 = vmatprep.subr.bf16.mxu0 %v287
  %575 = vmatpush1.bf16.msra.mxu0 %v286
  %576 = vmatprep.subr.bf16.mxu0 %v303
  %577 = vmatpush1.bf16.msra.mxu0 %v302
  %578 = vmatprep.subr.bf16.mxu0 %v319
  %579 = vmatpush1.bf16.msra.mxu0 %v318
  %580 = vmatprep.subr.bf16.mxu0 %v335
  %581 = vmatpush1.bf16.msra.mxu0 %v334
  %582 = vmatprep.subr.bf16.mxu0 0
  %583 = vmatpush1.bf16.msra.mxu0 0
  %584 = vmatprep.subr.bf16.mxu0 0
  %585 = vmatpush1.bf16.msra.mxu0 0
  %586 = vmatprep.subr.bf16.mxu0 0
  %587 = vmatpush1.bf16.msra.mxu0 0
  %588 = vmatprep.subr.bf16.mxu0 0
  %589 = vmatpush1.bf16.msra.mxu0 0
  %590 = vmatprep.subr.bf16.mxu0 0
  %591 = vmatpush1.bf16.msra.mxu0 0
  %592 = vmatprep.subr.bf16.mxu0 0
  %593 = vmatpush1.bf16.msra.mxu0 0
  %594 = vmatprep.subr.bf16.mxu0 0
  %595 = vmatpush1.bf16.msra.mxu0 0
  %596 = vmatprep.subr.bf16.mxu0 0
  %597 = vmatpush1.bf16.msra.mxu0 0
  %598 = vmatprep.subr.bf16.mxu0 0
  %599 = vmatpush1.bf16.msra.mxu0 0
  %600 = vmatprep.subr.bf16.mxu0 0
  %601 = vmatpush1.bf16.msra.mxu0 0
  %602 = vmatprep.subr.bf16.mxu0 0
  %603 = vmatpush1.bf16.msra.mxu0 0
  %604 = vmatprep.subr.bf16.mxu0 0
  %605 = vmatpush1.bf16.msra.mxu0 0
  %606 = vmatprep.mubr.bf16.mxu0 0
  %607 = vmatmul.mubr.bf16.gmra.mrb[0].mxu0 %v408
  %v608 = vpop.f32.mrb[0].mxu0
  %v609 = vadd.f32 %v84, %v608
  %v610 = vpop.f32.mrb[0].mxu0
  %v611 = vadd.f32 %v84, %v610
  %v612 = vpop.f32.mrb[0].mxu0
  %v613 = vpop.f32.mrb[0].mxu0
  %614 = vdwg.mxu0
  %615 = vmatprep.subr.bf16.mxu0 %v289
  %616 = vmatpush1.bf16.msra.mxu0 %v288
  %617 = vmatprep.subr.bf16.mxu0 %v305
  %618 = vmatpush1.bf16.msra.mxu0 %v304
  %619 = vmatprep.subr.bf16.mxu0 %v321
  %620 = vmatpush1.bf16.msra.mxu0 %v320
  %621 = vmatprep.subr.bf16.mxu0 %v337
  %622 = vmatpush1.bf16.msra.mxu0 %v336
  %623 = vmatprep.subr.bf16.mxu0 0
  %624 = vmatpush1.bf16.msra.mxu0 0
  %625 = vmatprep.subr.bf16.mxu0 0
  %626 = vmatpush1.bf16.msra.mxu0 0
  %627 = vmatprep.subr.bf16.mxu0 0
  %628 = vmatpush1.bf16.msra.mxu0 0
  %629 = vmatprep.subr.bf16.mxu0 0
  %630 = vmatpush1.bf16.msra.mxu0 0
  %631 = vmatprep.subr.bf16.mxu0 0
  %632 = vmatpush1.bf16.msra.mxu0 0
  %633 = vmatprep.subr.bf16.mxu0 0
  %634 = vmatpush1.bf16.msra.mxu0 0
  %635 = vmatprep.subr.bf16.mxu0 0
  %636 = vmatpush1.bf16.msra.mxu0 0
  %637 = vmatprep.subr.bf16.mxu0 0
  %638 = vmatpush1.bf16.msra.mxu0 0
  %639 = vmatprep.subr.bf16.mxu0 0
  %640 = vmatpush1.bf16.msra.mxu0 0
  %641 = vmatprep.subr.bf16.mxu0 0
  %642 = vmatpush1.bf16.msra.mxu0 0
  %643 = vmatprep.subr.bf16.mxu0 0
  %644 = vmatpush1.bf16.msra.mxu0 0
  %645 = vmatprep.subr.bf16.mxu0 0
  %646 = vmatpush1.bf16.msra.mxu0 0
  %647 = vmatprep.mubr.bf16.mxu0 0
  %648 = vmatmul.mubr.bf16.gmra.mrb[0].mxu0 %v408
  %v649 = vpop.f32.mrb[0].mxu0
  %v650 = vadd.f32 %v84, %v649
  %v651 = vpop.f32.mrb[0].mxu0
  %v652 = vadd.f32 %v84, %v651
  %v653 = vpop.f32.mrb[0].mxu0
  %v654 = vpop.f32.mrb[0].mxu0
  %655 = vdwg.mxu0
  %656 = vmatprep.subr.bf16.mxu0 %v291
  %657 = vmatpush1.bf16.msra.mxu0 %v290
  %658 = vmatprep.subr.bf16.mxu0 %v307
  %659 = vmatpush1.bf16.msra.mxu0 %v306
  %660 = vmatprep.subr.bf16.mxu0 %v323
  %661 = vmatpush1.bf16.msra.mxu0 %v322
  %662 = vmatprep.subr.bf16.mxu0 %v339
  %663 = vmatpush1.bf16.msra.mxu0 %v338
  %664 = vmatprep.subr.bf16.mxu0 0
  %665 = vmatpush1.bf16.msra.mxu0 0
  %666 = vmatprep.subr.bf16.mxu0 0
  %667 = vmatpush1.bf16.msra.mxu0 0
  %668 = vmatprep.subr.bf16.mxu0 0
  %669 = vmatpush1.bf16.msra.mxu0 0
  %670 = vmatprep.subr.bf16.mxu0 0
  %671 = vmatpush1.bf16.msra.mxu0 0
  %672 = vmatprep.subr.bf16.mxu0 0
  %673 = vmatpush1.bf16.msra.mxu0 0
  %674 = vmatprep.subr.bf16.mxu0 0
  %675 = vmatpush1.bf16.msra.mxu0 0
  %676 = vmatprep.subr.bf16.mxu0 0
  %677 = vmatpush1.bf16.msra.mxu0 0
  %678 = vmatprep.subr.bf16.mxu0 0
  %679 = vmatpush1.bf16.msra.mxu0 0
  %680 = vmatprep.subr.bf16.mxu0 0
  %681 = vmatpush1.bf16.msra.mxu0 0
  %682 = vmatprep.subr.bf16.mxu0 0
  %683 = vmatpush1.bf16.msra.mxu0 0
  %684 = vmatprep.subr.bf16.mxu0 0
  %685 = vmatpush1.bf16.msra.mxu0 0
  %686 = vmatprep.subr.bf16.mxu0 0
  %687 = vmatpush1.bf16.msra.mxu0 0
  %688 = vmatprep.mubr.bf16.mxu0 0
  %689 = vmatmul.mubr.bf16.gmra.mrb[0].mxu0 %v408
  %v690 = vpop.f32.mrb[0].mxu0
  %v691 = vadd.f32 %v84, %v690
  %v692 = vpop.f32.mrb[0].mxu0
  %v693 = vadd.f32 %v84, %v692
  %v694 = vpop.f32.mrb[0].mxu0
  %v695 = vpop.f32.mrb[0].mxu0
  %696 = vdwg.mxu0
  %697 = vmatprep.subr.bf16.mxu0 %v293
  %698 = vmatpush1.bf16.msra.mxu0 %v292
  %699 = vmatprep.subr.bf16.mxu0 %v309
  %700 = vmatpush1.bf16.msra.mxu0 %v308
  %701 = vmatprep.subr.bf16.mxu0 %v325
  %702 = vmatpush1.bf16.msra.mxu0 %v324
  %703 = vmatprep.subr.bf16.mxu0 %v341
  %704 = vmatpush1.bf16.msra.mxu0 %v340
  %705 = vmatprep.subr.bf16.mxu0 0
  %706 = vmatpush1.bf16.msra.mxu0 0
  %707 = vmatprep.subr.bf16.mxu0 0
  %708 = vmatpush1.bf16.msra.mxu0 0
  %709 = vmatprep.subr.bf16.mxu0 0
  %710 = vmatpush1.bf16.msra.mxu0 0
  %711 = vmatprep.subr.bf16.mxu0 0
  %712 = vmatpush1.bf16.msra.mxu0 0
  %713 = vmatprep.subr.bf16.mxu0 0
  %714 = vmatpush1.bf16.msra.mxu0 0
  %715 = vmatprep.subr.bf16.mxu0 0
  %716 = vmatpush1.bf16.msra.mxu0 0
  %717 = vmatprep.subr.bf16.mxu0 0
  %718 = vmatpush1.bf16.msra.mxu0 0
  %719 = vmatprep.subr.bf16.mxu0 0
  %720 = vmatpush1.bf16.msra.mxu0 0
  %721 = vmatprep.subr.bf16.mxu0 0
  %722 = vmatpush1.bf16.msra.mxu0 0
  %723 = vmatprep.subr.bf16.mxu0 0
  %724 = vmatpush1.bf16.msra.mxu0 0
  %725 = vmatprep.subr.bf16.mxu0 0
  %726 = vmatpush1.bf16.msra.mxu0 0
  %727 = vmatprep.subr.bf16.mxu0 0
  %728 = vmatpush1.bf16.msra.mxu0 0
  %729 = vmatprep.mubr.bf16.mxu0 0
  %730 = vmatmul.mubr.bf16.gmra.mrb[0].mxu0 %v408
  %v731 = vpop.f32.mrb[0].mxu0
  %v732 = vadd.f32 %v84, %v731
  %v733 = vpop.f32.mrb[0].mxu0
  %v734 = vadd.f32 %v84, %v733
  %v735 = vpop.f32.mrb[0].mxu0
  %v736 = vpop.f32.mrb[0].mxu0
  %737 = vdwg.mxu0
  %vm738 = vcmp.gt.f32.partialorder %v445, 0.0
  %vm739 = vcmp.gt.f32.partialorder %v447, 0.0
  %vm740 = vcmp.gt.f32.partialorder %v486, 0.0
  %vm741 = vcmp.gt.f32.partialorder %v488, 0.0
  %vm742 = vcmp.gt.f32.partialorder %v527, 0.0
  %vm743 = vcmp.gt.f32.partialorder %v529, 0.0
  %vm744 = vcmp.gt.f32.partialorder %v568, 0.0
  %vm745 = vcmp.gt.f32.partialorder %v570, 0.0
  %vm746 = vcmp.gt.f32.partialorder %v609, 0.0
  %vm747 = vcmp.gt.f32.partialorder %v611, 0.0
  %vm748 = vcmp.gt.f32.partialorder %v650, 0.0
  %vm749 = vcmp.gt.f32.partialorder %v652, 0.0
  %vm750 = vcmp.gt.f32.partialorder %v691, 0.0
  %vm751 = vcmp.gt.f32.partialorder %v693, 0.0
  %vm752 = vcmp.gt.f32.partialorder %v732, 0.0
  %vm753 = vcmp.gt.f32.partialorder %v734, 0.0
  %v754 = vmul.f32 %v445, 0.2
  %v755 = vmul.f32 %v447, 0.2
  %v756 = vmul.f32 %v486, 0.2
  %v757 = vmul.f32 %v488, 0.2
  %v758 = vmul.f32 %v527, 0.2
  %v759 = vmul.f32 %v529, 0.2
  %v760 = vmul.f32 %v568, 0.2
  %v761 = vmul.f32 %v570, 0.2
  %v762 = vmul.f32 %v609, 0.2
  %v763 = vmul.f32 %v611, 0.2
  %v764 = vmul.f32 %v650, 0.2
  %v765 = vmul.f32 %v652, 0.2
  %v766 = vmul.f32 %v691, 0.2
  %v767 = vmul.f32 %v693, 0.2
  %v768 = vmul.f32 %v732, 0.2
  %v769 = vmul.f32 %v734, 0.2
  %v770 = vsel %vm738, %v445, %v754
  %v771 = vsel %vm739, %v447, %v755
  %v772 = vsel %vm740, %v486, %v756
  %v773 = vsel %vm741, %v488, %v757
  %v774 = vsel %vm742, %v527, %v758
  %v775 = vsel %vm743, %v529, %v759
  %v776 = vsel %vm744, %v568, %v760
  %v777 = vsel %vm745, %v570, %v761
  %v778 = vsel %vm746, %v609, %v762
  %v779 = vsel %vm747, %v611, %v763
  %v780 = vsel %vm748, %v650, %v764
  %v781 = vsel %vm749, %v652, %v765
  %v782 = vsel %vm750, %v691, %v766
  %v783 = vsel %vm751, %v693, %v767
  %v784 = vsel %vm752, %v732, %v768
  %v785 = vsel %vm753, %v734, %v769
  %v786 = vpack.c.bf16 %v770, %v770
  %v787 = vpack.c.bf16 %v771, %v771
  %v788 = vpack.c.bf16 %v772, %v772
  %v789 = vpack.c.bf16 %v773, %v773
  %v790 = vpack.c.bf16 %v774, %v774
  %v791 = vpack.c.bf16 %v775, %v775
  %v792 = vpack.c.bf16 %v776, %v776
  %v793 = vpack.c.bf16 %v777, %v777
  %v794 = vpack.c.bf16 %v778, %v778
  %v795 = vpack.c.bf16 %v779, %v779
  %v796 = vpack.c.bf16 %v780, %v780
  %v797 = vpack.c.bf16 %v781, %v781
  %v798 = vpack.c.bf16 %v782, %v782
  %v799 = vpack.c.bf16 %v783, %v783
  %v800 = vpack.c.bf16 %v784, %v784
  %v801 = vpack.c.bf16 %v785, %v785
  %v818 = vcombine.low %v786, %v787
  %v819 = vcombine.low %v788, %v789
  %v821 = vunpack.c.l.s4 1983009808
  %v822 = vunpack.c.0.s8 %v821
  %v823 = vlaneseq
  %v824 = vshrl.u32 %v823, 7
  %v825 = vsub.s32 %v822, %v824
  %v826 = vrot.slane %v818, %v825
  %v828 = vunpack.c.l.s4 1983009808
  %v829 = vunpack.c.0.s8 %v828
  %v830 = vlaneseq
  %v831 = vshrl.u32 %v830, 7
  %v832 = vsub.s32 %v829, %v831
  %v833 = vrot.slane %v819, %v832
  %v834 = vcombine.low %v826, %v833
  %v835 = vcombine.low %v790, %v791
  %v836 = vcombine.low %v792, %v793
  %v838 = vunpack.c.l.s4 1983009808
  %v839 = vunpack.c.0.s8 %v838
  %v840 = vlaneseq
  %v841 = vshrl.u32 %v840, 7
  %v842 = vsub.s32 %v839, %v841
  %v843 = vrot.slane %v835, %v842
  %v845 = vunpack.c.l.s4 1983009808
  %v846 = vunpack.c.0.s8 %v845
  %v847 = vlaneseq
  %v848 = vshrl.u32 %v847, 7
  %v849 = vsub.s32 %v846, %v848
  %v850 = vrot.slane %v836, %v849
  %v851 = vcombine.low %v843, %v850
  %v852 = vcombine.low %v794, %v795
  %v853 = vcombine.low %v796, %v797
  %v855 = vunpack.c.l.s4 1983009808
  %v856 = vunpack.c.0.s8 %v855
  %v857 = vlaneseq
  %v858 = vshrl.u32 %v857, 7
  %v859 = vsub.s32 %v856, %v858
  %v860 = vrot.slane %v852, %v859
  %v862 = vunpack.c.l.s4 1983009808
  %v863 = vunpack.c.0.s8 %v862
  %v864 = vlaneseq
  %v865 = vshrl.u32 %v864, 7
  %v866 = vsub.s32 %v863, %v865
  %v867 = vrot.slane %v853, %v866
  %v868 = vcombine.low %v860, %v867
  %v869 = vcombine.low %v798, %v799
  %v870 = vcombine.low %v800, %v801
  %v872 = vunpack.c.l.s4 1983009808
  %v873 = vunpack.c.0.s8 %v872
  %v874 = vlaneseq
  %v875 = vshrl.u32 %v874, 7
  %v876 = vsub.s32 %v873, %v875
  %v877 = vrot.slane %v869, %v876
  %v879 = vunpack.c.l.s4 1983009808
  %v880 = vunpack.c.0.s8 %v879
  %v881 = vlaneseq
  %v882 = vshrl.u32 %v881, 7
  %v883 = vsub.s32 %v880, %v882
  %v884 = vrot.slane %v870, %v883
  %v885 = vcombine.low %v877, %v884
  %890 = vst [vmem:[%s3] sm:$0xff] %v834
  %891 = vst [vmem:[%s3 + $0x8] sm:$0xff] %v851
  %892 = vst [vmem:[%s3 + $0x10] sm:$0xff] %v868
  %893 = vst [vmem:[%s3 + $0x18] sm:$0xff] %v885
  // Predicated region
  $region14: #{netG_forward.26} parent=0 // pred_check
    _
  $region15: #{netG_forward.26} parent=0 // pred_check_branch
    %895 = sbr.rel (0) target = $region17
  $region16: #{netG_forward.26} parent=0 // pred_region
    _
  $region17: #{netG_forward.26} parent=0 // pred_fallthru
    _
  // Predicated region
  $region18: #{netG_forward.26} parent=0 // pred_check
    _
  $region19: #{netG_forward.26} parent=0 // pred_check_branch
    %897 = sbr.rel (0) target = $region21
  $region20: #{netG_forward.26} parent=0 // pred_region
    _
  $region21: #{netG_forward.26} parent=0 // pred_fallthru
    _

// kernel: netG_forward.27
$region0: #{netG_forward.27}
  #allocation0 [shape = 'u32[]', space=smem, size = 0x4, offset = 0x4, fixed_abs, tag = 'smem constant byte address 0x4 - core index']
  #allocation1 [shape = 'u32[144,128]{1,0:T(1,128)}', space=vmem, size = 0x12000, scoped, tag = 'internal scratch']
  %s0 = inlined_call_operand.vmem [shape: bf16[8,64], index: 0, kind: input, shape index: {}]
  %s1 = inlined_call_operand.vmem [shape: bf16[64,512], index: 1, kind: input, shape index: {}]
  %s2 = inlined_call_operand.vmem [shape: f32[8,1], index: 2, kind: input, shape index: {}]
  %s3 = inlined_call_operand.vmem [shape: bf16[8,512], index: 3, kind: output, shape index: {}]
  %s4 = sld [smem:[#allocation0]]
  $region22: #{netG_forward.27} parent=0
    _
  %s6 = ssub.s32 1, %s4
  %s7 = scalar_select 0, %s6, %s4
  // Predicated region
  $region2: #{netG_forward.27} parent=0 // pred_check
    _
  $region3: #{netG_forward.27} parent=0 // pred_check_branch
    %9 = sbr.rel (0) target = $region5
  $region4: #{netG_forward.27} parent=0 // pred_region
    _
  $region5: #{netG_forward.27} parent=0 // pred_fallthru
    _
  // Predicated region
  $region6: #{netG_forward.27} parent=0 // pred_check
    _
  $region7: #{netG_forward.27} parent=0 // pred_check_branch
    %11 = sbr.rel (0) target = $region9
  $region8: #{netG_forward.27} parent=0 // pred_region
    _
  $region9: #{netG_forward.27} parent=0 // pred_fallthru
    _
  // Predicated region
  $region10: #{netG_forward.27} parent=0 // pred_check
    _
  $region11: #{netG_forward.27} parent=0 // pred_check_branch
    %13 = sbr.rel (0) target = $region13
  $region12: #{netG_forward.27} parent=0 // pred_region
    _
  $region13: #{netG_forward.27} parent=0 // pred_fallthru
    _
  %v15 = vld [vmem:[%s0] sm:$0xf]
  %v16 = vld [vmem:[%s1] sm:$0xff]
  %v17 = vld [vmem:[%s1 + $0x8] sm:$0xff]
  %v18 = vld [vmem:[%s1 + $0x10] sm:$0xff]
  %v19 = vld [vmem:[%s1 + $0x18] sm:$0xff]
  %v20 = vld [vmem:[%s1 + $0x20] sm:$0xff]
  %v21 = vld [vmem:[%s1 + $0x28] sm:$0xff]
  %v22 = vld [vmem:[%s1 + $0x30] sm:$0xff]
  %v23 = vld [vmem:[%s1 + $0x38] sm:$0xff]
  %v24 = vld [vmem:[%s1 + $0x40] sm:$0xff]
  %v25 = vld [vmem:[%s1 + $0x48] sm:$0xff]
  %v26 = vld [vmem:[%s1 + $0x50] sm:$0xff]
  %v27 = vld [vmem:[%s1 + $0x58] sm:$0xff]
  %v28 = vld [vmem:[%s1 + $0x60] sm:$0xff]
  %v29 = vld [vmem:[%s1 + $0x68] sm:$0xff]
  %v30 = vld [vmem:[%s1 + $0x70] sm:$0xff]
  %v31 = vld [vmem:[%s1 + $0x78] sm:$0xff]
  %v32 = vld [vmem:[%s2] sm:$0xff]
  %34 = vset.pattern.permute.xlu0 0
  %35 = vperm.xlu0 %34, %v32
  %v36 = vpop.permute.xlu0 %35
  %v54 = vunpack.c.l.b16 %v16
  %v55 = vunpack.c.h.b16 %v16
  %v56 = vunpack.c.l.b16 %v17
  %v57 = vunpack.c.h.b16 %v17
  %v58 = vunpack.c.l.b16 %v18
  %v59 = vunpack.c.h.b16 %v18
  %v60 = vunpack.c.l.b16 %v19
  %v61 = vunpack.c.h.b16 %v19
  %v62 = vunpack.c.l.b16 %v20
  %v63 = vunpack.c.h.b16 %v20
  %v64 = vunpack.c.l.b16 %v21
  %v65 = vunpack.c.h.b16 %v21
  %v66 = vunpack.c.l.b16 %v22
  %v67 = vunpack.c.h.b16 %v22
  %v68 = vunpack.c.l.b16 %v23
  %v69 = vunpack.c.h.b16 %v23
  %v70 = vunpack.c.l.b16 %v24
  %v71 = vunpack.c.h.b16 %v24
  %v72 = vunpack.c.l.b16 %v25
  %v73 = vunpack.c.h.b16 %v25
  %v74 = vunpack.c.l.b16 %v26
  %v75 = vunpack.c.h.b16 %v26
  %v76 = vunpack.c.l.b16 %v27
  %v77 = vunpack.c.h.b16 %v27
  %v78 = vunpack.c.l.b16 %v28
  %v79 = vunpack.c.h.b16 %v28
  %v80 = vunpack.c.l.b16 %v29
  %v81 = vunpack.c.h.b16 %v29
  %v82 = vunpack.c.l.b16 %v30
  %v83 = vunpack.c.h.b16 %v30
  %v84 = vunpack.c.l.b16 %v31
  %v85 = vunpack.c.h.b16 %v31
  %v86 = vpack.c.b16 %v58, %v54
  %v87 = vpack.c.b16 %v59, %v55
  %v88 = vpack.c.b16 %v60, %v56
  %v89 = vpack.c.b16 %v61, %v57
  %v90 = vpack.c.b16 %v66, %v62
  %v91 = vpack.c.b16 %v67, %v63
  %v92 = vpack.c.b16 %v68, %v64
  %v93 = vpack.c.b16 %v69, %v65
  %v94 = vpack.c.b16 %v74, %v70
  %v95 = vpack.c.b16 %v75, %v71
  %v96 = vpack.c.b16 %v76, %v72
  %v97 = vpack.c.b16 %v77, %v73
  %v98 = vpack.c.b16 %v82, %v78
  %v99 = vpack.c.b16 %v83, %v79
  %v100 = vpack.c.b16 %v84, %v80
  %v101 = vpack.c.b16 %v85, %v81
  %vm118 = vcmask 523264
  %v120 = vsel %vm118, %v15, 0
  %122 = vmatprep.subr.bf16.mxu0 %v87
  %123 = vmatpush1.bf16.msra.mxu0 %v86
  %124 = vmatprep.subr.bf16.mxu0 %v91
  %125 = vmatpush1.bf16.msra.mxu0 %v90
  %126 = vmatprep.subr.bf16.mxu0 %v95
  %127 = vmatpush1.bf16.msra.mxu0 %v94
  %128 = vmatprep.subr.bf16.mxu0 %v99
  %129 = vmatpush1.bf16.msra.mxu0 %v98
  %130 = vmatprep.subr.bf16.mxu0 0
  %131 = vmatpush1.bf16.msra.mxu0 0
  %132 = vmatprep.subr.bf16.mxu0 0
  %133 = vmatpush1.bf16.msra.mxu0 0
  %134 = vmatprep.subr.bf16.mxu0 0
  %135 = vmatpush1.bf16.msra.mxu0 0
  %136 = vmatprep.subr.bf16.mxu0 0
  %137 = vmatpush1.bf16.msra.mxu0 0
  %138 = vmatprep.subr.bf16.mxu0 0
  %139 = vmatpush1.bf16.msra.mxu0 0
  %140 = vmatprep.subr.bf16.mxu0 0
  %141 = vmatpush1.bf16.msra.mxu0 0
  %142 = vmatprep.subr.bf16.mxu0 0
  %143 = vmatpush1.bf16.msra.mxu0 0
  %144 = vmatprep.subr.bf16.mxu0 0
  %145 = vmatpush1.bf16.msra.mxu0 0
  %146 = vmatprep.subr.bf16.mxu0 0
  %147 = vmatpush1.bf16.msra.mxu0 0
  %148 = vmatprep.subr.bf16.mxu0 0
  %149 = vmatpush1.bf16.msra.mxu0 0
  %150 = vmatprep.subr.bf16.mxu0 0
  %151 = vmatpush1.bf16.msra.mxu0 0
  %152 = vmatprep.subr.bf16.mxu0 0
  %153 = vmatpush1.bf16.msra.mxu0 0
  %154 = vmatprep.mubr.bf16.mxu0 0
  %155 = vmatmul.mubr.bf16.gmra.mrb[0].mxu0 %v120
  %v156 = vpop.f32.mrb[0].mxu0
  %v157 = vadd.f32 %v36, %v156
  %v158 = vpop.f32.mrb[0].mxu0
  %v159 = vadd.f32 %v36, %v158
  %v160 = vpop.f32.mrb[0].mxu0
  %v161 = vpop.f32.mrb[0].mxu0
  %162 = vdwg.mxu0
  %163 = vmatprep.subr.bf16.mxu0 %v89
  %164 = vmatpush1.bf16.msra.mxu0 %v88
  %165 = vmatprep.subr.bf16.mxu0 %v93
  %166 = vmatpush1.bf16.msra.mxu0 %v92
  %167 = vmatprep.subr.bf16.mxu0 %v97
  %168 = vmatpush1.bf16.msra.mxu0 %v96
  %169 = vmatprep.subr.bf16.mxu0 %v101
  %170 = vmatpush1.bf16.msra.mxu0 %v100
  %171 = vmatprep.subr.bf16.mxu0 0
  %172 = vmatpush1.bf16.msra.mxu0 0
  %173 = vmatprep.subr.bf16.mxu0 0
  %174 = vmatpush1.bf16.msra.mxu0 0
  %175 = vmatprep.subr.bf16.mxu0 0
  %176 = vmatpush1.bf16.msra.mxu0 0
  %177 = vmatprep.subr.bf16.mxu0 0
  %178 = vmatpush1.bf16.msra.mxu0 0
  %179 = vmatprep.subr.bf16.mxu0 0
  %180 = vmatpush1.bf16.msra.mxu0 0
  %181 = vmatprep.subr.bf16.mxu0 0
  %182 = vmatpush1.bf16.msra.mxu0 0
  %183 = vmatprep.subr.bf16.mxu0 0
  %184 = vmatpush1.bf16.msra.mxu0 0
  %185 = vmatprep.subr.bf16.mxu0 0
  %186 = vmatpush1.bf16.msra.mxu0 0
  %187 = vmatprep.subr.bf16.mxu0 0
  %188 = vmatpush1.bf16.msra.mxu0 0
  %189 = vmatprep.subr.bf16.mxu0 0
  %190 = vmatpush1.bf16.msra.mxu0 0
  %191 = vmatprep.subr.bf16.mxu0 0
  %192 = vmatpush1.bf16.msra.mxu0 0
  %193 = vmatprep.subr.bf16.mxu0 0
  %194 = vmatpush1.bf16.msra.mxu0 0
  %195 = vmatprep.mubr.bf16.mxu0 0
  %196 = vmatmul.mubr.bf16.gmra.mrb[0].mxu0 %v120
  %v197 = vpop.f32.mrb[0].mxu0
  %v198 = vadd.f32 %v36, %v197
  %v199 = vpop.f32.mrb[0].mxu0
  %v200 = vadd.f32 %v36, %v199
  %v201 = vpop.f32.mrb[0].mxu0
  %v202 = vpop.f32.mrb[0].mxu0
  %203 = vdwg.mxu0
  %vm204 = vcmp.gt.f32.partialorder %v157, 0.0
  %vm205 = vcmp.gt.f32.partialorder %v159, 0.0
  %vm206 = vcmp.gt.f32.partialorder %v198, 0.0
  %vm207 = vcmp.gt.f32.partialorder %v200, 0.0
  %v208 = vmul.f32 %v157, 0.2
  %v209 = vmul.f32 %v159, 0.2
  %v210 = vmul.f32 %v198, 0.2
  %v211 = vmul.f32 %v200, 0.2
  %v212 = vsel %vm204, %v157, %v208
  %v213 = vsel %vm205, %v159, %v209
  %v214 = vsel %vm206, %v198, %v210
  %v215 = vsel %vm207, %v200, %v211
  %v216 = vpack.c.bf16 %v212, %v212
  %v217 = vpack.c.bf16 %v213, %v213
  %v218 = vpack.c.bf16 %v214, %v214
  %v219 = vpack.c.bf16 %v215, %v215
  %v224 = vunpack.c.l.b16 %v216
  %v225 = vunpack.c.l.b16 %v217
  %v226 = vunpack.c.l.b16 %v218
  %v227 = vunpack.c.l.b16 %v219
  %v228 = vpack.c.b16 %v225, %v224
  %v229 = vpack.c.b16 %v227, %v226
  %232 = vst [vmem:[%s3] sm:$0xff] %v228
  %233 = vst [vmem:[%s3 + $0x8] sm:$0xff] %v229
  // Predicated region
  $region14: #{netG_forward.27} parent=0 // pred_check
    _
  $region15: #{netG_forward.27} parent=0 // pred_check_branch
    %235 = sbr.rel (0) target = $region17
  $region16: #{netG_forward.27} parent=0 // pred_region
    _
  $region17: #{netG_forward.27} parent=0 // pred_fallthru
    _
  // Predicated region
  $region18: #{netG_forward.27} parent=0 // pred_check
    _
  $region19: #{netG_forward.27} parent=0 // pred_check_branch
    %237 = sbr.rel (0) target = $region21
  $region20: #{netG_forward.27} parent=0 // pred_region
    _
  $region21: #{netG_forward.27} parent=0 // pred_fallthru
    _

// kernel: netG_forward.28
$region0: #{netG_forward.28}
  #allocation0 [shape = 'u32[]', space=smem, size = 0x4, offset = 0x4, fixed_abs, tag = 'smem constant byte address 0x4 - core index']
  #allocation1 [shape = 'u32[144,128]{1,0:T(1,128)}', space=vmem, size = 0x12000, scoped, tag = 'internal scratch']
  %s0 = inlined_call_operand.vmem [shape: bf16[16,128], index: 0, kind: input, shape index: {}]
  %s1 = inlined_call_operand.vmem [shape: bf16[128,128], index: 1, kind: input, shape index: {}]
  %s2 = inlined_call_operand.vmem [shape: f32[16,1], index: 2, kind: input, shape index: {}]
  %s3 = inlined_call_operand.vmem [shape: bf16[16,128], index: 3, kind: output, shape index: {}]
  %s4 = sld [smem:[#allocation0]]
  $region22: #{netG_forward.28} parent=0
    _
  %s6 = ssub.s32 1, %s4
  %s7 = scalar_select 0, %s6, %s4
  // Predicated region
  $region2: #{netG_forward.28} parent=0 // pred_check
    _
  $region3: #{netG_forward.28} parent=0 // pred_check_branch
    %9 = sbr.rel (0) target = $region5
  $region4: #{netG_forward.28} parent=0 // pred_region
    _
  $region5: #{netG_forward.28} parent=0 // pred_fallthru
    _
  // Predicated region
  $region6: #{netG_forward.28} parent=0 // pred_check
    _
  $region7: #{netG_forward.28} parent=0 // pred_check_branch
    %11 = sbr.rel (0) target = $region9
  $region8: #{netG_forward.28} parent=0 // pred_region
    _
  $region9: #{netG_forward.28} parent=0 // pred_fallthru
    _
  // Predicated region
  $region10: #{netG_forward.28} parent=0 // pred_check
    _
  $region11: #{netG_forward.28} parent=0 // pred_check_branch
    %13 = sbr.rel (0) target = $region13
  $region12: #{netG_forward.28} parent=0 // pred_region
    _
  $region13: #{netG_forward.28} parent=0 // pred_fallthru
    _
  %v15 = vld [vmem:[%s0] sm:$0xf]
  %v16 = vld [vmem:[%s0 + $0x4] sm:$0xf]
  %v17 = vld [vmem:[%s1] sm:$0xf]
  %v18 = vld [vmem:[%s1 + $0x4] sm:$0xf]
  %v19 = vld [vmem:[%s1 + $0x8] sm:$0xf]
  %v20 = vld [vmem:[%s1 + $0xc] sm:$0xf]
  %v21 = vld [vmem:[%s1 + $0x10] sm:$0xf]
  %v22 = vld [vmem:[%s1 + $0x14] sm:$0xf]
  %v23 = vld [vmem:[%s1 + $0x18] sm:$0xf]
  %v24 = vld [vmem:[%s1 + $0x1c] sm:$0xf]
  %v25 = vld [vmem:[%s1 + $0x20] sm:$0xf]
  %v26 = vld [vmem:[%s1 + $0x24] sm:$0xf]
  %v27 = vld [vmem:[%s1 + $0x28] sm:$0xf]
  %v28 = vld [vmem:[%s1 + $0x2c] sm:$0xf]
  %v29 = vld [vmem:[%s1 + $0x30] sm:$0xf]
  %v30 = vld [vmem:[%s1 + $0x34] sm:$0xf]
  %v31 = vld [vmem:[%s1 + $0x38] sm:$0xf]
  %v32 = vld [vmem:[%s1 + $0x3c] sm:$0xf]
  %v33 = vld [vmem:[%s2] sm:$0xff]
  %v34 = vld [vmem:[%s2 + $0x8] sm:$0xff]
  %36 = vset.pattern.permute.xlu0 0
  %37 = vperm.xlu0 %36, %v33
  %v38 = vpop.permute.xlu0 %37
  %41 = vset.pattern.permute.xlu0 0
  %42 = vperm.xlu0 %41, %v34
  %v43 = vpop.permute.xlu0 %42
  %v47 = vunpack.c.l.b16 %v15
  %v48 = vunpack.c.l.b16 %v16
  %v49 = vpack.c.b16 %v48, %v47
  %v67 = vunpack.c.l.b16 %v17
  %v68 = vunpack.c.l.b16 %v18
  %v69 = vunpack.c.l.b16 %v19
  %v70 = vunpack.c.l.b16 %v20
  %v71 = vunpack.c.l.b16 %v21
  %v72 = vunpack.c.l.b16 %v22
  %v73 = vunpack.c.l.b16 %v23
  %v74 = vunpack.c.l.b16 %v24
  %v75 = vunpack.c.l.b16 %v25
  %v76 = vunpack.c.l.b16 %v26
  %v77 = vunpack.c.l.b16 %v27
  %v78 = vunpack.c.l.b16 %v28
  %v79 = vunpack.c.l.b16 %v29
  %v80 = vunpack.c.l.b16 %v30
  %v81 = vunpack.c.l.b16 %v31
  %v82 = vunpack.c.l.b16 %v32
  %v83 = vpack.c.b16 %v68, %v67
  %v84 = vpack.c.b16 %v70, %v69
  %v85 = vpack.c.b16 %v72, %v71
  %v86 = vpack.c.b16 %v74, %v73
  %v87 = vpack.c.b16 %v76, %v75
  %v88 = vpack.c.b16 %v78, %v77
  %v89 = vpack.c.b16 %v80, %v79
  %v90 = vpack.c.b16 %v82, %v81
  %99 = vmatprep.subr.bf16.mxu0 0
  %100 = vmatpush1.bf16.msra.mxu0 %v83
  %101 = vmatprep.subr.bf16.mxu0 0
  %102 = vmatpush1.bf16.msra.mxu0 %v84
  %103 = vmatprep.subr.bf16.mxu0 0
  %104 = vmatpush1.bf16.msra.mxu0 %v85
  %105 = vmatprep.subr.bf16.mxu0 0
  %106 = vmatpush1.bf16.msra.mxu0 %v86
  %107 = vmatprep.subr.bf16.mxu0 0
  %108 = vmatpush1.bf16.msra.mxu0 %v87
  %109 = vmatprep.subr.bf16.mxu0 0
  %110 = vmatpush1.bf16.msra.mxu0 %v88
  %111 = vmatprep.subr.bf16.mxu0 0
  %112 = vmatpush1.bf16.msra.mxu0 %v89
  %113 = vmatprep.subr.bf16.mxu0 0
  %114 = vmatpush1.bf16.msra.mxu0 %v90
  %115 = vmatprep.subr.bf16.mxu0 0
  %116 = vmatpush1.bf16.msra.mxu0 0
  %117 = vmatprep.subr.bf16.mxu0 0
  %118 = vmatpush1.bf16.msra.mxu0 0
  %119 = vmatprep.subr.bf16.mxu0 0
  %120 = vmatpush1.bf16.msra.mxu0 0
  %121 = vmatprep.subr.bf16.mxu0 0
  %122 = vmatpush1.bf16.msra.mxu0 0
  %123 = vmatprep.subr.bf16.mxu0 0
  %124 = vmatpush1.bf16.msra.mxu0 0
  %125 = vmatprep.subr.bf16.mxu0 0
  %126 = vmatpush1.bf16.msra.mxu0 0
  %127 = vmatprep.subr.bf16.mxu0 0
  %128 = vmatpush1.bf16.msra.mxu0 0
  %129 = vmatprep.subr.bf16.mxu0 0
  %130 = vmatpush1.bf16.msra.mxu0 0
  %131 = vmatprep.mubr.bf16.mxu0 0
  %132 = vmatmul.mubr.bf16.gmra.mrb[0].mxu0 %v49
  %v133 = vpop.f32.mrb[0].mxu0
  %v134 = vadd.f32 %v38, %v133
  %v135 = vpop.f32.mrb[0].mxu0
  %v136 = vpop.f32.mrb[0].mxu0
  %v137 = vadd.f32 %v43, %v136
  %v138 = vpop.f32.mrb[0].mxu0
  %139 = vdwg.mxu0
  %vm140 = vcmp.gt.f32.partialorder %v134, 0.0
  %vm141 = vcmp.gt.f32.partialorder %v137, 0.0
  %v142 = vmul.f32 %v134, 0.2
  %v143 = vmul.f32 %v137, 0.2
  %v144 = vsel %vm140, %v134, %v142
  %v145 = vsel %vm141, %v137, %v143
  %v146 = vpack.c.bf16 %v145, %v144
  %v148 = vunpack.c.l.b16 %v146
  %v149 = vunpack.c.h.b16 %v146
  %v150 = vpack.c.b16 %v148, %v148
  %v151 = vpack.c.b16 %v149, %v149
  %154 = vst [vmem:[%s3] sm:$0xf] %v150
  %155 = vst [vmem:[%s3 + $0x4] sm:$0xf] %v151
  // Predicated region
  $region14: #{netG_forward.28} parent=0 // pred_check
    _
  $region15: #{netG_forward.28} parent=0 // pred_check_branch
    %157 = sbr.rel (0) target = $region17
  $region16: #{netG_forward.28} parent=0 // pred_region
    _
  $region17: #{netG_forward.28} parent=0 // pred_fallthru
    _
  // Predicated region
  $region18: #{netG_forward.28} parent=0 // pred_check
    _
  $region19: #{netG_forward.28} parent=0 // pred_check_branch
    %159 = sbr.rel (0) target = $region21
  $region20: #{netG_forward.28} parent=0 // pred_region
    _
  $region21: #{netG_forward.28} parent=0 // pred_fallthru
    _

// kernel: netG_forward.29
$region0: #{netG_forward.29}
  #allocation0 [shape = 'u32[]', space=smem, size = 0x4, offset = 0x4, fixed_abs, tag = 'smem constant byte address 0x4 - core index']
  #allocation1 [shape = 'u32[144,128]{1,0:T(1,128)}', space=vmem, size = 0x12000, scoped, tag = 'internal scratch']
  %s0 = inlined_call_operand.vmem [shape: bf16[32,256], index: 0, kind: input, shape index: {}]
  %s1 = inlined_call_operand.vmem [shape: bf16[256,32], index: 1, kind: input, shape index: {}]
  %s2 = inlined_call_operand.vmem [shape: f32[32,1], index: 2, kind: input, shape index: {}]
  %s3 = inlined_call_operand.vmem [shape: bf16[32,32], index: 3, kind: output, shape index: {}]
  %s4 = sld [smem:[#allocation0]]
  $region22: #{netG_forward.29} parent=0
    _
  %s6 = ssub.s32 1, %s4
  %s7 = scalar_select 0, %s6, %s4
  // Predicated region
  $region2: #{netG_forward.29} parent=0 // pred_check
    _
  $region3: #{netG_forward.29} parent=0 // pred_check_branch
    %9 = sbr.rel (0) target = $region5
  $region4: #{netG_forward.29} parent=0 // pred_region
    _
  $region5: #{netG_forward.29} parent=0 // pred_fallthru
    _
  // Predicated region
  $region6: #{netG_forward.29} parent=0 // pred_check
    _
  $region7: #{netG_forward.29} parent=0 // pred_check_branch
    %11 = sbr.rel (0) target = $region9
  $region8: #{netG_forward.29} parent=0 // pred_region
    _
  $region9: #{netG_forward.29} parent=0 // pred_fallthru
    _
  // Predicated region
  $region10: #{netG_forward.29} parent=0 // pred_check
    _
  $region11: #{netG_forward.29} parent=0 // pred_check_branch
    %13 = sbr.rel (0) target = $region13
  $region12: #{netG_forward.29} parent=0 // pred_region
    _
  $region13: #{netG_forward.29} parent=0 // pred_fallthru
    _
  %v15 = vld [vmem:[%s0] sm:$0xff]
  %v16 = vld [vmem:[%s0 + $0x8] sm:$0xff]
  %v17 = vld [vmem:[%s0 + $0x10] sm:$0xff]
  %v18 = vld [vmem:[%s0 + $0x18] sm:$0xff]
  %v19 = vld [vmem:[%s1] sm:$0xf]
  %v20 = vld [vmem:[%s1 + $0x4] sm:$0xf]
  %v21 = vld [vmem:[%s1 + $0x8] sm:$0xf]
  %v22 = vld [vmem:[%s1 + $0xc] sm:$0xf]
  %v23 = vld [vmem:[%s1 + $0x10] sm:$0xf]
  %v24 = vld [vmem:[%s1 + $0x14] sm:$0xf]
  %v25 = vld [vmem:[%s1 + $0x18] sm:$0xf]
  %v26 = vld [vmem:[%s1 + $0x1c] sm:$0xf]
  %v27 = vld [vmem:[%s1 + $0x20] sm:$0xf]
  %v28 = vld [vmem:[%s1 + $0x24] sm:$0xf]
  %v29 = vld [vmem:[%s1 + $0x28] sm:$0xf]
  %v30 = vld [vmem:[%s1 + $0x2c] sm:$0xf]
  %v31 = vld [vmem:[%s1 + $0x30] sm:$0xf]
  %v32 = vld [vmem:[%s1 + $0x34] sm:$0xf]
  %v33 = vld [vmem:[%s1 + $0x38] sm:$0xf]
  %v34 = vld [vmem:[%s1 + $0x3c] sm:$0xf]
  %v35 = vld [vmem:[%s1 + $0x40] sm:$0xf]
  %v36 = vld [vmem:[%s1 + $0x44] sm:$0xf]
  %v37 = vld [vmem:[%s1 + $0x48] sm:$0xf]
  %v38 = vld [vmem:[%s1 + $0x4c] sm:$0xf]
  %v39 = vld [vmem:[%s1 + $0x50] sm:$0xf]
  %v40 = vld [vmem:[%s1 + $0x54] sm:$0xf]
  %v41 = vld [vmem:[%s1 + $0x58] sm:$0xf]
  %v42 = vld [vmem:[%s1 + $0x5c] sm:$0xf]
  %v43 = vld [vmem:[%s1 + $0x60] sm:$0xf]
  %v44 = vld [vmem:[%s1 + $0x64] sm:$0xf]
  %v45 = vld [vmem:[%s1 + $0x68] sm:$0xf]
  %v46 = vld [vmem:[%s1 + $0x6c] sm:$0xf]
  %v47 = vld [vmem:[%s1 + $0x70] sm:$0xf]
  %v48 = vld [vmem:[%s1 + $0x74] sm:$0xf]
  %v49 = vld [vmem:[%s1 + $0x78] sm:$0xf]
  %v50 = vld [vmem:[%s1 + $0x7c] sm:$0xf]
  %v51 = vld [vmem:[%s2] sm:$0xff]
  %v52 = vld [vmem:[%s2 + $0x8] sm:$0xff]
  %v53 = vld [vmem:[%s2 + $0x10] sm:$0xff]
  %v54 = vld [vmem:[%s2 + $0x18] sm:$0xff]
  %56 = vset.pattern.permute.xlu0 0
  %57 = vperm.xlu0 %56, %v51
  %v58 = vpop.permute.xlu0 %57
  %61 = vset.pattern.permute.xlu0 0
  %62 = vperm.xlu0 %61, %v52
  %v63 = vpop.permute.xlu0 %62
  %66 = vset.pattern.permute.xlu0 0
  %67 = vperm.xlu0 %66, %v53
  %v68 = vpop.permute.xlu0 %67
  %71 = vset.pattern.permute.xlu0 0
  %72 = vperm.xlu0 %71, %v54
  %v73 = vpop.permute.xlu0 %72
  %v79 = vunpack.c.l.b16 %v15
  %v80 = vunpack.c.h.b16 %v15
  %v81 = vunpack.c.l.b16 %v16
  %v82 = vunpack.c.h.b16 %v16
  %v83 = vunpack.c.l.b16 %v17
  %v84 = vunpack.c.h.b16 %v17
  %v85 = vunpack.c.l.b16 %v18
  %v86 = vunpack.c.h.b16 %v18
  %v87 = vpack.c.b16 %v81, %v79
  %v88 = vpack.c.b16 %v82, %v80
  %v89 = vpack.c.b16 %v85, %v83
  %v90 = vpack.c.b16 %v86, %v84
  %v127 = vunpack.c.l.b16 %v19
  %v128 = vunpack.c.l.b16 %v20
  %v129 = vunpack.c.l.b16 %v21
  %v130 = vunpack.c.l.b16 %v22
  %v131 = vunpack.c.l.b16 %v23
  %v132 = vunpack.c.l.b16 %v24
  %v133 = vunpack.c.l.b16 %v25
  %v134 = vunpack.c.l.b16 %v26
  %v135 = vunpack.c.l.b16 %v27
  %v136 = vunpack.c.l.b16 %v28
  %v137 = vunpack.c.l.b16 %v29
  %v138 = vunpack.c.l.b16 %v30
  %v139 = vunpack.c.l.b16 %v31
  %v140 = vunpack.c.l.b16 %v32
  %v141 = vunpack.c.l.b16 %v33
  %v142 = vunpack.c.l.b16 %v34
  %v143 = vunpack.c.l.b16 %v35
  %v144 = vunpack.c.l.b16 %v36
  %v145 = vunpack.c.l.b16 %v37
  %v146 = vunpack.c.l.b16 %v38
  %v147 = vunpack.c.l.b16 %v39
  %v148 = vunpack.c.l.b16 %v40
  %v149 = vunpack.c.l.b16 %v41
  %v150 = vunpack.c.l.b16 %v42
  %v151 = vunpack.c.l.b16 %v43
  %v152 = vunpack.c.l.b16 %v44
  %v153 = vunpack.c.l.b16 %v45
  %v154 = vunpack.c.l.b16 %v46
  %v155 = vunpack.c.l.b16 %v47
  %v156 = vunpack.c.l.b16 %v48
  %v157 = vunpack.c.l.b16 %v49
  %v158 = vunpack.c.l.b16 %v50
  %v159 = vpack.c.b16 %v128, %v127
  %v160 = vpack.c.b16 %v130, %v129
  %v161 = vpack.c.b16 %v132, %v131
  %v162 = vpack.c.b16 %v134, %v133
  %v163 = vpack.c.b16 %v136, %v135
  %v164 = vpack.c.b16 %v138, %v137
  %v165 = vpack.c.b16 %v140, %v139
  %v166 = vpack.c.b16 %v142, %v141
  %v167 = vpack.c.b16 %v144, %v143
  %v168 = vpack.c.b16 %v146, %v145
  %v169 = vpack.c.b16 %v148, %v147
  %v170 = vpack.c.b16 %v150, %v149
  %v171 = vpack.c.b16 %v152, %v151
  %v172 = vpack.c.b16 %v154, %v153
  %v173 = vpack.c.b16 %v156, %v155
  %v174 = vpack.c.b16 %v158, %v157
  %191 = vmatprep.subr.bf16.mxu0 0
  %192 = vmatpush1.bf16.msra.mxu0 %v159
  %193 = vmatprep.subr.bf16.mxu0 0
  %194 = vmatpush1.bf16.msra.mxu0 %v160
  %195 = vmatprep.subr.bf16.mxu0 0
  %196 = vmatpush1.bf16.msra.mxu0 %v161
  %197 = vmatprep.subr.bf16.mxu0 0
  %198 = vmatpush1.bf16.msra.mxu0 %v162
  %199 = vmatprep.subr.bf16.mxu0 0
  %200 = vmatpush1.bf16.msra.mxu0 %v163
  %201 = vmatprep.subr.bf16.mxu0 0
  %202 = vmatpush1.bf16.msra.mxu0 %v164
  %203 = vmatprep.subr.bf16.mxu0 0
  %204 = vmatpush1.bf16.msra.mxu0 %v165
  %205 = vmatprep.subr.bf16.mxu0 0
  %206 = vmatpush1.bf16.msra.mxu0 %v166
  %207 = vmatprep.subr.bf16.mxu0 0
  %208 = vmatpush1.bf16.msra.mxu0 %v167
  %209 = vmatprep.subr.bf16.mxu0 0
  %210 = vmatpush1.bf16.msra.mxu0 %v168
  %211 = vmatprep.subr.bf16.mxu0 0
  %212 = vmatpush1.bf16.msra.mxu0 %v169
  %213 = vmatprep.subr.bf16.mxu0 0
  %214 = vmatpush1.bf16.msra.mxu0 %v170
  %215 = vmatprep.subr.bf16.mxu0 0
  %216 = vmatpush1.bf16.msra.mxu0 %v171
  %217 = vmatprep.subr.bf16.mxu0 0
  %218 = vmatpush1.bf16.msra.mxu0 %v172
  %219 = vmatprep.subr.bf16.mxu0 0
  %220 = vmatpush1.bf16.msra.mxu0 %v173
  %221 = vmatprep.subr.bf16.mxu0 0
  %222 = vmatpush1.bf16.msra.mxu0 %v174
  %223 = vmatprep.mubr.bf16.mxu0 %v88
  %224 = vmatmul.mubr.bf16.gmra.mrb[0].mxu0 %v87
  %v225 = vpop.f32.mrb[0].mxu0
  %v226 = vadd.f32 %v58, %v225
  %v227 = vpop.f32.mrb[0].mxu0
  %v228 = vpop.f32.mrb[0].mxu0
  %v229 = vadd.f32 %v63, %v228
  %v230 = vpop.f32.mrb[0].mxu0
  %231 = vmatprep.mubr.bf16.mxu0 %v90
  %232 = vmatmul.mubr.bf16.gmra.mrb[0].mxu0 %v89
  %v233 = vpop.f32.mrb[0].mxu0
  %v234 = vadd.f32 %v68, %v233
  %v235 = vpop.f32.mrb[0].mxu0
  %v236 = vpop.f32.mrb[0].mxu0
  %v237 = vadd.f32 %v73, %v236
  %v238 = vpop.f32.mrb[0].mxu0
  %239 = vdwg.mxu0
  %vm240 = vcmp.gt.f32.partialorder %v226, 0.0
  %vm241 = vcmp.gt.f32.partialorder %v229, 0.0
  %vm242 = vcmp.gt.f32.partialorder %v234, 0.0
  %vm243 = vcmp.gt.f32.partialorder %v237, 0.0
  %v244 = vmul.f32 %v226, 0.2
  %v245 = vmul.f32 %v229, 0.2
  %v246 = vmul.f32 %v234, 0.2
  %v247 = vmul.f32 %v237, 0.2
  %v248 = vsel %vm240, %v226, %v244
  %v249 = vsel %vm241, %v229, %v245
  %v250 = vsel %vm242, %v234, %v246
  %v251 = vsel %vm243, %v237, %v247
  %v252 = vpack.c.bf16 %v249, %v248
  %v253 = vpack.c.bf16 %v251, %v250
  %v256 = vunpack.c.l.b16 %v252
  %v257 = vunpack.c.h.b16 %v252
  %v258 = vunpack.c.l.b16 %v253
  %v259 = vunpack.c.h.b16 %v253
  %v260 = vpack.c.b16 %v256, %v256
  %v261 = vpack.c.b16 %v257, %v257
  %v262 = vpack.c.b16 %v258, %v258
  %v263 = vpack.c.b16 %v259, %v259
  %vm268 = vcmask 257024
  %269 = vst.msk [vmem:[%s3] sm:$0xf] %vm268, %v260
  %270 = vst.msk [vmem:[%s3 + $0x4] sm:$0xf] %vm268, %v261
  %271 = vst.msk [vmem:[%s3 + $0x8] sm:$0xf] %vm268, %v262
  %272 = vst.msk [vmem:[%s3 + $0xc] sm:$0xf] %vm268, %v263
  // Predicated region
  $region14: #{netG_forward.29} parent=0 // pred_check
    _
  $region15: #{netG_forward.29} parent=0 // pred_check_branch
    %274 = sbr.rel (0) target = $region17
  $region16: #{netG_forward.29} parent=0 // pred_region
    _
  $region17: #{netG_forward.29} parent=0 // pred_fallthru
    _
  // Predicated region
  $region18: #{netG_forward.29} parent=0 // pred_check
    _
  $region19: #{netG_forward.29} parent=0 // pred_check_branch
    %276 = sbr.rel (0) target = $region21
  $region20: #{netG_forward.29} parent=0 // pred_region
    _
  $region21: #{netG_forward.29} parent=0 // pred_fallthru
    _

// kernel: netG_forward.31
$region0: #{netG_forward.31}
  #allocation0 [shape = 'u32[]', space=smem, size = 0x4, offset = 0x4, fixed_abs, tag = 'smem constant byte address 0x4 - core index']
  #allocation1 [shape = 'u32[144,128]{1,0:T(1,128)}', space=vmem, size = 0x12000, scoped, tag = 'internal scratch']
  %s0 = inlined_call_operand.vmem [shape: bf16[32,256], index: 0, kind: input, shape index: {}]
  %s1 = inlined_call_operand.vmem [shape: bf16[256,32], index: 1, kind: input, shape index: {}]
  %s2 = inlined_call_operand.vmem [shape: f32[32,1], index: 2, kind: input, shape index: {}]
  %s3 = inlined_call_operand.vmem [shape: bf16[32,32], index: 3, kind: output, shape index: {}]
  %s4 = sld [smem:[#allocation0]]
  $region22: #{netG_forward.31} parent=0
    _
  %s6 = ssub.s32 1, %s4
  %s7 = scalar_select 0, %s6, %s4
  // Predicated region
  $region2: #{netG_forward.31} parent=0 // pred_check
    _
  $region3: #{netG_forward.31} parent=0 // pred_check_branch
    %9 = sbr.rel (0) target = $region5
  $region4: #{netG_forward.31} parent=0 // pred_region
    _
  $region5: #{netG_forward.31} parent=0 // pred_fallthru
    _
  // Predicated region
  $region6: #{netG_forward.31} parent=0 // pred_check
    _
  $region7: #{netG_forward.31} parent=0 // pred_check_branch
    %11 = sbr.rel (0) target = $region9
  $region8: #{netG_forward.31} parent=0 // pred_region
    _
  $region9: #{netG_forward.31} parent=0 // pred_fallthru
    _
  // Predicated region
  $region10: #{netG_forward.31} parent=0 // pred_check
    _
  $region11: #{netG_forward.31} parent=0 // pred_check_branch
    %13 = sbr.rel (0) target = $region13
  $region12: #{netG_forward.31} parent=0 // pred_region
    _
  $region13: #{netG_forward.31} parent=0 // pred_fallthru
    _
  %v15 = vld [vmem:[%s0] sm:$0xff]
  %v16 = vld [vmem:[%s0 + $0x8] sm:$0xff]
  %v17 = vld [vmem:[%s0 + $0x10] sm:$0xff]
  %v18 = vld [vmem:[%s0 + $0x18] sm:$0xff]
  %v19 = vld [vmem:[%s1] sm:$0xf]
  %v20 = vld [vmem:[%s1 + $0x4] sm:$0xf]
  %v21 = vld [vmem:[%s1 + $0x8] sm:$0xf]
  %v22 = vld [vmem:[%s1 + $0xc] sm:$0xf]
  %v23 = vld [vmem:[%s1 + $0x10] sm:$0xf]
  %v24 = vld [vmem:[%s1 + $0x14] sm:$0xf]
  %v25 = vld [vmem:[%s1 + $0x18] sm:$0xf]
  %v26 = vld [vmem:[%s1 + $0x1c] sm:$0xf]
  %v27 = vld [vmem:[%s1 + $0x20] sm:$0xf]
  %v28 = vld [vmem:[%s1 + $0x24] sm:$0xf]
  %v29 = vld [vmem:[%s1 + $0x28] sm:$0xf]
  %v30 = vld [vmem:[%s1 + $0x2c] sm:$0xf]
  %v31 = vld [vmem:[%s1 + $0x30] sm:$0xf]
  %v32 = vld [vmem:[%s1 + $0x34] sm:$0xf]
  %v33 = vld [vmem:[%s1 + $0x38] sm:$0xf]
  %v34 = vld [vmem:[%s1 + $0x3c] sm:$0xf]
  %v35 = vld [vmem:[%s1 + $0x40] sm:$0xf]
  %v36 = vld [vmem:[%s1 + $0x44] sm:$0xf]
  %v37 = vld [vmem:[%s1 + $0x48] sm:$0xf]
  %v38 = vld [vmem:[%s1 + $0x4c] sm:$0xf]
  %v39 = vld [vmem:[%s1 + $0x50] sm:$0xf]
  %v40 = vld [vmem:[%s1 + $0x54] sm:$0xf]
  %v41 = vld [vmem:[%s1 + $0x58] sm:$0xf]
  %v42 = vld [vmem:[%s1 + $0x5c] sm:$0xf]
  %v43 = vld [vmem:[%s1 + $0x60] sm:$0xf]
  %v44 = vld [vmem:[%s1 + $0x64] sm:$0xf]
  %v45 = vld [vmem:[%s1 + $0x68] sm:$0xf]
  %v46 = vld [vmem:[%s1 + $0x6c] sm:$0xf]
  %v47 = vld [vmem:[%s1 + $0x70] sm:$0xf]
  %v48 = vld [vmem:[%s1 + $0x74] sm:$0xf]
  %v49 = vld [vmem:[%s1 + $0x78] sm:$0xf]
  %v50 = vld [vmem:[%s1 + $0x7c] sm:$0xf]
  %v51 = vld [vmem:[%s2] sm:$0xff]
  %v52 = vld [vmem:[%s2 + $0x8] sm:$0xff]
  %v53 = vld [vmem:[%s2 + $0x10] sm:$0xff]
  %v54 = vld [vmem:[%s2 + $0x18] sm:$0xff]
  %56 = vset.pattern.permute.xlu0 0
  %57 = vperm.xlu0 %56, %v51
  %v58 = vpop.permute.xlu0 %57
  %61 = vset.pattern.permute.xlu0 0
  %62 = vperm.xlu0 %61, %v52
  %v63 = vpop.permute.xlu0 %62
  %66 = vset.pattern.permute.xlu0 0
  %67 = vperm.xlu0 %66, %v53
  %v68 = vpop.permute.xlu0 %67
  %71 = vset.pattern.permute.xlu0 0
  %72 = vperm.xlu0 %71, %v54
  %v73 = vpop.permute.xlu0 %72
  %v79 = vunpack.c.l.b16 %v15
  %v80 = vunpack.c.h.b16 %v15
  %v81 = vunpack.c.l.b16 %v16
  %v82 = vunpack.c.h.b16 %v16
  %v83 = vunpack.c.l.b16 %v17
  %v84 = vunpack.c.h.b16 %v17
  %v85 = vunpack.c.l.b16 %v18
  %v86 = vunpack.c.h.b16 %v18
  %v87 = vpack.c.b16 %v81, %v79
  %v88 = vpack.c.b16 %v82, %v80
  %v89 = vpack.c.b16 %v85, %v83
  %v90 = vpack.c.b16 %v86, %v84
  %v127 = vunpack.c.l.b16 %v19
  %v128 = vunpack.c.l.b16 %v20
  %v129 = vunpack.c.l.b16 %v21
  %v130 = vunpack.c.l.b16 %v22
  %v131 = vunpack.c.l.b16 %v23
  %v132 = vunpack.c.l.b16 %v24
  %v133 = vunpack.c.l.b16 %v25
  %v134 = vunpack.c.l.b16 %v26
  %v135 = vunpack.c.l.b16 %v27
  %v136 = vunpack.c.l.b16 %v28
  %v137 = vunpack.c.l.b16 %v29
  %v138 = vunpack.c.l.b16 %v30
  %v139 = vunpack.c.l.b16 %v31
  %v140 = vunpack.c.l.b16 %v32
  %v141 = vunpack.c.l.b16 %v33
  %v142 = vunpack.c.l.b16 %v34
  %v143 = vunpack.c.l.b16 %v35
  %v144 = vunpack.c.l.b16 %v36
  %v145 = vunpack.c.l.b16 %v37
  %v146 = vunpack.c.l.b16 %v38
  %v147 = vunpack.c.l.b16 %v39
  %v148 = vunpack.c.l.b16 %v40
  %v149 = vunpack.c.l.b16 %v41
  %v150 = vunpack.c.l.b16 %v42
  %v151 = vunpack.c.l.b16 %v43
  %v152 = vunpack.c.l.b16 %v44
  %v153 = vunpack.c.l.b16 %v45
  %v154 = vunpack.c.l.b16 %v46
  %v155 = vunpack.c.l.b16 %v47
  %v156 = vunpack.c.l.b16 %v48
  %v157 = vunpack.c.l.b16 %v49
  %v158 = vunpack.c.l.b16 %v50
  %v159 = vpack.c.b16 %v128, %v127
  %v160 = vpack.c.b16 %v130, %v129
  %v161 = vpack.c.b16 %v132, %v131
  %v162 = vpack.c.b16 %v134, %v133
  %v163 = vpack.c.b16 %v136, %v135
  %v164 = vpack.c.b16 %v138, %v137
  %v165 = vpack.c.b16 %v140, %v139
  %v166 = vpack.c.b16 %v142, %v141
  %v167 = vpack.c.b16 %v144, %v143
  %v168 = vpack.c.b16 %v146, %v145
  %v169 = vpack.c.b16 %v148, %v147
  %v170 = vpack.c.b16 %v150, %v149
  %v171 = vpack.c.b16 %v152, %v151
  %v172 = vpack.c.b16 %v154, %v153
  %v173 = vpack.c.b16 %v156, %v155
  %v174 = vpack.c.b16 %v158, %v157
  %191 = vmatprep.subr.bf16.mxu0 0
  %192 = vmatpush1.bf16.msra.mxu0 %v159
  %193 = vmatprep.subr.bf16.mxu0 0
  %194 = vmatpush1.bf16.msra.mxu0 %v160
  %195 = vmatprep.subr.bf16.mxu0 0
  %196 = vmatpush1.bf16.msra.mxu0 %v161
  %197 = vmatprep.subr.bf16.mxu0 0
  %198 = vmatpush1.bf16.msra.mxu0 %v162
  %199 = vmatprep.subr.bf16.mxu0 0
  %200 = vmatpush1.bf16.msra.mxu0 %v163
  %201 = vmatprep.subr.bf16.mxu0 0
  %202 = vmatpush1.bf16.msra.mxu0 %v164
  %203 = vmatprep.subr.bf16.mxu0 0
  %204 = vmatpush1.bf16.msra.mxu0 %v165
  %205 = vmatprep.subr.bf16.mxu0 0
  %206 = vmatpush1.bf16.msra.mxu0 %v166
  %207 = vmatprep.subr.bf16.mxu0 0
  %208 = vmatpush1.bf16.msra.mxu0 %v167
  %209 = vmatprep.subr.bf16.mxu0 0
  %210 = vmatpush1.bf16.msra.mxu0 %v168
  %211 = vmatprep.subr.bf16.mxu0 0
  %212 = vmatpush1.bf16.msra.mxu0 %v169
  %213 = vmatprep.subr.bf16.mxu0 0
  %214 = vmatpush1.bf16.msra.mxu0 %v170
  %215 = vmatprep.subr.bf16.mxu0 0
  %216 = vmatpush1.bf16.msra.mxu0 %v171
  %217 = vmatprep.subr.bf16.mxu0 0
  %218 = vmatpush1.bf16.msra.mxu0 %v172
  %219 = vmatprep.subr.bf16.mxu0 0
  %220 = vmatpush1.bf16.msra.mxu0 %v173
  %221 = vmatprep.subr.bf16.mxu0 0
  %222 = vmatpush1.bf16.msra.mxu0 %v174
  %223 = vmatprep.mubr.bf16.mxu0 %v88
  %224 = vmatmul.mubr.bf16.gmra.mrb[0].mxu0 %v87
  %v225 = vpop.f32.mrb[0].mxu0
  %v226 = vadd.f32 %v58, %v225
  %v227 = vpop.f32.mrb[0].mxu0
  %v228 = vpop.f32.mrb[0].mxu0
  %v229 = vadd.f32 %v63, %v228
  %v230 = vpop.f32.mrb[0].mxu0
  %231 = vmatprep.mubr.bf16.mxu0 %v90
  %232 = vmatmul.mubr.bf16.gmra.mrb[0].mxu0 %v89
  %v233 = vpop.f32.mrb[0].mxu0
  %v234 = vadd.f32 %v68, %v233
  %v235 = vpop.f32.mrb[0].mxu0
  %v236 = vpop.f32.mrb[0].mxu0
  %v237 = vadd.f32 %v73, %v236
  %v238 = vpop.f32.mrb[0].mxu0
  %239 = vdwg.mxu0
  %v240 = vmax.f32 %v226, 0.0
  %v241 = vmax.f32 %v229, 0.0
  %v242 = vmax.f32 %v234, 0.0
  %v243 = vmax.f32 %v237, 0.0
  %v244 = vpack.c.bf16 %v241, %v240
  %v245 = vpack.c.bf16 %v243, %v242
  %v248 = vunpack.c.l.b16 %v244
  %v249 = vunpack.c.h.b16 %v244
  %v250 = vunpack.c.l.b16 %v245
  %v251 = vunpack.c.h.b16 %v245
  %v252 = vpack.c.b16 %v248, %v248
  %v253 = vpack.c.b16 %v249, %v249
  %v254 = vpack.c.b16 %v250, %v250
  %v255 = vpack.c.b16 %v251, %v251
  %vm260 = vcmask 257024
  %261 = vst.msk [vmem:[%s3] sm:$0xf] %vm260, %v252
  %262 = vst.msk [vmem:[%s3 + $0x4] sm:$0xf] %vm260, %v253
  %263 = vst.msk [vmem:[%s3 + $0x8] sm:$0xf] %vm260, %v254
  %264 = vst.msk [vmem:[%s3 + $0xc] sm:$0xf] %vm260, %v255
  // Predicated region
  $region14: #{netG_forward.31} parent=0 // pred_check
    _
  $region15: #{netG_forward.31} parent=0 // pred_check_branch
    %266 = sbr.rel (0) target = $region17
  $region16: #{netG_forward.31} parent=0 // pred_region
    _
  $region17: #{netG_forward.31} parent=0 // pred_fallthru
    _
  // Predicated region
  $region18: #{netG_forward.31} parent=0 // pred_check
    _
  $region19: #{netG_forward.31} parent=0 // pred_check_branch
    %268 = sbr.rel (0) target = $region21
  $region20: #{netG_forward.31} parent=0 // pred_region
    _
  $region21: #{netG_forward.31} parent=0 // pred_fallthru
    _

// kernel: netG_forward.30
$region0: #{netG_forward.30}
  #allocation0 [shape = 'u32[]', space=smem, size = 0x4, offset = 0x4, fixed_abs, tag = 'smem constant byte address 0x4 - core index']
  #allocation1 [shape = 'u32[144,128]{1,0:T(1,128)}', space=vmem, size = 0x12000, scoped, tag = 'internal scratch']
  %s0 = inlined_call_operand.vmem [shape: bf16[16,512], index: 0, kind: input, shape index: {}]
  %s1 = inlined_call_operand.vmem [shape: bf16[512,2], index: 1, kind: input, shape index: {}]
  %s2 = inlined_call_operand.vmem [shape: f32[16,1], index: 2, kind: input, shape index: {}]
  %s3 = inlined_call_operand.vmem [shape: bf16[16,2], index: 3, kind: output, shape index: {}]
  %s4 = sld [smem:[#allocation0]]
  $region22: #{netG_forward.30} parent=0
    _
  %s6 = ssub.s32 1, %s4
  %s7 = scalar_select 0, %s6, %s4
  // Predicated region
  $region2: #{netG_forward.30} parent=0 // pred_check
    _
  $region3: #{netG_forward.30} parent=0 // pred_check_branch
    %9 = sbr.rel (0) target = $region5
  $region4: #{netG_forward.30} parent=0 // pred_region
    _
  $region5: #{netG_forward.30} parent=0 // pred_fallthru
    _
  // Predicated region
  $region6: #{netG_forward.30} parent=0 // pred_check
    _
  $region7: #{netG_forward.30} parent=0 // pred_check_branch
    %11 = sbr.rel (0) target = $region9
  $region8: #{netG_forward.30} parent=0 // pred_region
    _
  $region9: #{netG_forward.30} parent=0 // pred_fallthru
    _
  // Predicated region
  $region10: #{netG_forward.30} parent=0 // pred_check
    _
  $region11: #{netG_forward.30} parent=0 // pred_check_branch
    %13 = sbr.rel (0) target = $region13
  $region12: #{netG_forward.30} parent=0 // pred_region
    _
  $region13: #{netG_forward.30} parent=0 // pred_fallthru
    _
  %v15 = vld [vmem:[%s0] sm:$0xff]
  %v16 = vld [vmem:[%s0 + $0x8] sm:$0xff]
  %v17 = vld [vmem:[%s0 + $0x10] sm:$0xff]
  %v18 = vld [vmem:[%s0 + $0x18] sm:$0xff]
  %v19 = vld [vmem:[%s1] sm:$0xf]
  %v20 = vld [vmem:[%s1 + $0x4] sm:$0xf]
  %v21 = vld [vmem:[%s1 + $0x8] sm:$0xf]
  %v22 = vld [vmem:[%s1 + $0xc] sm:$0xf]
  %v23 = vld [vmem:[%s1 + $0x10] sm:$0xf]
  %v24 = vld [vmem:[%s1 + $0x14] sm:$0xf]
  %v25 = vld [vmem:[%s1 + $0x18] sm:$0xf]
  %v26 = vld [vmem:[%s1 + $0x1c] sm:$0xf]
  %v27 = vld [vmem:[%s1 + $0x20] sm:$0xf]
  %v28 = vld [vmem:[%s1 + $0x24] sm:$0xf]
  %v29 = vld [vmem:[%s1 + $0x28] sm:$0xf]
  %v30 = vld [vmem:[%s1 + $0x2c] sm:$0xf]
  %v31 = vld [vmem:[%s1 + $0x30] sm:$0xf]
  %v32 = vld [vmem:[%s1 + $0x34] sm:$0xf]
  %v33 = vld [vmem:[%s1 + $0x38] sm:$0xf]
  %v34 = vld [vmem:[%s1 + $0x3c] sm:$0xf]
  %v35 = vld [vmem:[%s1 + $0x40] sm:$0xf]
  %v36 = vld [vmem:[%s1 + $0x44] sm:$0xf]
  %v37 = vld [vmem:[%s1 + $0x48] sm:$0xf]
  %v38 = vld [vmem:[%s1 + $0x4c] sm:$0xf]
  %v39 = vld [vmem:[%s1 + $0x50] sm:$0xf]
  %v40 = vld [vmem:[%s1 + $0x54] sm:$0xf]
  %v41 = vld [vmem:[%s1 + $0x58] sm:$0xf]
  %v42 = vld [vmem:[%s1 + $0x5c] sm:$0xf]
  %v43 = vld [vmem:[%s1 + $0x60] sm:$0xf]
  %v44 = vld [vmem:[%s1 + $0x64] sm:$0xf]
  %v45 = vld [vmem:[%s1 + $0x68] sm:$0xf]
  %v46 = vld [vmem:[%s1 + $0x6c] sm:$0xf]
  %v47 = vld [vmem:[%s1 + $0x70] sm:$0xf]
  %v48 = vld [vmem:[%s1 + $0x74] sm:$0xf]
  %v49 = vld [vmem:[%s1 + $0x78] sm:$0xf]
  %v50 = vld [vmem:[%s1 + $0x7c] sm:$0xf]
  %v51 = vld [vmem:[%s1 + $0x80] sm:$0xf]
  %v52 = vld [vmem:[%s1 + $0x84] sm:$0xf]
  %v53 = vld [vmem:[%s1 + $0x88] sm:$0xf]
  %v54 = vld [vmem:[%s1 + $0x8c] sm:$0xf]
  %v55 = vld [vmem:[%s1 + $0x90] sm:$0xf]
  %v56 = vld [vmem:[%s1 + $0x94] sm:$0xf]
  %v57 = vld [vmem:[%s1 + $0x98] sm:$0xf]
  %v58 = vld [vmem:[%s1 + $0x9c] sm:$0xf]
  %v59 = vld [vmem:[%s1 + $0xa0] sm:$0xf]
  %v60 = vld [vmem:[%s1 + $0xa4] sm:$0xf]
  %v61 = vld [vmem:[%s1 + $0xa8] sm:$0xf]
  %v62 = vld [vmem:[%s1 + $0xac] sm:$0xf]
  %v63 = vld [vmem:[%s1 + $0xb0] sm:$0xf]
  %v64 = vld [vmem:[%s1 + $0xb4] sm:$0xf]
  %v65 = vld [vmem:[%s1 + $0xb8] sm:$0xf]
  %v66 = vld [vmem:[%s1 + $0xbc] sm:$0xf]
  %v67 = vld [vmem:[%s1 + $0xc0] sm:$0xf]
  %v68 = vld [vmem:[%s1 + $0xc4] sm:$0xf]
  %v69 = vld [vmem:[%s1 + $0xc8] sm:$0xf]
  %v70 = vld [vmem:[%s1 + $0xcc] sm:$0xf]
  %v71 = vld [vmem:[%s1 + $0xd0] sm:$0xf]
  %v72 = vld [vmem:[%s1 + $0xd4] sm:$0xf]
  %v73 = vld [vmem:[%s1 + $0xd8] sm:$0xf]
  %v74 = vld [vmem:[%s1 + $0xdc] sm:$0xf]
  %v75 = vld [vmem:[%s1 + $0xe0] sm:$0xf]
  %v76 = vld [vmem:[%s1 + $0xe4] sm:$0xf]
  %v77 = vld [vmem:[%s1 + $0xe8] sm:$0xf]
  %v78 = vld [vmem:[%s1 + $0xec] sm:$0xf]
  %v79 = vld [vmem:[%s1 + $0xf0] sm:$0xf]
  %v80 = vld [vmem:[%s1 + $0xf4] sm:$0xf]
  %v81 = vld [vmem:[%s1 + $0xf8] sm:$0xf]
  %v82 = vld [vmem:[%s1 + $0xfc] sm:$0xf]
  %v83 = vld [vmem:[%s2] sm:$0xff]
  %v84 = vld [vmem:[%s2 + $0x8] sm:$0xff]
  %86 = vset.pattern.permute.xlu0 0
  %87 = vperm.xlu0 %86, %v83
  %v88 = vpop.permute.xlu0 %87
  %91 = vset.pattern.permute.xlu0 0
  %92 = vperm.xlu0 %91, %v84
  %v93 = vpop.permute.xlu0 %92
  %v99 = vunpack.c.l.b16 %v15
  %v100 = vunpack.c.h.b16 %v15
  %v101 = vunpack.c.l.b16 %v16
  %v102 = vunpack.c.h.b16 %v16
  %v103 = vunpack.c.l.b16 %v17
  %v104 = vunpack.c.h.b16 %v17
  %v105 = vunpack.c.l.b16 %v18
  %v106 = vunpack.c.h.b16 %v18
  %v107 = vpack.c.b16 %v103, %v99
  %v108 = vpack.c.b16 %v104, %v100
  %v109 = vpack.c.b16 %v105, %v101
  %v110 = vpack.c.b16 %v106, %v102
  %v179 = vunpack.c.l.b16 %v19
  %v180 = vunpack.c.l.b16 %v20
  %v181 = vunpack.c.l.b16 %v21
  %v182 = vunpack.c.l.b16 %v22
  %v183 = vunpack.c.l.b16 %v23
  %v184 = vunpack.c.l.b16 %v24
  %v185 = vunpack.c.l.b16 %v25
  %v186 = vunpack.c.l.b16 %v26
  %v187 = vunpack.c.l.b16 %v27
  %v188 = vunpack.c.l.b16 %v28
  %v189 = vunpack.c.l.b16 %v29
  %v190 = vunpack.c.l.b16 %v30
  %v191 = vunpack.c.l.b16 %v31
  %v192 = vunpack.c.l.b16 %v32
  %v193 = vunpack.c.l.b16 %v33
  %v194 = vunpack.c.l.b16 %v34
  %v195 = vunpack.c.l.b16 %v35
  %v196 = vunpack.c.l.b16 %v36
  %v197 = vunpack.c.l.b16 %v37
  %v198 = vunpack.c.l.b16 %v38
  %v199 = vunpack.c.l.b16 %v39
  %v200 = vunpack.c.l.b16 %v40
  %v201 = vunpack.c.l.b16 %v41
  %v202 = vunpack.c.l.b16 %v42
  %v203 = vunpack.c.l.b16 %v43
  %v204 = vunpack.c.l.b16 %v44
  %v205 = vunpack.c.l.b16 %v45
  %v206 = vunpack.c.l.b16 %v46
  %v207 = vunpack.c.l.b16 %v47
  %v208 = vunpack.c.l.b16 %v48
  %v209 = vunpack.c.l.b16 %v49
  %v210 = vunpack.c.l.b16 %v50
  %v211 = vunpack.c.l.b16 %v51
  %v212 = vunpack.c.l.b16 %v52
  %v213 = vunpack.c.l.b16 %v53
  %v214 = vunpack.c.l.b16 %v54
  %v215 = vunpack.c.l.b16 %v55
  %v216 = vunpack.c.l.b16 %v56
  %v217 = vunpack.c.l.b16 %v57
  %v218 = vunpack.c.l.b16 %v58
  %v219 = vunpack.c.l.b16 %v59
  %v220 = vunpack.c.l.b16 %v60
  %v221 = vunpack.c.l.b16 %v61
  %v222 = vunpack.c.l.b16 %v62
  %v223 = vunpack.c.l.b16 %v63
  %v224 = vunpack.c.l.b16 %v64
  %v225 = vunpack.c.l.b16 %v65
  %v226 = vunpack.c.l.b16 %v66
  %v227 = vunpack.c.l.b16 %v67
  %v228 = vunpack.c.l.b16 %v68
  %v229 = vunpack.c.l.b16 %v69
  %v230 = vunpack.c.l.b16 %v70
  %v231 = vunpack.c.l.b16 %v71
  %v232 = vunpack.c.l.b16 %v72
  %v233 = vunpack.c.l.b16 %v73
  %v234 = vunpack.c.l.b16 %v74
  %v235 = vunpack.c.l.b16 %v75
  %v236 = vunpack.c.l.b16 %v76
  %v237 = vunpack.c.l.b16 %v77
  %v238 = vunpack.c.l.b16 %v78
  %v239 = vunpack.c.l.b16 %v79
  %v240 = vunpack.c.l.b16 %v80
  %v241 = vunpack.c.l.b16 %v81
  %v242 = vunpack.c.l.b16 %v82
  %v243 = vpack.c.b16 %v180, %v179
  %v244 = vpack.c.b16 %v182, %v181
  %v245 = vpack.c.b16 %v184, %v183
  %v246 = vpack.c.b16 %v186, %v185
  %v247 = vpack.c.b16 %v188, %v187
  %v248 = vpack.c.b16 %v190, %v189
  %v249 = vpack.c.b16 %v192, %v191
  %v250 = vpack.c.b16 %v194, %v193
  %v251 = vpack.c.b16 %v196, %v195
  %v252 = vpack.c.b16 %v198, %v197
  %v253 = vpack.c.b16 %v200, %v199
  %v254 = vpack.c.b16 %v202, %v201
  %v255 = vpack.c.b16 %v204, %v203
  %v256 = vpack.c.b16 %v206, %v205
  %v257 = vpack.c.b16 %v208, %v207
  %v258 = vpack.c.b16 %v210, %v209
  %v259 = vpack.c.b16 %v212, %v211
  %v260 = vpack.c.b16 %v214, %v213
  %v261 = vpack.c.b16 %v216, %v215
  %v262 = vpack.c.b16 %v218, %v217
  %v263 = vpack.c.b16 %v220, %v219
  %v264 = vpack.c.b16 %v222, %v221
  %v265 = vpack.c.b16 %v224, %v223
  %v266 = vpack.c.b16 %v226, %v225
  %v267 = vpack.c.b16 %v228, %v227
  %v268 = vpack.c.b16 %v230, %v229
  %v269 = vpack.c.b16 %v232, %v231
  %v270 = vpack.c.b16 %v234, %v233
  %v271 = vpack.c.b16 %v236, %v235
  %v272 = vpack.c.b16 %v238, %v237
  %v273 = vpack.c.b16 %v240, %v239
  %v274 = vpack.c.b16 %v242, %v241
  %307 = vmatprep.subr.bf16.mxu0 0
  %308 = vmatpush1.bf16.msra.mxu0 %v243
  %309 = vmatprep.subr.bf16.mxu0 0
  %310 = vmatpush1.bf16.msra.mxu0 %v244
  %311 = vmatprep.subr.bf16.mxu0 0
  %312 = vmatpush1.bf16.msra.mxu0 %v245
  %313 = vmatprep.subr.bf16.mxu0 0
  %314 = vmatpush1.bf16.msra.mxu0 %v246
  %315 = vmatprep.subr.bf16.mxu0 0
  %316 = vmatpush1.bf16.msra.mxu0 %v247
  %317 = vmatprep.subr.bf16.mxu0 0
  %318 = vmatpush1.bf16.msra.mxu0 %v248
  %319 = vmatprep.subr.bf16.mxu0 0
  %320 = vmatpush1.bf16.msra.mxu0 %v249
  %321 = vmatprep.subr.bf16.mxu0 0
  %322 = vmatpush1.bf16.msra.mxu0 %v250
  %323 = vmatprep.subr.bf16.mxu0 0
  %324 = vmatpush1.bf16.msra.mxu0 %v251
  %325 = vmatprep.subr.bf16.mxu0 0
  %326 = vmatpush1.bf16.msra.mxu0 %v252
  %327 = vmatprep.subr.bf16.mxu0 0
  %328 = vmatpush1.bf16.msra.mxu0 %v253
  %329 = vmatprep.subr.bf16.mxu0 0
  %330 = vmatpush1.bf16.msra.mxu0 %v254
  %331 = vmatprep.subr.bf16.mxu0 0
  %332 = vmatpush1.bf16.msra.mxu0 %v255
  %333 = vmatprep.subr.bf16.mxu0 0
  %334 = vmatpush1.bf16.msra.mxu0 %v256
  %335 = vmatprep.subr.bf16.mxu0 0
  %336 = vmatpush1.bf16.msra.mxu0 %v257
  %337 = vmatprep.subr.bf16.mxu0 0
  %338 = vmatpush1.bf16.msra.mxu0 %v258
  %339 = vmatprep.mubr.bf16.mxu0 %v108
  %340 = vmatmul.mubr.bf16.gmra.mrb[0].mxu0 %v107
  %v341 = vpop.f32.mrb[0].mxu0
  %v342 = vadd.f32 %v88, %v341
  %v343 = vpop.f32.mrb[0].mxu0
  %v344 = vpop.f32.mrb[0].mxu0
  %v345 = vadd.f32 %v93, %v344
  %v346 = vpop.f32.mrb[0].mxu0
  %347 = vdwg.mxu0
  %348 = vmatprep.subr.bf16.mxu0 0
  %349 = vmatpush1.bf16.msra.mxu0 %v259
  %350 = vmatprep.subr.bf16.mxu0 0
  %351 = vmatpush1.bf16.msra.mxu0 %v260
  %352 = vmatprep.subr.bf16.mxu0 0
  %353 = vmatpush1.bf16.msra.mxu0 %v261
  %354 = vmatprep.subr.bf16.mxu0 0
  %355 = vmatpush1.bf16.msra.mxu0 %v262
  %356 = vmatprep.subr.bf16.mxu0 0
  %357 = vmatpush1.bf16.msra.mxu0 %v263
  %358 = vmatprep.subr.bf16.mxu0 0
  %359 = vmatpush1.bf16.msra.mxu0 %v264
  %360 = vmatprep.subr.bf16.mxu0 0
  %361 = vmatpush1.bf16.msra.mxu0 %v265
  %362 = vmatprep.subr.bf16.mxu0 0
  %363 = vmatpush1.bf16.msra.mxu0 %v266
  %364 = vmatprep.subr.bf16.mxu0 0
  %365 = vmatpush1.bf16.msra.mxu0 %v267
  %366 = vmatprep.subr.bf16.mxu0 0
  %367 = vmatpush1.bf16.msra.mxu0 %v268
  %368 = vmatprep.subr.bf16.mxu0 0
  %369 = vmatpush1.bf16.msra.mxu0 %v269
  %370 = vmatprep.subr.bf16.mxu0 0
  %371 = vmatpush1.bf16.msra.mxu0 %v270
  %372 = vmatprep.subr.bf16.mxu0 0
  %373 = vmatpush1.bf16.msra.mxu0 %v271
  %374 = vmatprep.subr.bf16.mxu0 0
  %375 = vmatpush1.bf16.msra.mxu0 %v272
  %376 = vmatprep.subr.bf16.mxu0 0
  %377 = vmatpush1.bf16.msra.mxu0 %v273
  %378 = vmatprep.subr.bf16.mxu0 0
  %379 = vmatpush1.bf16.msra.mxu0 %v274
  %380 = vmatprep.mubr.bf16.mxu0 %v110
  %381 = vmatmul.mubr.bf16.gmra.mrb[0].mxu0 %v109
  %v382 = vpop.f32.mrb[0].mxu0
  %v383 = vadd.f32 %v342, %v382
  %v384 = vpop.f32.mrb[0].mxu0
  %v385 = vpop.f32.mrb[0].mxu0
  %v386 = vadd.f32 %v345, %v385
  %v387 = vpop.f32.mrb[0].mxu0
  %388 = vdwg.mxu0
  %vm389 = vcmp.gt.f32.partialorder %v383, 0.0
  %vm390 = vcmp.gt.f32.partialorder %v386, 0.0
  %v391 = vmul.f32 %v383, 0.2
  %v392 = vmul.f32 %v386, 0.2
  %v393 = vsel %vm389, %v383, %v391
  %v394 = vsel %vm390, %v386, %v392
  %v395 = vpack.c.bf16 %v394, %v393
  %v397 = vunpack.c.l.b16 %v395
  %v398 = vunpack.c.h.b16 %v395
  %v399 = vpack.c.b16 %v397, %v397
  %v400 = vpack.c.b16 %v398, %v398
  %vm403 = vcmask 11264
  %404 = vst.msk [vmem:[%s3] sm:$0xf] %vm403, %v399
  %405 = vst.msk [vmem:[%s3 + $0x4] sm:$0xf] %vm403, %v400
  // Predicated region
  $region14: #{netG_forward.30} parent=0 // pred_check
    _
  $region15: #{netG_forward.30} parent=0 // pred_check_branch
    %407 = sbr.rel (0) target = $region17
  $region16: #{netG_forward.30} parent=0 // pred_region
    _
  $region17: #{netG_forward.30} parent=0 // pred_fallthru
    _
  // Predicated region
  $region18: #{netG_forward.30} parent=0 // pred_check
    _
  $region19: #{netG_forward.30} parent=0 // pred_check_branch
    %409 = sbr.rel (0) target = $region21
  $region20: #{netG_forward.30} parent=0 // pred_region
    _
  $region21: #{netG_forward.30} parent=0 // pred_fallthru
    _

// kernel: netG_forward.32
$region0: #{netG_forward.32}
  #allocation0 [shape = 'u32[]', space=smem, size = 0x4, offset = 0x4, fixed_abs, tag = 'smem constant byte address 0x4 - core index']
  #allocation1 [shape = 'u32[144,128]{1,0:T(1,128)}', space=vmem, size = 0x12000, scoped, tag = 'internal scratch']
  %s0 = inlined_call_operand.vmem [shape: bf16[16,128], index: 0, kind: input, shape index: {}]
  %s1 = inlined_call_operand.vmem [shape: bf16[128,32], index: 1, kind: input, shape index: {}]
  %s2 = inlined_call_operand.vmem [shape: f32[16,1], index: 2, kind: input, shape index: {}]
  %s3 = inlined_call_operand.vmem [shape: bf16[16,32], index: 3, kind: output, shape index: {}]
  %s4 = sld [smem:[#allocation0]]
  $region22: #{netG_forward.32} parent=0
    _
  %s6 = ssub.s32 1, %s4
  %s7 = scalar_select 0, %s6, %s4
  // Predicated region
  $region2: #{netG_forward.32} parent=0 // pred_check
    _
  $region3: #{netG_forward.32} parent=0 // pred_check_branch
    %9 = sbr.rel (0) target = $region5
  $region4: #{netG_forward.32} parent=0 // pred_region
    _
  $region5: #{netG_forward.32} parent=0 // pred_fallthru
    _
  // Predicated region
  $region6: #{netG_forward.32} parent=0 // pred_check
    _
  $region7: #{netG_forward.32} parent=0 // pred_check_branch
    %11 = sbr.rel (0) target = $region9
  $region8: #{netG_forward.32} parent=0 // pred_region
    _
  $region9: #{netG_forward.32} parent=0 // pred_fallthru
    _
  // Predicated region
  $region10: #{netG_forward.32} parent=0 // pred_check
    _
  $region11: #{netG_forward.32} parent=0 // pred_check_branch
    %13 = sbr.rel (0) target = $region13
  $region12: #{netG_forward.32} parent=0 // pred_region
    _
  $region13: #{netG_forward.32} parent=0 // pred_fallthru
    _
  %v15 = vld [vmem:[%s0] sm:$0xf]
  %v16 = vld [vmem:[%s0 + $0x4] sm:$0xf]
  %v17 = vld [vmem:[%s1] sm:$0xf]
  %v18 = vld [vmem:[%s1 + $0x4] sm:$0xf]
  %v19 = vld [vmem:[%s1 + $0x8] sm:$0xf]
  %v20 = vld [vmem:[%s1 + $0xc] sm:$0xf]
  %v21 = vld [vmem:[%s1 + $0x10] sm:$0xf]
  %v22 = vld [vmem:[%s1 + $0x14] sm:$0xf]
  %v23 = vld [vmem:[%s1 + $0x18] sm:$0xf]
  %v24 = vld [vmem:[%s1 + $0x1c] sm:$0xf]
  %v25 = vld [vmem:[%s1 + $0x20] sm:$0xf]
  %v26 = vld [vmem:[%s1 + $0x24] sm:$0xf]
  %v27 = vld [vmem:[%s1 + $0x28] sm:$0xf]
  %v28 = vld [vmem:[%s1 + $0x2c] sm:$0xf]
  %v29 = vld [vmem:[%s1 + $0x30] sm:$0xf]
  %v30 = vld [vmem:[%s1 + $0x34] sm:$0xf]
  %v31 = vld [vmem:[%s1 + $0x38] sm:$0xf]
  %v32 = vld [vmem:[%s1 + $0x3c] sm:$0xf]
  %v33 = vld [vmem:[%s2] sm:$0xff]
  %v34 = vld [vmem:[%s2 + $0x8] sm:$0xff]
  %36 = vset.pattern.permute.xlu0 0
  %37 = vperm.xlu0 %36, %v33
  %v38 = vpop.permute.xlu0 %37
  %41 = vset.pattern.permute.xlu0 0
  %42 = vperm.xlu0 %41, %v34
  %v43 = vpop.permute.xlu0 %42
  %v47 = vunpack.c.l.b16 %v15
  %v48 = vunpack.c.l.b16 %v16
  %v49 = vpack.c.b16 %v48, %v47
  %v67 = vunpack.c.l.b16 %v17
  %v68 = vunpack.c.l.b16 %v18
  %v69 = vunpack.c.l.b16 %v19
  %v70 = vunpack.c.l.b16 %v20
  %v71 = vunpack.c.l.b16 %v21
  %v72 = vunpack.c.l.b16 %v22
  %v73 = vunpack.c.l.b16 %v23
  %v74 = vunpack.c.l.b16 %v24
  %v75 = vunpack.c.l.b16 %v25
  %v76 = vunpack.c.l.b16 %v26
  %v77 = vunpack.c.l.b16 %v27
  %v78 = vunpack.c.l.b16 %v28
  %v79 = vunpack.c.l.b16 %v29
  %v80 = vunpack.c.l.b16 %v30
  %v81 = vunpack.c.l.b16 %v31
  %v82 = vunpack.c.l.b16 %v32
  %v83 = vpack.c.b16 %v68, %v67
  %v84 = vpack.c.b16 %v70, %v69
  %v85 = vpack.c.b16 %v72, %v71
  %v86 = vpack.c.b16 %v74, %v73
  %v87 = vpack.c.b16 %v76, %v75
  %v88 = vpack.c.b16 %v78, %v77
  %v89 = vpack.c.b16 %v80, %v79
  %v90 = vpack.c.b16 %v82, %v81
  %99 = vmatprep.subr.bf16.mxu0 0
  %100 = vmatpush1.bf16.msra.mxu0 %v83
  %101 = vmatprep.subr.bf16.mxu0 0
  %102 = vmatpush1.bf16.msra.mxu0 %v84
  %103 = vmatprep.subr.bf16.mxu0 0
  %104 = vmatpush1.bf16.msra.mxu0 %v85
  %105 = vmatprep.subr.bf16.mxu0 0
  %106 = vmatpush1.bf16.msra.mxu0 %v86
  %107 = vmatprep.subr.bf16.mxu0 0
  %108 = vmatpush1.bf16.msra.mxu0 %v87
  %109 = vmatprep.subr.bf16.mxu0 0
  %110 = vmatpush1.bf16.msra.mxu0 %v88
  %111 = vmatprep.subr.bf16.mxu0 0
  %112 = vmatpush1.bf16.msra.mxu0 %v89
  %113 = vmatprep.subr.bf16.mxu0 0
  %114 = vmatpush1.bf16.msra.mxu0 %v90
  %115 = vmatprep.subr.bf16.mxu0 0
  %116 = vmatpush1.bf16.msra.mxu0 0
  %117 = vmatprep.subr.bf16.mxu0 0
  %118 = vmatpush1.bf16.msra.mxu0 0
  %119 = vmatprep.subr.bf16.mxu0 0
  %120 = vmatpush1.bf16.msra.mxu0 0
  %121 = vmatprep.subr.bf16.mxu0 0
  %122 = vmatpush1.bf16.msra.mxu0 0
  %123 = vmatprep.subr.bf16.mxu0 0
  %124 = vmatpush1.bf16.msra.mxu0 0
  %125 = vmatprep.subr.bf16.mxu0 0
  %126 = vmatpush1.bf16.msra.mxu0 0
  %127 = vmatprep.subr.bf16.mxu0 0
  %128 = vmatpush1.bf16.msra.mxu0 0
  %129 = vmatprep.subr.bf16.mxu0 0
  %130 = vmatpush1.bf16.msra.mxu0 0
  %131 = vmatprep.mubr.bf16.mxu0 0
  %132 = vmatmul.mubr.bf16.gmra.mrb[0].mxu0 %v49
  %v133 = vpop.f32.mrb[0].mxu0
  %v134 = vadd.f32 %v38, %v133
  %v135 = vpop.f32.mrb[0].mxu0
  %v136 = vpop.f32.mrb[0].mxu0
  %v137 = vadd.f32 %v43, %v136
  %v138 = vpop.f32.mrb[0].mxu0
  %139 = vdwg.mxu0
  %v140 = vmax.f32 %v134, 0.0
  %v141 = vmax.f32 %v137, 0.0
  %v142 = vpack.c.bf16 %v141, %v140
  %v144 = vunpack.c.l.b16 %v142
  %v145 = vunpack.c.h.b16 %v142
  %v146 = vpack.c.b16 %v144, %v144
  %v147 = vpack.c.b16 %v145, %v145
  %vm150 = vcmask 257024
  %151 = vst.msk [vmem:[%s3] sm:$0xf] %vm150, %v146
  %152 = vst.msk [vmem:[%s3 + $0x4] sm:$0xf] %vm150, %v147
  // Predicated region
  $region14: #{netG_forward.32} parent=0 // pred_check
    _
  $region15: #{netG_forward.32} parent=0 // pred_check_branch
    %154 = sbr.rel (0) target = $region17
  $region16: #{netG_forward.32} parent=0 // pred_region
    _
  $region17: #{netG_forward.32} parent=0 // pred_fallthru
    _
  // Predicated region
  $region18: #{netG_forward.32} parent=0 // pred_check
    _
  $region19: #{netG_forward.32} parent=0 // pred_check_branch
    %156 = sbr.rel (0) target = $region21
  $region20: #{netG_forward.32} parent=0 // pred_region
    _
  $region21: #{netG_forward.32} parent=0 // pred_fallthru
    _

// kernel: netG_forward.36
$region0: #{netG_forward.36}
  #allocation0 [shape = 'u32[]', space=smem, size = 0x4, offset = 0x4, fixed_abs, tag = 'smem constant byte address 0x4 - core index']
  #allocation1 [shape = 'u32[144,128]{1,0:T(1,128)}', space=vmem, size = 0x12000, scoped, tag = 'internal scratch']
  %s0 = inlined_call_operand.vmem [shape: bf16[8,64], index: 0, kind: input, shape index: {}]
  %s1 = inlined_call_operand.vmem [shape: bf16[64,128], index: 1, kind: input, shape index: {}]
  %s2 = inlined_call_operand.vmem [shape: f32[8,1], index: 2, kind: input, shape index: {}]
  %s3 = inlined_call_operand.vmem [shape: bf16[8,128], index: 3, kind: output, shape index: {}]
  %s4 = sld [smem:[#allocation0]]
  $region22: #{netG_forward.36} parent=0
    _
  %s6 = ssub.s32 1, %s4
  %s7 = scalar_select 0, %s6, %s4
  // Predicated region
  $region2: #{netG_forward.36} parent=0 // pred_check
    _
  $region3: #{netG_forward.36} parent=0 // pred_check_branch
    %9 = sbr.rel (0) target = $region5
  $region4: #{netG_forward.36} parent=0 // pred_region
    _
  $region5: #{netG_forward.36} parent=0 // pred_fallthru
    _
  // Predicated region
  $region6: #{netG_forward.36} parent=0 // pred_check
    _
  $region7: #{netG_forward.36} parent=0 // pred_check_branch
    %11 = sbr.rel (0) target = $region9
  $region8: #{netG_forward.36} parent=0 // pred_region
    _
  $region9: #{netG_forward.36} parent=0 // pred_fallthru
    _
  // Predicated region
  $region10: #{netG_forward.36} parent=0 // pred_check
    _
  $region11: #{netG_forward.36} parent=0 // pred_check_branch
    %13 = sbr.rel (0) target = $region13
  $region12: #{netG_forward.36} parent=0 // pred_region
    _
  $region13: #{netG_forward.36} parent=0 // pred_fallthru
    _
  %v15 = vld [vmem:[%s0] sm:$0xf]
  %v16 = vld [vmem:[%s1] sm:$0xf]
  %v17 = vld [vmem:[%s1 + $0x4] sm:$0xf]
  %v18 = vld [vmem:[%s1 + $0x8] sm:$0xf]
  %v19 = vld [vmem:[%s1 + $0xc] sm:$0xf]
  %v20 = vld [vmem:[%s1 + $0x10] sm:$0xf]
  %v21 = vld [vmem:[%s1 + $0x14] sm:$0xf]
  %v22 = vld [vmem:[%s1 + $0x18] sm:$0xf]
  %v23 = vld [vmem:[%s1 + $0x1c] sm:$0xf]
  %v24 = vld [vmem:[%s2] sm:$0xff]
  %26 = vset.pattern.permute.xlu0 0
  %27 = vperm.xlu0 %26, %v24
  %v28 = vpop.permute.xlu0 %27
  %v38 = vunpack.c.l.b16 %v16
  %v39 = vunpack.c.l.b16 %v17
  %v40 = vunpack.c.l.b16 %v18
  %v41 = vunpack.c.l.b16 %v19
  %v42 = vunpack.c.l.b16 %v20
  %v43 = vunpack.c.l.b16 %v21
  %v44 = vunpack.c.l.b16 %v22
  %v45 = vunpack.c.l.b16 %v23
  %v46 = vpack.c.b16 %v39, %v38
  %v47 = vpack.c.b16 %v41, %v40
  %v48 = vpack.c.b16 %v43, %v42
  %v49 = vpack.c.b16 %v45, %v44
  %vm54 = vcmask 523264
  %v56 = vsel %vm54, %v15, 0
  %58 = vmatprep.subr.bf16.mxu0 0
  %59 = vmatpush1.bf16.msra.mxu0 %v46
  %60 = vmatprep.subr.bf16.mxu0 0
  %61 = vmatpush1.bf16.msra.mxu0 %v47
  %62 = vmatprep.subr.bf16.mxu0 0
  %63 = vmatpush1.bf16.msra.mxu0 %v48
  %64 = vmatprep.subr.bf16.mxu0 0
  %65 = vmatpush1.bf16.msra.mxu0 %v49
  %66 = vmatprep.subr.bf16.mxu0 0
  %67 = vmatpush1.bf16.msra.mxu0 0
  %68 = vmatprep.subr.bf16.mxu0 0
  %69 = vmatpush1.bf16.msra.mxu0 0
  %70 = vmatprep.subr.bf16.mxu0 0
  %71 = vmatpush1.bf16.msra.mxu0 0
  %72 = vmatprep.subr.bf16.mxu0 0
  %73 = vmatpush1.bf16.msra.mxu0 0
  %74 = vmatprep.subr.bf16.mxu0 0
  %75 = vmatpush1.bf16.msra.mxu0 0
  %76 = vmatprep.subr.bf16.mxu0 0
  %77 = vmatpush1.bf16.msra.mxu0 0
  %78 = vmatprep.subr.bf16.mxu0 0
  %79 = vmatpush1.bf16.msra.mxu0 0
  %80 = vmatprep.subr.bf16.mxu0 0
  %81 = vmatpush1.bf16.msra.mxu0 0
  %82 = vmatprep.subr.bf16.mxu0 0
  %83 = vmatpush1.bf16.msra.mxu0 0
  %84 = vmatprep.subr.bf16.mxu0 0
  %85 = vmatpush1.bf16.msra.mxu0 0
  %86 = vmatprep.subr.bf16.mxu0 0
  %87 = vmatpush1.bf16.msra.mxu0 0
  %88 = vmatprep.subr.bf16.mxu0 0
  %89 = vmatpush1.bf16.msra.mxu0 0
  %90 = vmatprep.mubr.bf16.mxu0 0
  %91 = vmatmul.mubr.bf16.gmra.mrb[0].mxu0 %v56
  %v92 = vpop.f32.mrb[0].mxu0
  %v93 = vadd.f32 %v28, %v92
  %v94 = vpop.f32.mrb[0].mxu0
  %v95 = vpop.f32.mrb[0].mxu0
  %v96 = vpop.f32.mrb[0].mxu0
  %97 = vdwg.mxu0
  %v98 = vmax.f32 %v93, 0.0
  %v99 = vpack.c.bf16 %v98, %v98
  %100 = vst [vmem:[%s3] sm:$0xf] %v99
  // Predicated region
  $region14: #{netG_forward.36} parent=0 // pred_check
    _
  $region15: #{netG_forward.36} parent=0 // pred_check_branch
    %102 = sbr.rel (0) target = $region17
  $region16: #{netG_forward.36} parent=0 // pred_region
    _
  $region17: #{netG_forward.36} parent=0 // pred_fallthru
    _
  // Predicated region
  $region18: #{netG_forward.36} parent=0 // pred_check
    _
  $region19: #{netG_forward.36} parent=0 // pred_check_branch
    %104 = sbr.rel (0) target = $region21
  $region20: #{netG_forward.36} parent=0 // pred_region
    _
  $region21: #{netG_forward.36} parent=0 // pred_fallthru
    _

// kernel: netG_forward.40
$region0: #{netG_forward.40}
  #allocation0 [shape = 'u32[]', space=smem, size = 0x4, offset = 0x4, fixed_abs, tag = 'smem constant byte address 0x4 - core index']
  #allocation1 [shape = 'u32[144,128]{1,0:T(1,128)}', space=vmem, size = 0x12000, scoped, tag = 'internal scratch']
  %s0 = inlined_call_operand.vmem [shape: bf16[4,32], index: 0, kind: input, shape index: {}]
  %s1 = inlined_call_operand.vmem [shape: bf16[32,512], index: 1, kind: input, shape index: {}]
  %s2 = inlined_call_operand.vmem [shape: f32[4,1], index: 2, kind: input, shape index: {}]
  %s3 = inlined_call_operand.vmem [shape: bf16[4,512], index: 3, kind: output, shape index: {}]
  %s4 = sld [smem:[#allocation0]]
  $region22: #{netG_forward.40} parent=0
    _
  %s6 = ssub.s32 1, %s4
  %s7 = scalar_select 0, %s6, %s4
  // Predicated region
  $region2: #{netG_forward.40} parent=0 // pred_check
    _
  $region3: #{netG_forward.40} parent=0 // pred_check_branch
    %9 = sbr.rel (0) target = $region5
  $region4: #{netG_forward.40} parent=0 // pred_region
    _
  $region5: #{netG_forward.40} parent=0 // pred_fallthru
    _
  // Predicated region
  $region6: #{netG_forward.40} parent=0 // pred_check
    _
  $region7: #{netG_forward.40} parent=0 // pred_check_branch
    %11 = sbr.rel (0) target = $region9
  $region8: #{netG_forward.40} parent=0 // pred_region
    _
  $region9: #{netG_forward.40} parent=0 // pred_fallthru
    _
  // Predicated region
  $region10: #{netG_forward.40} parent=0 // pred_check
    _
  $region11: #{netG_forward.40} parent=0 // pred_check_branch
    %13 = sbr.rel (0) target = $region13
  $region12: #{netG_forward.40} parent=0 // pred_region
    _
  $region13: #{netG_forward.40} parent=0 // pred_fallthru
    _
  %v15 = vld [vmem:[%s0] sm:$0x3]
  %v16 = vld [vmem:[%s1] sm:$0xff]
  %v17 = vld [vmem:[%s1 + $0x8] sm:$0xff]
  %v18 = vld [vmem:[%s1 + $0x10] sm:$0xff]
  %v19 = vld [vmem:[%s1 + $0x18] sm:$0xff]
  %v20 = vld [vmem:[%s1 + $0x20] sm:$0xff]
  %v21 = vld [vmem:[%s1 + $0x28] sm:$0xff]
  %v22 = vld [vmem:[%s1 + $0x30] sm:$0xff]
  %v23 = vld [vmem:[%s1 + $0x38] sm:$0xff]
  %v24 = vld [vmem:[%s2] sm:$0xf]
  %26 = vset.pattern.permute.xlu0 0
  %27 = vperm.xlu0 %26, %v24
  %v28 = vpop.permute.xlu0 %27
  %v38 = vunpack.c.l.b16 %v16
  %v39 = vunpack.c.h.b16 %v16
  %v40 = vunpack.c.l.b16 %v17
  %v41 = vunpack.c.h.b16 %v17
  %v42 = vunpack.c.l.b16 %v18
  %v43 = vunpack.c.h.b16 %v18
  %v44 = vunpack.c.l.b16 %v19
  %v45 = vunpack.c.h.b16 %v19
  %v46 = vunpack.c.l.b16 %v20
  %v47 = vunpack.c.h.b16 %v20
  %v48 = vunpack.c.l.b16 %v21
  %v49 = vunpack.c.h.b16 %v21
  %v50 = vunpack.c.l.b16 %v22
  %v51 = vunpack.c.h.b16 %v22
  %v52 = vunpack.c.l.b16 %v23
  %v53 = vunpack.c.h.b16 %v23
  %v54 = vpack.c.b16 %v42, %v38
  %v55 = vpack.c.b16 %v43, %v39
  %v56 = vpack.c.b16 %v44, %v40
  %v57 = vpack.c.b16 %v45, %v41
  %v58 = vpack.c.b16 %v50, %v46
  %v59 = vpack.c.b16 %v51, %v47
  %v60 = vpack.c.b16 %v52, %v48
  %v61 = vpack.c.b16 %v53, %v49
  %vm70 = vcmask 261120
  %v72 = vsel %vm70, %v15, 0
  %74 = vmatprep.subr.bf16.mxu0 %v55
  %75 = vmatpush1.bf16.msra.mxu0 %v54
  %76 = vmatprep.subr.bf16.mxu0 %v59
  %77 = vmatpush1.bf16.msra.mxu0 %v58
  %78 = vmatprep.subr.bf16.mxu0 0
  %79 = vmatpush1.bf16.msra.mxu0 0
  %80 = vmatprep.subr.bf16.mxu0 0
  %81 = vmatpush1.bf16.msra.mxu0 0
  %82 = vmatprep.subr.bf16.mxu0 0
  %83 = vmatpush1.bf16.msra.mxu0 0
  %84 = vmatprep.subr.bf16.mxu0 0
  %85 = vmatpush1.bf16.msra.mxu0 0
  %86 = vmatprep.subr.bf16.mxu0 0
  %87 = vmatpush1.bf16.msra.mxu0 0
  %88 = vmatprep.subr.bf16.mxu0 0
  %89 = vmatpush1.bf16.msra.mxu0 0
  %90 = vmatprep.subr.bf16.mxu0 0
  %91 = vmatpush1.bf16.msra.mxu0 0
  %92 = vmatprep.subr.bf16.mxu0 0
  %93 = vmatpush1.bf16.msra.mxu0 0
  %94 = vmatprep.subr.bf16.mxu0 0
  %95 = vmatpush1.bf16.msra.mxu0 0
  %96 = vmatprep.subr.bf16.mxu0 0
  %97 = vmatpush1.bf16.msra.mxu0 0
  %98 = vmatprep.subr.bf16.mxu0 0
  %99 = vmatpush1.bf16.msra.mxu0 0
  %100 = vmatprep.subr.bf16.mxu0 0
  %101 = vmatpush1.bf16.msra.mxu0 0
  %102 = vmatprep.subr.bf16.mxu0 0
  %103 = vmatpush1.bf16.msra.mxu0 0
  %104 = vmatprep.subr.bf16.mxu0 0
  %105 = vmatpush1.bf16.msra.mxu0 0
  %106 = vmatprep.mubr.bf16.mxu0 0
  %107 = vmatmul.mubr.bf16.gmra.mrb[0].mxu0 %v72
  %v108 = vpop.f32.mrb[0].mxu0
  %v109 = vadd.f32 %v28, %v108
  %v110 = vpop.f32.mrb[0].mxu0
  %v111 = vadd.f32 %v28, %v110
  %v112 = vpop.f32.mrb[0].mxu0
  %v113 = vpop.f32.mrb[0].mxu0
  %114 = vdwg.mxu0
  %115 = vmatprep.subr.bf16.mxu0 %v57
  %116 = vmatpush1.bf16.msra.mxu0 %v56
  %117 = vmatprep.subr.bf16.mxu0 %v61
  %118 = vmatpush1.bf16.msra.mxu0 %v60
  %119 = vmatprep.subr.bf16.mxu0 0
  %120 = vmatpush1.bf16.msra.mxu0 0
  %121 = vmatprep.subr.bf16.mxu0 0
  %122 = vmatpush1.bf16.msra.mxu0 0
  %123 = vmatprep.subr.bf16.mxu0 0
  %124 = vmatpush1.bf16.msra.mxu0 0
  %125 = vmatprep.subr.bf16.mxu0 0
  %126 = vmatpush1.bf16.msra.mxu0 0
  %127 = vmatprep.subr.bf16.mxu0 0
  %128 = vmatpush1.bf16.msra.mxu0 0
  %129 = vmatprep.subr.bf16.mxu0 0
  %130 = vmatpush1.bf16.msra.mxu0 0
  %131 = vmatprep.subr.bf16.mxu0 0
  %132 = vmatpush1.bf16.msra.mxu0 0
  %133 = vmatprep.subr.bf16.mxu0 0
  %134 = vmatpush1.bf16.msra.mxu0 0
  %135 = vmatprep.subr.bf16.mxu0 0
  %136 = vmatpush1.bf16.msra.mxu0 0
  %137 = vmatprep.subr.bf16.mxu0 0
  %138 = vmatpush1.bf16.msra.mxu0 0
  %139 = vmatprep.subr.bf16.mxu0 0
  %140 = vmatpush1.bf16.msra.mxu0 0
  %141 = vmatprep.subr.bf16.mxu0 0
  %142 = vmatpush1.bf16.msra.mxu0 0
  %143 = vmatprep.subr.bf16.mxu0 0
  %144 = vmatpush1.bf16.msra.mxu0 0
  %145 = vmatprep.subr.bf16.mxu0 0
  %146 = vmatpush1.bf16.msra.mxu0 0
  %147 = vmatprep.mubr.bf16.mxu0 0
  %148 = vmatmul.mubr.bf16.gmra.mrb[0].mxu0 %v72
  %v149 = vpop.f32.mrb[0].mxu0
  %v150 = vadd.f32 %v28, %v149
  %v151 = vpop.f32.mrb[0].mxu0
  %v152 = vadd.f32 %v28, %v151
  %v153 = vpop.f32.mrb[0].mxu0
  %v154 = vpop.f32.mrb[0].mxu0
  %155 = vdwg.mxu0
  %v156 = vmax.f32 %v109, 0.0
  %v157 = vmax.f32 %v111, 0.0
  %v158 = vmax.f32 %v150, 0.0
  %v159 = vmax.f32 %v152, 0.0
  %v160 = vpack.c.bf16 %v156, %v156
  %v161 = vpack.c.bf16 %v157, %v157
  %v162 = vpack.c.bf16 %v158, %v158
  %v163 = vpack.c.bf16 %v159, %v159
  %v168 = vcombine.low %v160, %v161
  %v169 = vcombine.low %v162, %v163
  %v171 = vunpack.c.l.s4 1983009808
  %v172 = vunpack.c.0.s8 %v171
  %v173 = vlaneseq
  %v174 = vshrl.u32 %v173, 7
  %v175 = vsub.s32 %v172, %v174
  %v176 = vrot.slane %v168, %v175
  %v178 = vunpack.c.l.s4 1983009808
  %v179 = vunpack.c.0.s8 %v178
  %v180 = vlaneseq
  %v181 = vshrl.u32 %v180, 7
  %v182 = vsub.s32 %v179, %v181
  %v183 = vrot.slane %v169, %v182
  %v184 = vcombine.low %v176, %v183
  %186 = vst [vmem:[%s3] sm:$0xff] %v184
  // Predicated region
  $region14: #{netG_forward.40} parent=0 // pred_check
    _
  $region15: #{netG_forward.40} parent=0 // pred_check_branch
    %188 = sbr.rel (0) target = $region17
  $region16: #{netG_forward.40} parent=0 // pred_region
    _
  $region17: #{netG_forward.40} parent=0 // pred_fallthru
    _
  // Predicated region
  $region18: #{netG_forward.40} parent=0 // pred_check
    _
  $region19: #{netG_forward.40} parent=0 // pred_check_branch
    %190 = sbr.rel (0) target = $region21
  $region20: #{netG_forward.40} parent=0 // pred_region
    _
  $region21: #{netG_forward.40} parent=0 // pred_fallthru
    _

// kernel: netG_forward.44
$region0: #{netG_forward.44}
  #allocation0 [shape = 'u32[]', space=smem, size = 0x4, offset = 0x4, fixed_abs, tag = 'smem constant byte address 0x4 - core index']
  #allocation1 [shape = 'u32[144,128]{1,0:T(1,128)}', space=vmem, size = 0x12000, scoped, tag = 'internal scratch']
  %s0 = inlined_call_operand.vmem [shape: bf16[4,16], index: 0, kind: input, shape index: {}]
  %s1 = inlined_call_operand.vmem [shape: bf16[16,2048], index: 1, kind: input, shape index: {}]
  %s2 = inlined_call_operand.vmem [shape: f32[4,1], index: 2, kind: input, shape index: {}]
  %s3 = inlined_call_operand.vmem [shape: f32[4,2048], index: 3, kind: output, shape index: {}]
  %s4 = sld [smem:[#allocation0]]
  $region22: #{netG_forward.44} parent=0
    _
  %s6 = ssub.s32 1, %s4
  %s7 = scalar_select 0, %s6, %s4
  // Predicated region
  $region2: #{netG_forward.44} parent=0 // pred_check
    _
  $region3: #{netG_forward.44} parent=0 // pred_check_branch
    %9 = sbr.rel (0) target = $region5
  $region4: #{netG_forward.44} parent=0 // pred_region
    _
  $region5: #{netG_forward.44} parent=0 // pred_fallthru
    _
  // Predicated region
  $region6: #{netG_forward.44} parent=0 // pred_check
    _
  $region7: #{netG_forward.44} parent=0 // pred_check_branch
    %11 = sbr.rel (0) target = $region9
  $region8: #{netG_forward.44} parent=0 // pred_region
    _
  $region9: #{netG_forward.44} parent=0 // pred_fallthru
    _
  // Predicated region
  $region10: #{netG_forward.44} parent=0 // pred_check
    _
  $region11: #{netG_forward.44} parent=0 // pred_check_branch
    %13 = sbr.rel (0) target = $region13
  $region12: #{netG_forward.44} parent=0 // pred_region
    _
  $region13: #{netG_forward.44} parent=0 // pred_fallthru
    _
  %v15 = vld [vmem:[%s0] sm:$0x3]
  %v16 = vld [vmem:[%s1] sm:$0xff]
  %v17 = vld [vmem:[%s1 + $0x8] sm:$0xff]
  %v18 = vld [vmem:[%s1 + $0x10] sm:$0xff]
  %v19 = vld [vmem:[%s1 + $0x18] sm:$0xff]
  %v20 = vld [vmem:[%s1 + $0x20] sm:$0xff]
  %v21 = vld [vmem:[%s1 + $0x28] sm:$0xff]
  %v22 = vld [vmem:[%s1 + $0x30] sm:$0xff]
  %v23 = vld [vmem:[%s1 + $0x38] sm:$0xff]
  %v24 = vld [vmem:[%s1 + $0x40] sm:$0xff]
  %v25 = vld [vmem:[%s1 + $0x48] sm:$0xff]
  %v26 = vld [vmem:[%s1 + $0x50] sm:$0xff]
  %v27 = vld [vmem:[%s1 + $0x58] sm:$0xff]
  %v28 = vld [vmem:[%s1 + $0x60] sm:$0xff]
  %v29 = vld [vmem:[%s1 + $0x68] sm:$0xff]
  %v30 = vld [vmem:[%s1 + $0x70] sm:$0xff]
  %v31 = vld [vmem:[%s1 + $0x78] sm:$0xff]
  %v32 = vld [vmem:[%s2] sm:$0xf]
  %34 = vset.pattern.permute.xlu0 0
  %35 = vperm.xlu0 %34, %v32
  %v36 = vpop.permute.xlu0 %35
  %v54 = vunpack.c.l.b16 %v16
  %v55 = vunpack.c.h.b16 %v16
  %v56 = vunpack.c.l.b16 %v17
  %v57 = vunpack.c.h.b16 %v17
  %v58 = vunpack.c.l.b16 %v18
  %v59 = vunpack.c.h.b16 %v18
  %v60 = vunpack.c.l.b16 %v19
  %v61 = vunpack.c.h.b16 %v19
  %v62 = vunpack.c.l.b16 %v20
  %v63 = vunpack.c.h.b16 %v20
  %v64 = vunpack.c.l.b16 %v21
  %v65 = vunpack.c.h.b16 %v21
  %v66 = vunpack.c.l.b16 %v22
  %v67 = vunpack.c.h.b16 %v22
  %v68 = vunpack.c.l.b16 %v23
  %v69 = vunpack.c.h.b16 %v23
  %v70 = vunpack.c.l.b16 %v24
  %v71 = vunpack.c.h.b16 %v24
  %v72 = vunpack.c.l.b16 %v25
  %v73 = vunpack.c.h.b16 %v25
  %v74 = vunpack.c.l.b16 %v26
  %v75 = vunpack.c.h.b16 %v26
  %v76 = vunpack.c.l.b16 %v27
  %v77 = vunpack.c.h.b16 %v27
  %v78 = vunpack.c.l.b16 %v28
  %v79 = vunpack.c.h.b16 %v28
  %v80 = vunpack.c.l.b16 %v29
  %v81 = vunpack.c.h.b16 %v29
  %v82 = vunpack.c.l.b16 %v30
  %v83 = vunpack.c.h.b16 %v30
  %v84 = vunpack.c.l.b16 %v31
  %v85 = vunpack.c.h.b16 %v31
  %v86 = vpack.c.b16 %v70, %v54
  %v87 = vpack.c.b16 %v71, %v55
  %v88 = vpack.c.b16 %v72, %v56
  %v89 = vpack.c.b16 %v73, %v57
  %v90 = vpack.c.b16 %v74, %v58
  %v91 = vpack.c.b16 %v75, %v59
  %v92 = vpack.c.b16 %v76, %v60
  %v93 = vpack.c.b16 %v77, %v61
  %v94 = vpack.c.b16 %v78, %v62
  %v95 = vpack.c.b16 %v79, %v63
  %v96 = vpack.c.b16 %v80, %v64
  %v97 = vpack.c.b16 %v81, %v65
  %v98 = vpack.c.b16 %v82, %v66
  %v99 = vpack.c.b16 %v83, %v67
  %v100 = vpack.c.b16 %v84, %v68
  %v101 = vpack.c.b16 %v85, %v69
  %vm118 = vcmask 130048
  %v120 = vsel %vm118, %v15, 0
  %122 = vmatprep.subr.bf16.mxu0 %v87
  %123 = vmatpush1.bf16.msra.mxu0 %v86
  %124 = vmatprep.subr.bf16.mxu0 0
  %125 = vmatpush1.bf16.msra.mxu0 0
  %126 = vmatprep.subr.bf16.mxu0 0
  %127 = vmatpush1.bf16.msra.mxu0 0
  %128 = vmatprep.subr.bf16.mxu0 0
  %129 = vmatpush1.bf16.msra.mxu0 0
  %130 = vmatprep.subr.bf16.mxu0 0
  %131 = vmatpush1.bf16.msra.mxu0 0
  %132 = vmatprep.subr.bf16.mxu0 0
  %133 = vmatpush1.bf16.msra.mxu0 0
  %134 = vmatprep.subr.bf16.mxu0 0
  %135 = vmatpush1.bf16.msra.mxu0 0
  %136 = vmatprep.subr.bf16.mxu0 0
  %137 = vmatpush1.bf16.msra.mxu0 0
  %138 = vmatprep.subr.bf16.mxu0 0
  %139 = vmatpush1.bf16.msra.mxu0 0
  %140 = vmatprep.subr.bf16.mxu0 0
  %141 = vmatpush1.bf16.msra.mxu0 0
  %142 = vmatprep.subr.bf16.mxu0 0
  %143 = vmatpush1.bf16.msra.mxu0 0
  %144 = vmatprep.subr.bf16.mxu0 0
  %145 = vmatpush1.bf16.msra.mxu0 0
  %146 = vmatprep.subr.bf16.mxu0 0
  %147 = vmatpush1.bf16.msra.mxu0 0
  %148 = vmatprep.subr.bf16.mxu0 0
  %149 = vmatpush1.bf16.msra.mxu0 0
  %150 = vmatprep.subr.bf16.mxu0 0
  %151 = vmatpush1.bf16.msra.mxu0 0
  %152 = vmatprep.subr.bf16.mxu0 0
  %153 = vmatpush1.bf16.msra.mxu0 0
  %154 = vmatprep.mubr.bf16.mxu0 0
  %155 = vmatmul.mubr.bf16.gmra.mrb[0].mxu0 %v120
  %v156 = vpop.f32.mrb[0].mxu0
  %v157 = vadd.f32 %v36, %v156
  %v158 = vpop.f32.mrb[0].mxu0
  %v159 = vadd.f32 %v36, %v158
  %v160 = vpop.f32.mrb[0].mxu0
  %v161 = vpop.f32.mrb[0].mxu0
  %162 = vdwg.mxu0
  %163 = vmatprep.subr.bf16.mxu0 %v89
  %164 = vmatpush1.bf16.msra.mxu0 %v88
  %165 = vmatprep.subr.bf16.mxu0 0
  %166 = vmatpush1.bf16.msra.mxu0 0
  %167 = vmatprep.subr.bf16.mxu0 0
  %168 = vmatpush1.bf16.msra.mxu0 0
  %169 = vmatprep.subr.bf16.mxu0 0
  %170 = vmatpush1.bf16.msra.mxu0 0
  %171 = vmatprep.subr.bf16.mxu0 0
  %172 = vmatpush1.bf16.msra.mxu0 0
  %173 = vmatprep.subr.bf16.mxu0 0
  %174 = vmatpush1.bf16.msra.mxu0 0
  %175 = vmatprep.subr.bf16.mxu0 0
  %176 = vmatpush1.bf16.msra.mxu0 0
  %177 = vmatprep.subr.bf16.mxu0 0
  %178 = vmatpush1.bf16.msra.mxu0 0
  %179 = vmatprep.subr.bf16.mxu0 0
  %180 = vmatpush1.bf16.msra.mxu0 0
  %181 = vmatprep.subr.bf16.mxu0 0
  %182 = vmatpush1.bf16.msra.mxu0 0
  %183 = vmatprep.subr.bf16.mxu0 0
  %184 = vmatpush1.bf16.msra.mxu0 0
  %185 = vmatprep.subr.bf16.mxu0 0
  %186 = vmatpush1.bf16.msra.mxu0 0
  %187 = vmatprep.subr.bf16.mxu0 0
  %188 = vmatpush1.bf16.msra.mxu0 0
  %189 = vmatprep.subr.bf16.mxu0 0
  %190 = vmatpush1.bf16.msra.mxu0 0
  %191 = vmatprep.subr.bf16.mxu0 0
  %192 = vmatpush1.bf16.msra.mxu0 0
  %193 = vmatprep.subr.bf16.mxu0 0
  %194 = vmatpush1.bf16.msra.mxu0 0
  %195 = vmatprep.mubr.bf16.mxu0 0
  %196 = vmatmul.mubr.bf16.gmra.mrb[0].mxu0 %v120
  %v197 = vpop.f32.mrb[0].mxu0
  %v198 = vadd.f32 %v36, %v197
  %v199 = vpop.f32.mrb[0].mxu0
  %v200 = vadd.f32 %v36, %v199
  %v201 = vpop.f32.mrb[0].mxu0
  %v202 = vpop.f32.mrb[0].mxu0
  %203 = vdwg.mxu0
  %204 = vmatprep.subr.bf16.mxu0 %v91
  %205 = vmatpush1.bf16.msra.mxu0 %v90
  %206 = vmatprep.subr.bf16.mxu0 0
  %207 = vmatpush1.bf16.msra.mxu0 0
  %208 = vmatprep.subr.bf16.mxu0 0
  %209 = vmatpush1.bf16.msra.mxu0 0
  %210 = vmatprep.subr.bf16.mxu0 0
  %211 = vmatpush1.bf16.msra.mxu0 0
  %212 = vmatprep.subr.bf16.mxu0 0
  %213 = vmatpush1.bf16.msra.mxu0 0
  %214 = vmatprep.subr.bf16.mxu0 0
  %215 = vmatpush1.bf16.msra.mxu0 0
  %216 = vmatprep.subr.bf16.mxu0 0
  %217 = vmatpush1.bf16.msra.mxu0 0
  %218 = vmatprep.subr.bf16.mxu0 0
  %219 = vmatpush1.bf16.msra.mxu0 0
  %220 = vmatprep.subr.bf16.mxu0 0
  %221 = vmatpush1.bf16.msra.mxu0 0
  %222 = vmatprep.subr.bf16.mxu0 0
  %223 = vmatpush1.bf16.msra.mxu0 0
  %224 = vmatprep.subr.bf16.mxu0 0
  %225 = vmatpush1.bf16.msra.mxu0 0
  %226 = vmatprep.subr.bf16.mxu0 0
  %227 = vmatpush1.bf16.msra.mxu0 0
  %228 = vmatprep.subr.bf16.mxu0 0
  %229 = vmatpush1.bf16.msra.mxu0 0
  %230 = vmatprep.subr.bf16.mxu0 0
  %231 = vmatpush1.bf16.msra.mxu0 0
  %232 = vmatprep.subr.bf16.mxu0 0
  %233 = vmatpush1.bf16.msra.mxu0 0
  %234 = vmatprep.subr.bf16.mxu0 0
  %235 = vmatpush1.bf16.msra.mxu0 0
  %236 = vmatprep.mubr.bf16.mxu0 0
  %237 = vmatmul.mubr.bf16.gmra.mrb[0].mxu0 %v120
  %v238 = vpop.f32.mrb[0].mxu0
  %v239 = vadd.f32 %v36, %v238
  %v240 = vpop.f32.mrb[0].mxu0
  %v241 = vadd.f32 %v36, %v240
  %v242 = vpop.f32.mrb[0].mxu0
  %v243 = vpop.f32.mrb[0].mxu0
  %244 = vdwg.mxu0
  %245 = vmatprep.subr.bf16.mxu0 %v93
  %246 = vmatpush1.bf16.msra.mxu0 %v92
  %247 = vmatprep.subr.bf16.mxu0 0
  %248 = vmatpush1.bf16.msra.mxu0 0
  %249 = vmatprep.subr.bf16.mxu0 0
  %250 = vmatpush1.bf16.msra.mxu0 0
  %251 = vmatprep.subr.bf16.mxu0 0
  %252 = vmatpush1.bf16.msra.mxu0 0
  %253 = vmatprep.subr.bf16.mxu0 0
  %254 = vmatpush1.bf16.msra.mxu0 0
  %255 = vmatprep.subr.bf16.mxu0 0
  %256 = vmatpush1.bf16.msra.mxu0 0
  %257 = vmatprep.subr.bf16.mxu0 0
  %258 = vmatpush1.bf16.msra.mxu0 0
  %259 = vmatprep.subr.bf16.mxu0 0
  %260 = vmatpush1.bf16.msra.mxu0 0
  %261 = vmatprep.subr.bf16.mxu0 0
  %262 = vmatpush1.bf16.msra.mxu0 0
  %263 = vmatprep.subr.bf16.mxu0 0
  %264 = vmatpush1.bf16.msra.mxu0 0
  %265 = vmatprep.subr.bf16.mxu0 0
  %266 = vmatpush1.bf16.msra.mxu0 0
  %267 = vmatprep.subr.bf16.mxu0 0
  %268 = vmatpush1.bf16.msra.mxu0 0
  %269 = vmatprep.subr.bf16.mxu0 0
  %270 = vmatpush1.bf16.msra.mxu0 0
  %271 = vmatprep.subr.bf16.mxu0 0
  %272 = vmatpush1.bf16.msra.mxu0 0
  %273 = vmatprep.subr.bf16.mxu0 0
  %274 = vmatpush1.bf16.msra.mxu0 0
  %275 = vmatprep.subr.bf16.mxu0 0
  %276 = vmatpush1.bf16.msra.mxu0 0
  %277 = vmatprep.mubr.bf16.mxu0 0
  %278 = vmatmul.mubr.bf16.gmra.mrb[0].mxu0 %v120
  %v279 = vpop.f32.mrb[0].mxu0
  %v280 = vadd.f32 %v36, %v279
  %v281 = vpop.f32.mrb[0].mxu0
  %v282 = vadd.f32 %v36, %v281
  %v283 = vpop.f32.mrb[0].mxu0
  %v284 = vpop.f32.mrb[0].mxu0
  %285 = vdwg.mxu0
  %286 = vmatprep.subr.bf16.mxu0 %v95
  %287 = vmatpush1.bf16.msra.mxu0 %v94
  %288 = vmatprep.subr.bf16.mxu0 0
  %289 = vmatpush1.bf16.msra.mxu0 0
  %290 = vmatprep.subr.bf16.mxu0 0
  %291 = vmatpush1.bf16.msra.mxu0 0
  %292 = vmatprep.subr.bf16.mxu0 0
  %293 = vmatpush1.bf16.msra.mxu0 0
  %294 = vmatprep.subr.bf16.mxu0 0
  %295 = vmatpush1.bf16.msra.mxu0 0
  %296 = vmatprep.subr.bf16.mxu0 0
  %297 = vmatpush1.bf16.msra.mxu0 0
  %298 = vmatprep.subr.bf16.mxu0 0
  %299 = vmatpush1.bf16.msra.mxu0 0
  %300 = vmatprep.subr.bf16.mxu0 0
  %301 = vmatpush1.bf16.msra.mxu0 0
  %302 = vmatprep.subr.bf16.mxu0 0
  %303 = vmatpush1.bf16.msra.mxu0 0
  %304 = vmatprep.subr.bf16.mxu0 0
  %305 = vmatpush1.bf16.msra.mxu0 0
  %306 = vmatprep.subr.bf16.mxu0 0
  %307 = vmatpush1.bf16.msra.mxu0 0
  %308 = vmatprep.subr.bf16.mxu0 0
  %309 = vmatpush1.bf16.msra.mxu0 0
  %310 = vmatprep.subr.bf16.mxu0 0
  %311 = vmatpush1.bf16.msra.mxu0 0
  %312 = vmatprep.subr.bf16.mxu0 0
  %313 = vmatpush1.bf16.msra.mxu0 0
  %314 = vmatprep.subr.bf16.mxu0 0
  %315 = vmatpush1.bf16.msra.mxu0 0
  %316 = vmatprep.subr.bf16.mxu0 0
  %317 = vmatpush1.bf16.msra.mxu0 0
  %318 = vmatprep.mubr.bf16.mxu0 0
  %319 = vmatmul.mubr.bf16.gmra.mrb[0].mxu0 %v120
  %v320 = vpop.f32.mrb[0].mxu0
  %v321 = vadd.f32 %v36, %v320
  %v322 = vpop.f32.mrb[0].mxu0
  %v323 = vadd.f32 %v36, %v322
  %v324 = vpop.f32.mrb[0].mxu0
  %v325 = vpop.f32.mrb[0].mxu0
  %326 = vdwg.mxu0
  %327 = vmatprep.subr.bf16.mxu0 %v97
  %328 = vmatpush1.bf16.msra.mxu0 %v96
  %329 = vmatprep.subr.bf16.mxu0 0
  %330 = vmatpush1.bf16.msra.mxu0 0
  %331 = vmatprep.subr.bf16.mxu0 0
  %332 = vmatpush1.bf16.msra.mxu0 0
  %333 = vmatprep.subr.bf16.mxu0 0
  %334 = vmatpush1.bf16.msra.mxu0 0
  %335 = vmatprep.subr.bf16.mxu0 0
  %336 = vmatpush1.bf16.msra.mxu0 0
  %337 = vmatprep.subr.bf16.mxu0 0
  %338 = vmatpush1.bf16.msra.mxu0 0
  %339 = vmatprep.subr.bf16.mxu0 0
  %340 = vmatpush1.bf16.msra.mxu0 0
  %341 = vmatprep.subr.bf16.mxu0 0
  %342 = vmatpush1.bf16.msra.mxu0 0
  %343 = vmatprep.subr.bf16.mxu0 0
  %344 = vmatpush1.bf16.msra.mxu0 0
  %345 = vmatprep.subr.bf16.mxu0 0
  %346 = vmatpush1.bf16.msra.mxu0 0
  %347 = vmatprep.subr.bf16.mxu0 0
  %348 = vmatpush1.bf16.msra.mxu0 0
  %349 = vmatprep.subr.bf16.mxu0 0
  %350 = vmatpush1.bf16.msra.mxu0 0
  %351 = vmatprep.subr.bf16.mxu0 0
  %352 = vmatpush1.bf16.msra.mxu0 0
  %353 = vmatprep.subr.bf16.mxu0 0
  %354 = vmatpush1.bf16.msra.mxu0 0
  %355 = vmatprep.subr.bf16.mxu0 0
  %356 = vmatpush1.bf16.msra.mxu0 0
  %357 = vmatprep.subr.bf16.mxu0 0
  %358 = vmatpush1.bf16.msra.mxu0 0
  %359 = vmatprep.mubr.bf16.mxu0 0
  %360 = vmatmul.mubr.bf16.gmra.mrb[0].mxu0 %v120
  %v361 = vpop.f32.mrb[0].mxu0
  %v362 = vadd.f32 %v36, %v361
  %v363 = vpop.f32.mrb[0].mxu0
  %v364 = vadd.f32 %v36, %v363
  %v365 = vpop.f32.mrb[0].mxu0
  %v366 = vpop.f32.mrb[0].mxu0
  %367 = vdwg.mxu0
  %368 = vmatprep.subr.bf16.mxu0 %v99
  %369 = vmatpush1.bf16.msra.mxu0 %v98
  %370 = vmatprep.subr.bf16.mxu0 0
  %371 = vmatpush1.bf16.msra.mxu0 0
  %372 = vmatprep.subr.bf16.mxu0 0
  %373 = vmatpush1.bf16.msra.mxu0 0
  %374 = vmatprep.subr.bf16.mxu0 0
  %375 = vmatpush1.bf16.msra.mxu0 0
  %376 = vmatprep.subr.bf16.mxu0 0
  %377 = vmatpush1.bf16.msra.mxu0 0
  %378 = vmatprep.subr.bf16.mxu0 0
  %379 = vmatpush1.bf16.msra.mxu0 0
  %380 = vmatprep.subr.bf16.mxu0 0
  %381 = vmatpush1.bf16.msra.mxu0 0
  %382 = vmatprep.subr.bf16.mxu0 0
  %383 = vmatpush1.bf16.msra.mxu0 0
  %384 = vmatprep.subr.bf16.mxu0 0
  %385 = vmatpush1.bf16.msra.mxu0 0
  %386 = vmatprep.subr.bf16.mxu0 0
  %387 = vmatpush1.bf16.msra.mxu0 0
  %388 = vmatprep.subr.bf16.mxu0 0
  %389 = vmatpush1.bf16.msra.mxu0 0
  %390 = vmatprep.subr.bf16.mxu0 0
  %391 = vmatpush1.bf16.msra.mxu0 0
  %392 = vmatprep.subr.bf16.mxu0 0
  %393 = vmatpush1.bf16.msra.mxu0 0
  %394 = vmatprep.subr.bf16.mxu0 0
  %395 = vmatpush1.bf16.msra.mxu0 0
  %396 = vmatprep.subr.bf16.mxu0 0
  %397 = vmatpush1.bf16.msra.mxu0 0
  %398 = vmatprep.subr.bf16.mxu0 0
  %399 = vmatpush1.bf16.msra.mxu0 0
  %400 = vmatprep.mubr.bf16.mxu0 0
  %401 = vmatmul.mubr.bf16.gmra.mrb[0].mxu0 %v120
  %v402 = vpop.f32.mrb[0].mxu0
  %v403 = vadd.f32 %v36, %v402
  %v404 = vpop.f32.mrb[0].mxu0
  %v405 = vadd.f32 %v36, %v404
  %v406 = vpop.f32.mrb[0].mxu0
  %v407 = vpop.f32.mrb[0].mxu0
  %408 = vdwg.mxu0
  %409 = vmatprep.subr.bf16.mxu0 %v101
  %410 = vmatpush1.bf16.msra.mxu0 %v100
  %411 = vmatprep.subr.bf16.mxu0 0
  %412 = vmatpush1.bf16.msra.mxu0 0
  %413 = vmatprep.subr.bf16.mxu0 0
  %414 = vmatpush1.bf16.msra.mxu0 0
  %415 = vmatprep.subr.bf16.mxu0 0
  %416 = vmatpush1.bf16.msra.mxu0 0
  %417 = vmatprep.subr.bf16.mxu0 0
  %418 = vmatpush1.bf16.msra.mxu0 0
  %419 = vmatprep.subr.bf16.mxu0 0
  %420 = vmatpush1.bf16.msra.mxu0 0
  %421 = vmatprep.subr.bf16.mxu0 0
  %422 = vmatpush1.bf16.msra.mxu0 0
  %423 = vmatprep.subr.bf16.mxu0 0
  %424 = vmatpush1.bf16.msra.mxu0 0
  %425 = vmatprep.subr.bf16.mxu0 0
  %426 = vmatpush1.bf16.msra.mxu0 0
  %427 = vmatprep.subr.bf16.mxu0 0
  %428 = vmatpush1.bf16.msra.mxu0 0
  %429 = vmatprep.subr.bf16.mxu0 0
  %430 = vmatpush1.bf16.msra.mxu0 0
  %431 = vmatprep.subr.bf16.mxu0 0
  %432 = vmatpush1.bf16.msra.mxu0 0
  %433 = vmatprep.subr.bf16.mxu0 0
  %434 = vmatpush1.bf16.msra.mxu0 0
  %435 = vmatprep.subr.bf16.mxu0 0
  %436 = vmatpush1.bf16.msra.mxu0 0
  %437 = vmatprep.subr.bf16.mxu0 0
  %438 = vmatpush1.bf16.msra.mxu0 0
  %439 = vmatprep.subr.bf16.mxu0 0
  %440 = vmatpush1.bf16.msra.mxu0 0
  %441 = vmatprep.mubr.bf16.mxu0 0
  %442 = vmatmul.mubr.bf16.gmra.mrb[0].mxu0 %v120
  %v443 = vpop.f32.mrb[0].mxu0
  %v444 = vadd.f32 %v36, %v443
  %v445 = vpop.f32.mrb[0].mxu0
  %v446 = vadd.f32 %v36, %v445
  %v447 = vpop.f32.mrb[0].mxu0
  %v448 = vpop.f32.mrb[0].mxu0
  %449 = vdwg.mxu0
  %v450 = vtanh.pop %v157
  %v451 = vtanh.pop %v159
  %v452 = vtanh.pop %v198
  %v453 = vtanh.pop %v200
  %v454 = vtanh.pop %v239
  %v455 = vtanh.pop %v241
  %v456 = vtanh.pop %v280
  %v457 = vtanh.pop %v282
  %v458 = vtanh.pop %v321
  %v459 = vtanh.pop %v323
  %v460 = vtanh.pop %v362
  %v461 = vtanh.pop %v364
  %v462 = vtanh.pop %v403
  %v463 = vtanh.pop %v405
  %v464 = vtanh.pop %v444
  %v465 = vtanh.pop %v446
  %v482 = vcombine.low %v450, %v451
  %v483 = vcombine.low %v452, %v453
  %v484 = vcombine.low %v454, %v455
  %v485 = vcombine.low %v456, %v457
  %v486 = vcombine.low %v458, %v459
  %v487 = vcombine.low %v460, %v461
  %v488 = vcombine.low %v462, %v463
  %v489 = vcombine.low %v464, %v465
  %498 = vst [vmem:[%s3] sm:$0xff] %v482
  %499 = vst [vmem:[%s3 + $0x8] sm:$0xff] %v483
  %500 = vst [vmem:[%s3 + $0x10] sm:$0xff] %v484
  %501 = vst [vmem:[%s3 + $0x18] sm:$0xff] %v485
  %502 = vst [vmem:[%s3 + $0x20] sm:$0xff] %v486
  %503 = vst [vmem:[%s3 + $0x28] sm:$0xff] %v487
  %504 = vst [vmem:[%s3 + $0x30] sm:$0xff] %v488
  %505 = vst [vmem:[%s3 + $0x38] sm:$0xff] %v489
  // Predicated region
  $region14: #{netG_forward.44} parent=0 // pred_check
    _
  $region15: #{netG_forward.44} parent=0 // pred_check_branch
    %507 = sbr.rel (0) target = $region17
  $region16: #{netG_forward.44} parent=0 // pred_region
    _
  $region17: #{netG_forward.44} parent=0 // pred_fallthru
    _
  // Predicated region
  $region18: #{netG_forward.44} parent=0 // pred_check
    _
  $region19: #{netG_forward.44} parent=0 // pred_check_branch
    %509 = sbr.rel (0) target = $region21
  $region20: #{netG_forward.44} parent=0 // pred_region
    _
  $region21: #{netG_forward.44} parent=0 // pred_fallthru
    _

</llo_original>
